<compile_context>
chip_gen: v7x
topology: tpu7x:2x2x1
jax: 0.10.0
libtpu: 0.0.40
codegen_flags: <defaults>
</compile_context>

<pallas_src>
import jax
import jax.numpy as jnp
import numpy as np
from jax.experimental import pallas as pl
from jax.experimental.pallas import tpu as pltpu

H_OUT = 256
W_OUT = 256
SCALE_H = 1.953125   # from the fx graph (500 / 256)
SCALE_W = 1.5625     # from the fx graph (400 / 256)

_MASK_HI16 = np.int32(-65536)   # 0xFFFF0000: sign + exponent + top-7 mantissa bits


def _split3_bf16(v):
    """Exact 3-way bf16 split of an f32 array: v == l1 + l2 + l3 bit-exactly.

    Mantissa truncation (bit masking) instead of rounding casts makes the three
    limbs occupy disjoint mantissa ranges, so adding them back smallest->largest
    in f32 reconstructs the original value exactly.  Pure VPU work (bitcast /
    and / sub / pack), which has slack in this kernel.
    """
    bits = pltpu.bitcast(v, jnp.int32)
    hi1 = pltpu.bitcast(bits & _MASK_HI16, jnp.float32)
    rem1 = v - hi1                                   # exact, <= 16 significant bits
    bits2 = pltpu.bitcast(rem1, jnp.int32)
    hi2 = pltpu.bitcast(bits2 & _MASK_HI16, jnp.float32)
    rem2 = rem1 - hi2                                # exact, <= 8 significant bits
    # All three casts are exact (low mantissa bits are zero / value fits bf16).
    return (hi1.astype(jnp.bfloat16),
            hi2.astype(jnp.bfloat16),
            rem2.astype(jnp.bfloat16))


def _resample_kernel(x_ref, rt_ref, rb_ref, s_ref, o_ref):
    # x_ref : (1, H_in, W_in)   f32   one channel slab (full spatial extent)
    # rt_ref: (128, K_TOP)      bf16  one-hot row selector, output rows [0, 128)
    # rb_ref: (128, K_BOT)      bf16  one-hot row selector, output rows [128, 256)
    # s_ref : (W_in, W_OUT)     bf16  one-hot column selector (resident)
    # o_ref : (1, H_OUT, W_OUT) f32
    half = rt_ref.shape[0]
    k_top = rt_ref.shape[1]
    k_bot = rb_ref.shape[1]
    bot_start = x_ref.shape[1] - k_bot   # multiple of 8 by construction

    r_top = rt_ref[...]
    r_bot = rb_ref[...]
    s_col = s_ref[...]

    # Aligned static windows of the input rows each output-row half needs.
    x_top = x_ref[0, pl.ds(0, k_top), :]           # (K_TOP, W_in) f32
    x_bot = x_ref[0, pl.ds(bot_start, k_bot), :]   # (K_BOT, W_in) f32

    top_limbs = _split3_bf16(x_top)
    bot_limbs = _split3_bf16(x_bot)

    acc_t = jnp.zeros((half, s_col.shape[1]), jnp.float32)
    acc_b = jnp.zeros((half, s_col.shape[1]), jnp.float32)

    # Smallest limb first so the f32 accumulation reconstructs x bit-exactly.
    for limb in (2, 1, 0):
        # Row gather: one-hot matmul, single bf16 MXU pass per limb.  The result
        # holds the gathered limb values exactly, so casting back to bf16 is exact.
        gt = jnp.dot(r_top, top_limbs[limb],
                     preferred_element_type=jnp.float32).astype(jnp.bfloat16)
        gb = jnp.dot(r_bot, bot_limbs[limb],
                     preferred_element_type=jnp.float32).astype(jnp.bfloat16)
        # Column gather: one-hot matmul, f32 accumulation across limbs.
        acc_t = acc_t + jnp.dot(gt, s_col, preferred_element_type=jnp.float32)
        acc_b = acc_b + jnp.dot(gb, s_col, preferred_element_type=jnp.float32)

    o_ref[0, 0:half, :] = acc_t.astype(o_ref.dtype)
    o_ref[0, half:2 * half, :] = acc_b.astype(o_ref.dtype)


def upsample_nearest(x):
    """Replicates Repro.forward's _unsafe_index double gather. x: (N, C, H, W) f32."""
    n, c, h_in, w_in = x.shape
    nc = n * c

    # Index computation exactly as in the fx graph:
    # iota(256) -> f32 -> (*1 + 0) -> *scale -> truncate to int.
    row_idx = (np.arange(H_OUT, dtype=np.float32) * np.float32(SCALE_H)).astype(np.int32)
    col_idx = (np.arange(W_OUT, dtype=np.float32) * np.float32(SCALE_W)).astype(np.int32)
    assert int(row_idx[-1]) < h_in and int(col_idx[-1]) < w_in, "input too small for scales"

    # Two-block decomposition of the (monotone) row gather: output rows [0,128)
    # only need input rows [0, K_TOP) and output rows [128,256) only need input
    # rows [BOT_START, H_in).  Both windows are 8-row aligned, halving the
    # effective K of the row-select matmuls.
    half = H_OUT // 2
    k_top = min(h_in, int(np.ceil((int(row_idx[half - 1]) + 1) / 8.0)) * 8)
    bot_start = (int(row_idx[half]) // 8) * 8
    k_bot = h_in - bot_start
    assert int(row_idx[half - 1]) < k_top and int(row_idx[half]) >= bot_start

    # One-hot selector matrices (exact in bf16: entries are 0/1, resident in VMEM).
    r_top = (row_idx[:half, None] ==
             np.arange(k_top, dtype=np.int32)[None, :]).astype(np.float32)
    r_bot = ((row_idx[half:, None] - bot_start) ==
             np.arange(k_bot, dtype=np.int32)[None, :]).astype(np.float32)
    s_col = (np.arange(w_in, dtype=np.int32)[:, None] ==
             col_idx[None, :]).astype(np.float32)

    r_top = jnp.asarray(r_top, dtype=jnp.bfloat16)
    r_bot = jnp.asarray(r_bot, dtype=jnp.bfloat16)
    s_col = jnp.asarray(s_col, dtype=jnp.bfloat16)

    x3 = x.reshape(nc, h_in, w_in)

    # Honest cost estimate: 3 bf16 limb passes over both one-hot matmuls,
    # fused byte traffic (no HBM intermediate any more).
    mac_per_pass = half * k_top * w_in + half * k_bot * w_in + H_OUT * w_in * W_OUT
    flops = 2 * 3 * mac_per_pass * nc
    bytes_accessed = (4 * nc * (h_in * w_in + H_OUT * W_OUT)
                      + 2 * (half * k_top + half * k_bot + w_in * W_OUT))

    out = pl.pallas_call(
        _resample_kernel,
        out_shape=jax.ShapeDtypeStruct((nc, H_OUT, W_OUT), x.dtype),
        grid_spec=pltpu.PrefetchScalarGridSpec(
            num_scalar_prefetch=0,
            grid=(nc,),   # 1 channel per step: 4 steps -> 2 per TC on v7x megacore
            in_specs=[
                pl.BlockSpec((1, h_in, w_in), lambda i: (i, 0, 0)),   # channel slab
                pl.BlockSpec((half, k_top), lambda i: (0, 0)),        # resident
                pl.BlockSpec((half, k_bot), lambda i: (0, 0)),        # resident
                pl.BlockSpec((w_in, W_OUT), lambda i: (0, 0)),        # resident
            ],
            out_specs=pl.BlockSpec((1, H_OUT, W_OUT), lambda i: (i, 0, 0)),
        ),
        compiler_params=pltpu.CompilerParams(
            dimension_semantics=("parallel",),
        ),
        cost_estimate=pl.CostEstimate(
            flops=flops, transcendentals=0, bytes_accessed=bytes_accessed),
    )(x3, r_top, r_bot, s_col)

    return out.reshape(n, c, H_OUT, W_OUT)


if __name__ == "__main__":
    # The graph's hard-coded scales imply H_in = 500, W_in = 400; batch = 1 per
    # the original repro, channels kept small.
    key = jax.random.PRNGKey(0)
    x = jax.random.normal(key, (1, 4, 500, 400), dtype=jnp.float32)

    y = jax.jit(upsample_nearest)(x)
    y = jax.block_until_ready(y)

    # Pure-JAX reference gather.
    row_idx = (jnp.arange(H_OUT, dtype=jnp.float32) * SCALE_H).astype(jnp.int32)
    col_idx = (jnp.arange(W_OUT, dtype=jnp.float32) * SCALE_W).astype(jnp.int32)
    ref = x[:, :, row_idx, :][:, :, :, col_idx]

    assert y.shape == (1, 4, 256, 256), y.shape
    np.testing.assert_allclose(np.asarray(y), np.asarray(ref), rtol=1e-6, atol=1e-6)
    print("KERNEL_OK")
</pallas_src>

<mosaic_0001>
module attributes {stable_mosaic.version = 11 : i64} {
  func.func @_resample_kernel(%arg0: i32, %arg1: memref<1x500x400xf32, #tpu.memory_space<vmem>>, %arg2: memref<128x256xbf16, #tpu.memory_space<vmem>>, %arg3: memref<128x252xbf16, #tpu.memory_space<vmem>>, %arg4: memref<400x256xbf16, #tpu.memory_space<vmem>>, %arg5: memref<1x256x256xf32, #tpu.memory_space<vmem>>) attributes {dimension_semantics = [#tpu.dimension_semantics<parallel>], iteration_bounds = array<i64: 4>, scalar_prefetch = 0 : i64, scratch_operands = 0 : i64, tpu.core_type = #tpu.core_type<tc>, window_params = [{transform_indices = @transform_0, window_bounds = array<i64: 1, 500, 400>}, {pipeline_mode = #tpu.pipeline_mode<synchronous>, transform_indices = @transform_1, window_bounds = array<i64: 128, 256>}, {pipeline_mode = #tpu.pipeline_mode<synchronous>, transform_indices = @transform_2, window_bounds = array<i64: 128, 252>}, {pipeline_mode = #tpu.pipeline_mode<synchronous>, transform_indices = @transform_3, window_bounds = array<i64: 400, 256>}, {transform_indices = @transform_4, window_bounds = array<i64: 1, 256, 256>}]} {
    %c0 = arith.constant 0 : index
    %c0_0 = arith.constant 0 : index
    %0 = vector.load %arg2[%c0, %c0_0] : memref<128x256xbf16, #tpu.memory_space<vmem>>, vector<128x256xbf16>
    %c0_1 = arith.constant 0 : index
    %c0_2 = arith.constant 0 : index
    %1 = vector.load %arg3[%c0_1, %c0_2] : memref<128x252xbf16, #tpu.memory_space<vmem>>, vector<128x252xbf16>
    %c0_3 = arith.constant 0 : index
    %c0_4 = arith.constant 0 : index
    %2 = vector.load %arg4[%c0_3, %c0_4] : memref<400x256xbf16, #tpu.memory_space<vmem>>, vector<400x256xbf16>
    %c0_5 = arith.constant 0 : index
    %c0_6 = arith.constant 0 : index
    %c0_7 = arith.constant 0 : index
    %3 = vector.load %arg1[%c0_5, %c0_6, %c0_7] : memref<1x500x400xf32, #tpu.memory_space<vmem>>, vector<1x256x400xf32>
    %4 = vector.shape_cast %3 : vector<1x256x400xf32> to vector<256x400xf32>
    %c0_8 = arith.constant 0 : index
    %c248 = arith.constant 248 : index
    %c0_9 = arith.constant 0 : index
    %5 = vector.load %arg1[%c0_8, %c248, %c0_9] : memref<1x500x400xf32, #tpu.memory_space<vmem>>, vector<1x252x400xf32>
    %6 = vector.shape_cast %5 : vector<1x252x400xf32> to vector<252x400xf32>
    %7 = tpu.bitcast %4 : vector<256x400xf32> -> vector<256x400xi32>
    %c-65536_i32 = arith.constant -65536 : i32
    %8 = vector.broadcast %c-65536_i32 : i32 to vector<256x400xi32>
    %9 = arith.andi %7, %8 : vector<256x400xi32>
    %10 = tpu.bitcast %9 : vector<256x400xi32> -> vector<256x400xf32>
    %11 = arith.subf %4, %10 : vector<256x400xf32>
    %12 = tpu.bitcast %11 : vector<256x400xf32> -> vector<256x400xi32>
    %c-65536_i32_10 = arith.constant -65536 : i32
    %13 = vector.broadcast %c-65536_i32_10 : i32 to vector<256x400xi32>
    %14 = arith.andi %12, %13 : vector<256x400xi32>
    %15 = tpu.bitcast %14 : vector<256x400xi32> -> vector<256x400xf32>
    %16 = arith.subf %11, %15 : vector<256x400xf32>
    %17 = arith.truncf %10 : vector<256x400xf32> to vector<256x400xbf16>
    %18 = arith.truncf %15 : vector<256x400xf32> to vector<256x400xbf16>
    %19 = arith.truncf %16 : vector<256x400xf32> to vector<256x400xbf16>
    %20 = tpu.bitcast %6 : vector<252x400xf32> -> vector<252x400xi32>
    %c-65536_i32_11 = arith.constant -65536 : i32
    %21 = vector.broadcast %c-65536_i32_11 : i32 to vector<252x400xi32>
    %22 = arith.andi %20, %21 : vector<252x400xi32>
    %23 = tpu.bitcast %22 : vector<252x400xi32> -> vector<252x400xf32>
    %24 = arith.subf %6, %23 : vector<252x400xf32>
    %25 = tpu.bitcast %24 : vector<252x400xf32> -> vector<252x400xi32>
    %c-65536_i32_12 = arith.constant -65536 : i32
    %26 = vector.broadcast %c-65536_i32_12 : i32 to vector<252x400xi32>
    %27 = arith.andi %25, %26 : vector<252x400xi32>
    %28 = tpu.bitcast %27 : vector<252x400xi32> -> vector<252x400xf32>
    %29 = arith.subf %24, %28 : vector<252x400xf32>
    %30 = arith.truncf %23 : vector<252x400xf32> to vector<252x400xbf16>
    %31 = arith.truncf %28 : vector<252x400xf32> to vector<252x400xbf16>
    %32 = arith.truncf %29 : vector<252x400xf32> to vector<252x400xbf16>
    %cst = arith.constant 0.000000e+00 : f32
    %33 = vector.broadcast %cst : f32 to vector<128x256xf32>
    %cst_13 = arith.constant 0.000000e+00 : f32
    %34 = vector.broadcast %cst_13 : f32 to vector<128x256xf32>
    %cst_14 = arith.constant dense<0.000000e+00> : vector<128x400xf32>
    %35 = tpu.matmul %0, %19, %cst_14 {dimension_numbers = #tpu.dot_dimension_numbers<[1], [0], [0], [1], [0, 0, 1, 1], [], []>} : vector<128x256xbf16>, vector<256x400xbf16>, vector<128x400xf32> -> vector<128x400xf32>
    %36 = arith.truncf %35 : vector<128x400xf32> to vector<128x400xbf16>
    %cst_15 = arith.constant dense<0.000000e+00> : vector<128x400xf32>
    %37 = tpu.matmul %1, %32, %cst_15 {dimension_numbers = #tpu.dot_dimension_numbers<[1], [0], [0], [1], [0, 0, 1, 1], [], []>} : vector<128x252xbf16>, vector<252x400xbf16>, vector<128x400xf32> -> vector<128x400xf32>
    %38 = arith.truncf %37 : vector<128x400xf32> to vector<128x400xbf16>
    %cst_16 = arith.constant dense<0.000000e+00> : vector<128x256xf32>
    %39 = tpu.matmul %36, %2, %cst_16 {dimension_numbers = #tpu.dot_dimension_numbers<[1], [0], [0], [1], [0, 0, 1, 1], [], []>} : vector<128x400xbf16>, vector<400x256xbf16>, vector<128x256xf32> -> vector<128x256xf32>
    %40 = arith.addf %33, %39 : vector<128x256xf32>
    %cst_17 = arith.constant dense<0.000000e+00> : vector<128x256xf32>
    %41 = tpu.matmul %38, %2, %cst_17 {dimension_numbers = #tpu.dot_dimension_numbers<[1], [0], [0], [1], [0, 0, 1, 1], [], []>} : vector<128x400xbf16>, vector<400x256xbf16>, vector<128x256xf32> -> vector<128x256xf32>
    %42 = arith.addf %34, %41 : vector<128x256xf32>
    %cst_18 = arith.constant dense<0.000000e+00> : vector<128x400xf32>
    %43 = tpu.matmul %0, %18, %cst_18 {dimension_numbers = #tpu.dot_dimension_numbers<[1], [0], [0], [1], [0, 0, 1, 1], [], []>} : vector<128x256xbf16>, vector<256x400xbf16>, vector<128x400xf32> -> vector<128x400xf32>
    %44 = arith.truncf %43 : vector<128x400xf32> to vector<128x400xbf16>
    %cst_19 = arith.constant dense<0.000000e+00> : vector<128x400xf32>
    %45 = tpu.matmul %1, %31, %cst_19 {dimension_numbers = #tpu.dot_dimension_numbers<[1], [0], [0], [1], [0, 0, 1, 1], [], []>} : vector<128x252xbf16>, vector<252x400xbf16>, vector<128x400xf32> -> vector<128x400xf32>
    %46 = arith.truncf %45 : vector<128x400xf32> to vector<128x400xbf16>
    %cst_20 = arith.constant dense<0.000000e+00> : vector<128x256xf32>
    %47 = tpu.matmul %44, %2, %cst_20 {dimension_numbers = #tpu.dot_dimension_numbers<[1], [0], [0], [1], [0, 0, 1, 1], [], []>} : vector<128x400xbf16>, vector<400x256xbf16>, vector<128x256xf32> -> vector<128x256xf32>
    %48 = arith.addf %40, %47 : vector<128x256xf32>
    %cst_21 = arith.constant dense<0.000000e+00> : vector<128x256xf32>
    %49 = tpu.matmul %46, %2, %cst_21 {dimension_numbers = #tpu.dot_dimension_numbers<[1], [0], [0], [1], [0, 0, 1, 1], [], []>} : vector<128x400xbf16>, vector<400x256xbf16>, vector<128x256xf32> -> vector<128x256xf32>
    %50 = arith.addf %42, %49 : vector<128x256xf32>
    %cst_22 = arith.constant dense<0.000000e+00> : vector<128x400xf32>
    %51 = tpu.matmul %0, %17, %cst_22 {dimension_numbers = #tpu.dot_dimension_numbers<[1], [0], [0], [1], [0, 0, 1, 1], [], []>} : vector<128x256xbf16>, vector<256x400xbf16>, vector<128x400xf32> -> vector<128x400xf32>
    %52 = arith.truncf %51 : vector<128x400xf32> to vector<128x400xbf16>
    %cst_23 = arith.constant dense<0.000000e+00> : vector<128x400xf32>
    %53 = tpu.matmul %1, %30, %cst_23 {dimension_numbers = #tpu.dot_dimension_numbers<[1], [0], [0], [1], [0, 0, 1, 1], [], []>} : vector<128x252xbf16>, vector<252x400xbf16>, vector<128x400xf32> -> vector<128x400xf32>
    %54 = arith.truncf %53 : vector<128x400xf32> to vector<128x400xbf16>
    %cst_24 = arith.constant dense<0.000000e+00> : vector<128x256xf32>
    %55 = tpu.matmul %52, %2, %cst_24 {dimension_numbers = #tpu.dot_dimension_numbers<[1], [0], [0], [1], [0, 0, 1, 1], [], []>} : vector<128x400xbf16>, vector<400x256xbf16>, vector<128x256xf32> -> vector<128x256xf32>
    %56 = arith.addf %48, %55 : vector<128x256xf32>
    %cst_25 = arith.constant dense<0.000000e+00> : vector<128x256xf32>
    %57 = tpu.matmul %54, %2, %cst_25 {dimension_numbers = #tpu.dot_dimension_numbers<[1], [0], [0], [1], [0, 0, 1, 1], [], []>} : vector<128x400xbf16>, vector<400x256xbf16>, vector<128x256xf32> -> vector<128x256xf32>
    %58 = arith.addf %50, %57 : vector<128x256xf32>
    %c0_26 = arith.constant 0 : index
    %c0_27 = arith.constant 0 : index
    %c0_28 = arith.constant 0 : index
    %59 = vector.load %arg5[%c0_26, %c0_27, %c0_28] : memref<1x256x256xf32, #tpu.memory_space<vmem>>, vector<1x128x256xf32>
    %60 = vector.shape_cast %59 : vector<1x128x256xf32> to vector<128x256xf32>
    %61 = vector.shape_cast %56 : vector<128x256xf32> to vector<1x128x256xf32>
    tpu.vector_store %arg5[%c0_26, %c0_27, %c0_28], %61 {strides = array<i32>} : memref<1x256x256xf32, #tpu.memory_space<vmem>>, vector<1x128x256xf32>,
    %c0_29 = arith.constant 0 : index
    %c128 = arith.constant 128 : index
    %c0_30 = arith.constant 0 : index
    %62 = vector.load %arg5[%c0_29, %c128, %c0_30] : memref<1x256x256xf32, #tpu.memory_space<vmem>>, vector<1x128x256xf32>
    %63 = vector.shape_cast %62 : vector<1x128x256xf32> to vector<128x256xf32>
    %64 = vector.shape_cast %58 : vector<128x256xf32> to vector<1x128x256xf32>
    tpu.vector_store %arg5[%c0_29, %c128, %c0_30], %64 {strides = array<i32>} : memref<1x256x256xf32, #tpu.memory_space<vmem>>, vector<1x128x256xf32>,
    return
  }
  func.func @transform_0(%arg0: i32) -> (i32, i32, i32) {
    %c0_i32 = arith.constant 0 : i32
    %c0_i32_0 = arith.constant 0 : i32
    %c0_i32_1 = arith.constant 0 : i32
    return %arg0, %c0_i32, %c0_i32_0 : i32, i32, i32
  }
  func.func @transform_1(%arg0: i32) -> (i32, i32) {
    %c0_i32 = arith.constant 0 : i32
    %c0_i32_0 = arith.constant 0 : i32
    %c0_i32_1 = arith.constant 0 : i32
    return %c0_i32, %c0_i32_0 : i32, i32
  }
  func.func @transform_2(%arg0: i32) -> (i32, i32) {
    %c0_i32 = arith.constant 0 : i32
    %c0_i32_0 = arith.constant 0 : i32
    %c0_i32_1 = arith.constant 0 : i32
    return %c0_i32, %c0_i32_0 : i32, i32
  }
  func.func @transform_3(%arg0: i32) -> (i32, i32) {
    %c0_i32 = arith.constant 0 : i32
    %c0_i32_0 = arith.constant 0 : i32
    %c0_i32_1 = arith.constant 0 : i32
    return %c0_i32, %c0_i32_0 : i32, i32
  }
  func.func @transform_4(%arg0: i32) -> (i32, i32, i32) {
    %c0_i32 = arith.constant 0 : i32
    %c0_i32_0 = arith.constant 0 : i32
    %c0_i32_1 = arith.constant 0 : i32
    return %arg0, %c0_i32, %c0_i32_0 : i32, i32, i32
  }
}

</mosaic_0001>

<llo_original>
// kernel: upsample_nearest.1
$region0: #{upsample_nearest.1}
  #allocation0 [shape = 'u32[]', space=smem, size = 0x4, offset = 0x4, fixed_abs, tag = 'smem constant byte address 0x4 - core index']
  #allocation1 [shape = 'u32[144,128]{1,0:T(1,128)}', space=vmem, size = 0x12000, scoped, tag = 'internal scratch']
  %s0 = inlined_call_operand.vmem [shape: f32[4,500,400], index: 0, kind: input, shape index: {}]
  %s1 = inlined_call_operand.vmem [shape: bf16[128,256], index: 1, kind: input, shape index: {}]
  %s2 = inlined_call_operand.vmem [shape: bf16[128,252], index: 2, kind: input, shape index: {}]
  %s3 = inlined_call_operand.vmem [shape: bf16[400,256], index: 3, kind: input, shape index: {}]
  %s4 = inlined_call_operand.hbm [shape: f32[4,256,256], index: 4, kind: output, shape index: {}]
  %s5 = sld [smem:[#allocation0]]
  $region49: #{upsample_nearest.1} parent=0
    _
  %s7 = ssub.s32 1, %s5
  %s8 = scalar_select 0, %s7, %s5
  $region1: #{upsample_nearest.1} parent=0
    #allocation2 [shape = 'u8[524288]{0}', space=vmem, size = 0x80000, scoped, tag = 'output window, operand 0']
    #allocation3 [shape = 's32[2]{0}', space=sflag, size = 0x8, scoped, tag = 'scoped memory for upsample_nearest.1']
    %9 = vsyncpa [#allocation3], 0
    %s10 = scalar_lea.sflag [#allocation3], 1
    %11 = vsyncpa %s10, 0
    loop: start=0, step=1, limit=6
    $region2: #{upsample_nearest.1} parent=1 // loop_pre_header
      _
    $region3: #{upsample_nearest.1} parent=1 // loop_header
      %s13 = sphi 0, %s17
      %p14 = scmp.ge.s32.totalorder %s13, 6
      %s23 = sphi 0, %s25
      %s26 = sphi 0, %s23
      %s27 = sphi 0, %s26
      %s43 = sphi 0, %s27
      %s47 = sphi 0, %s47
      %s49 = sphi 0, %s47
      %s50 = sphi 0, %s49
      %s64 = sphi 0, %s50
      %s68 = sphi 0, %s68
      %s70 = sphi 0, %s68
      %s71 = sphi 0, %s70
      %s85 = sphi 0, %s71
      %s89 = sphi 0, %s89
      %s91 = sphi 0, %s89
      %s92 = sphi 0, %s91
      %s106 = sphi 0, %s92
      %s112 = sphi 0, %s114
      %s115 = sphi 0, %s112
      %s116 = sphi 0, %s115
      %s132 = sphi 0, %s116
    $region4: #{upsample_nearest.1} parent=1 // loop_header_branch
      %16 = sbr.rel (%p14) target = $region8
    $region5: #{upsample_nearest.1} parent=1 // loop_body
      %s18 = ssub.s32 %s13, 1
      %s19 = ssub.s32 %s13, 2
      %s20 = sadd.s32 %s13, 1
      %s21 = ssub.s32 %s13, %s20
      %p22 = scmp.eq.s32.totalorder %s21, 0
      %s24 = sadd.s32 %s23, 1
      %s25 = scalar_select %p22, %s23, %s24
      %p28 = pneg %p22
      %p29 = scmp.eq.s32.totalorder %s13, 3
      %p30 = por %p28, %p29
      %p31 = scmp.ne.s32.totalorder %s23, %s26
      %p32 = scmp.eq.s32.totalorder %s13, 0
      %p33 = por %p31, %p32
      %p34 = scmp.ne.s32.totalorder %s23, %s26
      %p35 = scmp.eq.s32.totalorder %s18, 3
      %p36 = por %p34, %p35
      %p37 = scmp.ne.s32.totalorder %s26, %s27
      %p38 = scmp.eq.s32.totalorder %s18, 0
      %p39 = por %p37, %p38
      %p40 = scmp.ne.s32.totalorder %s26, %s27
      %p41 = scmp.eq.s32.totalorder %s19, 3
      %p42 = por %p40, %p41
      %p44 = scmp.ne.s32.totalorder %s27, %s43
      %p45 = scmp.eq.s32.totalorder %s19, 0
      %p46 = por %p44, %p45
      %s48 = sadd.s32 %s47, 1
      %p51 = scmp.eq.s32.totalorder %s13, 3
      %p52 = scmp.ne.s32.totalorder %s47, %s49
      %p53 = scmp.eq.s32.totalorder %s13, 0
      %p54 = por %p52, %p53
      %p55 = scmp.ne.s32.totalorder %s47, %s49
      %p56 = scmp.eq.s32.totalorder %s18, 3
      %p57 = por %p55, %p56
      %p58 = scmp.ne.s32.totalorder %s49, %s50
      %p59 = scmp.eq.s32.totalorder %s18, 0
      %p60 = por %p58, %p59
      %p61 = scmp.ne.s32.totalorder %s49, %s50
      %p62 = scmp.eq.s32.totalorder %s19, 3
      %p63 = por %p61, %p62
      %p65 = scmp.ne.s32.totalorder %s50, %s64
      %p66 = scmp.eq.s32.totalorder %s19, 0
      %p67 = por %p65, %p66
      %s69 = sadd.s32 %s68, 1
      %p72 = scmp.eq.s32.totalorder %s13, 3
      %p73 = scmp.ne.s32.totalorder %s68, %s70
      %p74 = scmp.eq.s32.totalorder %s13, 0
      %p75 = por %p73, %p74
      %p76 = scmp.ne.s32.totalorder %s68, %s70
      %p77 = scmp.eq.s32.totalorder %s18, 3
      %p78 = por %p76, %p77
      %p79 = scmp.ne.s32.totalorder %s70, %s71
      %p80 = scmp.eq.s32.totalorder %s18, 0
      %p81 = por %p79, %p80
      %p82 = scmp.ne.s32.totalorder %s70, %s71
      %p83 = scmp.eq.s32.totalorder %s19, 3
      %p84 = por %p82, %p83
      %p86 = scmp.ne.s32.totalorder %s71, %s85
      %p87 = scmp.eq.s32.totalorder %s19, 0
      %p88 = por %p86, %p87
      %s90 = sadd.s32 %s89, 1
      %p93 = scmp.eq.s32.totalorder %s13, 3
      %p94 = scmp.ne.s32.totalorder %s89, %s91
      %p95 = scmp.eq.s32.totalorder %s13, 0
      %p96 = por %p94, %p95
      %p97 = scmp.ne.s32.totalorder %s89, %s91
      %p98 = scmp.eq.s32.totalorder %s18, 3
      %p99 = por %p97, %p98
      %p100 = scmp.ne.s32.totalorder %s91, %s92
      %p101 = scmp.eq.s32.totalorder %s18, 0
      %p102 = por %p100, %p101
      %p103 = scmp.ne.s32.totalorder %s91, %s92
      %p104 = scmp.eq.s32.totalorder %s19, 3
      %p105 = por %p103, %p104
      %p107 = scmp.ne.s32.totalorder %s92, %s106
      %p108 = scmp.eq.s32.totalorder %s19, 0
      %p109 = por %p107, %p108
      %s110 = ssub.s32 %s13, %s20
      %p111 = scmp.eq.s32.totalorder %s110, 0
      %s113 = sadd.s32 %s112, 1
      %s114 = scalar_select %p111, %s112, %s113
      %p117 = pneg %p111
      %p118 = scmp.eq.s32.totalorder %s13, 3
      %p119 = por %p117, %p118
      %p120 = scmp.ne.s32.totalorder %s112, %s115
      %p121 = scmp.eq.s32.totalorder %s13, 0
      %p122 = por %p120, %p121
      %p123 = scmp.ne.s32.totalorder %s112, %s115
      %p124 = scmp.eq.s32.totalorder %s18, 3
      %p125 = por %p123, %p124
      %p126 = scmp.ne.s32.totalorder %s115, %s116
      %p127 = scmp.eq.s32.totalorder %s18, 0
      %p128 = por %p126, %p127
      %p129 = scmp.ne.s32.totalorder %s115, %s116
      %p130 = scmp.eq.s32.totalorder %s19, 3
      %p131 = por %p129, %p130
      %p133 = scmp.ne.s32.totalorder %s116, %s132
      %p134 = scmp.eq.s32.totalorder %s19, 0
      %p135 = por %p133, %p134
      %p136 = scmp.le.s32.totalorder 1, %s13
      %p137 = scmp.lt.s32.totalorder %s13, 5
      %p138 = pnand %p136, %p137
      %p139 = pneg %p138
      // Predicated region
      $region9: #{upsample_nearest.1} parent=5 // pred_check
        _
      $region10: #{upsample_nearest.1} parent=5 // pred_check_branch
        %141 = sbr.rel (%p138) target = $region12
      $region11: #{upsample_nearest.1} parent=5 // pred_region
        %s142 = ssub.s32 %s13, 1
        // Predicated region
        $region13: #{upsample_nearest.1} parent=11 // pred_check
          %p143 = pneg %p60
        $region14: #{upsample_nearest.1} parent=11 // pred_check_branch
          %145 = sbr.rel (%p143) target = $region16
        $region15: #{upsample_nearest.1} parent=11 // pred_region
          _
        $region16: #{upsample_nearest.1} parent=11 // pred_fallthru
          _
        // Predicated region
        $region17: #{upsample_nearest.1} parent=11 // pred_check
          %p146 = pneg %p81
        $region18: #{upsample_nearest.1} parent=11 // pred_check_branch
          %148 = sbr.rel (%p146) target = $region20
        $region19: #{upsample_nearest.1} parent=11 // pred_region
          _
        $region20: #{upsample_nearest.1} parent=11 // pred_fallthru
          _
        // Predicated region
        $region21: #{upsample_nearest.1} parent=11 // pred_check
          %p149 = pneg %p102
        $region22: #{upsample_nearest.1} parent=11 // pred_check_branch
          %151 = sbr.rel (%p149) target = $region24
        $region23: #{upsample_nearest.1} parent=11 // pred_region
          _
        $region24: #{upsample_nearest.1} parent=11 // pred_fallthru
          _
      $region12: #{upsample_nearest.1} parent=5 // pred_fallthru
        _
      %p152 = scmp.lt.s32.totalorder %s13, 4
      // Predicated region
      $region25: #{upsample_nearest.1} parent=5 // pred_check
        %p153 = pneg %p152
      $region26: #{upsample_nearest.1} parent=5 // pred_check_branch
        %155 = sbr.rel (%p153) target = $region28
      $region27: #{upsample_nearest.1} parent=5 // pred_region
        // Predicated region
        $region29: #{upsample_nearest.1} parent=27 // pred_check
          %p156 = pneg %p33
        $region30: #{upsample_nearest.1} parent=27 // pred_check_branch
          %158 = sbr.rel (%p156) target = $region32
        $region31: #{upsample_nearest.1} parent=27 // pred_region
          %p159 = scmp.lt.s32.totalorder %s13, 3
          %s160 = scalar_select %p159, %s13, 3
          %s161 = smul.addr %s160, 252
          %s162 = smul.addr %s161, 8
          %s163 = scalar_lea.vmem %s0, %s162
        $region32: #{upsample_nearest.1} parent=27 // pred_fallthru
          _
      $region28: #{upsample_nearest.1} parent=5 // pred_fallthru
        _
      %p164 = scmp.le.s32.totalorder 1, %s13
      %p165 = scmp.lt.s32.totalorder %s13, 5
      %p166 = pnand %p164, %p165
      %p167 = pneg %p166
      // Predicated region
      $region33: #{upsample_nearest.1} parent=5 // pred_check
        _
      $region34: #{upsample_nearest.1} parent=5 // pred_check_branch
        %169 = sbr.rel (%p166) target = $region36
      $region35: #{upsample_nearest.1} parent=5 // pred_region
        %s170 = ssub.s32 %s13, 1
        %p171 = scmp.lt.s32.totalorder %s18, 3
        %s172 = scalar_select %p171, %s18, 3
        %s173 = smul.addr %s172, 252
        %s174 = smul.addr %s173, 8
        %s175 = scalar_lea.vmem %s0, %s174
        %p176 = pneg %p39
        %p177 = pneg %p36
        %p178 = pneg %p60
        %p179 = pneg %p57
        %p180 = pneg %p81
        %p181 = pneg %p78
        %p182 = pneg %p102
        %p183 = pneg %p99
        %p184 = pneg %p128
        %p185 = pneg %p125
        %s186 = sand.u32 %s115, 1
        %s187 = scalar_lea.sflag [#allocation3], %s186
        %s188 = sand.u32 %s115, 1
        %s189 = smul.addr %s188, 512
        %s190 = scalar_lea.vmem [#allocation2], %s189
        %p191 = scmp.lt.s32.totalorder %s18, 3
        %s192 = scalar_select %p191, %s18, 3
        %s193 = smul.addr %s192, 252
        %s194 = smul.addr %s193, 8
        %s195 = scalar_lea.vmem %s0, %s194
        %v197 = vld [vmem:[%s1] sm:$0xff]
        %v198 = vld [vmem:[%s1 + $0x8] sm:$0xff]
        %v199 = vld [vmem:[%s1 + $0x10] sm:$0xff]
        %v200 = vld [vmem:[%s1 + $0x18] sm:$0xff]
        %v201 = vld [vmem:[%s1 + $0x20] sm:$0xff]
        %v202 = vld [vmem:[%s1 + $0x28] sm:$0xff]
        %v203 = vld [vmem:[%s1 + $0x30] sm:$0xff]
        %v204 = vld [vmem:[%s1 + $0x38] sm:$0xff]
        %v205 = vld [vmem:[%s1 + $0x40] sm:$0xff]
        %v206 = vld [vmem:[%s1 + $0x48] sm:$0xff]
        %v207 = vld [vmem:[%s1 + $0x50] sm:$0xff]
        %v208 = vld [vmem:[%s1 + $0x58] sm:$0xff]
        %v209 = vld [vmem:[%s1 + $0x60] sm:$0xff]
        %v210 = vld [vmem:[%s1 + $0x68] sm:$0xff]
        %v211 = vld [vmem:[%s1 + $0x70] sm:$0xff]
        %v212 = vld [vmem:[%s1 + $0x78] sm:$0xff]
        %v213 = vld [vmem:[%s2] sm:$0xff]
        %v214 = vld [vmem:[%s2 + $0x8] sm:$0xff]
        %v215 = vld [vmem:[%s2 + $0x10] sm:$0xff]
        %v216 = vld [vmem:[%s2 + $0x18] sm:$0xff]
        %v217 = vld [vmem:[%s2 + $0x20] sm:$0xff]
        %v218 = vld [vmem:[%s2 + $0x28] sm:$0xff]
        %v219 = vld [vmem:[%s2 + $0x30] sm:$0xff]
        %v220 = vld [vmem:[%s2 + $0x38] sm:$0xff]
        %v221 = vld [vmem:[%s2 + $0x40] sm:$0xff]
        %v222 = vld [vmem:[%s2 + $0x48] sm:$0xff]
        %v223 = vld [vmem:[%s2 + $0x50] sm:$0xff]
        %v224 = vld [vmem:[%s2 + $0x58] sm:$0xff]
        %v225 = vld [vmem:[%s2 + $0x60] sm:$0xff]
        %v226 = vld [vmem:[%s2 + $0x68] sm:$0xff]
        %v227 = vld [vmem:[%s2 + $0x70] sm:$0xff]
        %v228 = vld [vmem:[%s2 + $0x78] sm:$0xff]
        %v229 = vld [vmem:[%s3] sm:$0xff]
        %v230 = vld [vmem:[%s3 + $0x8] sm:$0xff]
        %v231 = vld [vmem:[%s3 + $0x10] sm:$0xff]
        %v232 = vld [vmem:[%s3 + $0x18] sm:$0xff]
        %v233 = vld [vmem:[%s3 + $0x20] sm:$0xff]
        %v234 = vld [vmem:[%s3 + $0x28] sm:$0xff]
        %v235 = vld [vmem:[%s3 + $0x30] sm:$0xff]
        %v236 = vld [vmem:[%s3 + $0x38] sm:$0xff]
        %v237 = vld [vmem:[%s3 + $0x40] sm:$0xff]
        %v238 = vld [vmem:[%s3 + $0x48] sm:$0xff]
        %v239 = vld [vmem:[%s3 + $0x50] sm:$0xff]
        %v240 = vld [vmem:[%s3 + $0x58] sm:$0xff]
        %v241 = vld [vmem:[%s3 + $0x60] sm:$0xff]
        %v242 = vld [vmem:[%s3 + $0x68] sm:$0xff]
        %v243 = vld [vmem:[%s3 + $0x70] sm:$0xff]
        %v244 = vld [vmem:[%s3 + $0x78] sm:$0xff]
        %v245 = vld [vmem:[%s3 + $0x80] sm:$0xff]
        %v246 = vld [vmem:[%s3 + $0x88] sm:$0xff]
        %v247 = vld [vmem:[%s3 + $0x90] sm:$0xff]
        %v248 = vld [vmem:[%s3 + $0x98] sm:$0xff]
        %v249 = vld [vmem:[%s3 + $0xa0] sm:$0xff]
        %v250 = vld [vmem:[%s3 + $0xa8] sm:$0xff]
        %v251 = vld [vmem:[%s3 + $0xb0] sm:$0xff]
        %v252 = vld [vmem:[%s3 + $0xb8] sm:$0xff]
        %v253 = vld [vmem:[%s3 + $0xc0] sm:$0xff]
        %v254 = vld [vmem:[%s3 + $0xc8] sm:$0xff]
        %v255 = vld [vmem:[%s3 + $0xd0] sm:$0xff]
        %v256 = vld [vmem:[%s3 + $0xd8] sm:$0xff]
        %v257 = vld [vmem:[%s3 + $0xe0] sm:$0xff]
        %v258 = vld [vmem:[%s3 + $0xe8] sm:$0xff]
        %v259 = vld [vmem:[%s3 + $0xf0] sm:$0xff]
        %v260 = vld [vmem:[%s3 + $0xf8] sm:$0xff]
        %v261 = vld [vmem:[%s3 + $0x100] sm:$0xff]
        %v262 = vld [vmem:[%s3 + $0x108] sm:$0xff]
        %v263 = vld [vmem:[%s3 + $0x110] sm:$0xff]
        %v264 = vld [vmem:[%s3 + $0x118] sm:$0xff]
        %v265 = vld [vmem:[%s3 + $0x120] sm:$0xff]
        %v266 = vld [vmem:[%s3 + $0x128] sm:$0xff]
        %v267 = vld [vmem:[%s3 + $0x130] sm:$0xff]
        %v268 = vld [vmem:[%s3 + $0x138] sm:$0xff]
        %v269 = vld [vmem:[%s3 + $0x140] sm:$0xff]
        %v270 = vld [vmem:[%s3 + $0x148] sm:$0xff]
        %v271 = vld [vmem:[%s3 + $0x150] sm:$0xff]
        %v272 = vld [vmem:[%s3 + $0x158] sm:$0xff]
        %v273 = vld [vmem:[%s3 + $0x160] sm:$0xff]
        %v274 = vld [vmem:[%s3 + $0x168] sm:$0xff]
        %v275 = vld [vmem:[%s3 + $0x170] sm:$0xff]
        %v276 = vld [vmem:[%s3 + $0x178] sm:$0xff]
        %v277 = vld [vmem:[%s3 + $0x180] sm:$0xff]
        %v278 = vld [vmem:[%s3 + $0x188] sm:$0xff]
        %v279 = vld [vmem:[%s195] sm:$0xff]
        %v280 = vld [vmem:[%s195 + $0x8] sm:$0xff]
        %v281 = vld [vmem:[%s195 + $0x10] sm:$0xff]
        %v282 = vld [vmem:[%s195 + $0x18] sm:$0xff]
        %v283 = vld [vmem:[%s195 + $0x20] sm:$0xff]
        %v284 = vld [vmem:[%s195 + $0x28] sm:$0xff]
        %v285 = vld [vmem:[%s195 + $0x30] sm:$0xff]
        %v286 = vld [vmem:[%s195 + $0x38] sm:$0xff]
        %v287 = vld [vmem:[%s195 + $0x40] sm:$0xff]
        %v288 = vld [vmem:[%s195 + $0x48] sm:$0xff]
        %v289 = vld [vmem:[%s195 + $0x50] sm:$0xff]
        %v290 = vld [vmem:[%s195 + $0x58] sm:$0xff]
        %v291 = vld [vmem:[%s195 + $0x60] sm:$0xff]
        %v292 = vld [vmem:[%s195 + $0x68] sm:$0xff]
        %v293 = vld [vmem:[%s195 + $0x70] sm:$0xff]
        %v294 = vld [vmem:[%s195 + $0x78] sm:$0xff]
        %v295 = vld [vmem:[%s195 + $0x80] sm:$0xff]
        %v296 = vld [vmem:[%s195 + $0x88] sm:$0xff]
        %v297 = vld [vmem:[%s195 + $0x90] sm:$0xff]
        %v298 = vld [vmem:[%s195 + $0x98] sm:$0xff]
        %v299 = vld [vmem:[%s195 + $0xa0] sm:$0xff]
        %v300 = vld [vmem:[%s195 + $0xa8] sm:$0xff]
        %v301 = vld [vmem:[%s195 + $0xb0] sm:$0xff]
        %v302 = vld [vmem:[%s195 + $0xb8] sm:$0xff]
        %v303 = vld [vmem:[%s195 + $0xc0] sm:$0xff]
        %v304 = vld [vmem:[%s195 + $0xc8] sm:$0xff]
        %v305 = vld [vmem:[%s195 + $0xd0] sm:$0xff]
        %v306 = vld [vmem:[%s195 + $0xd8] sm:$0xff]
        %v307 = vld [vmem:[%s195 + $0xe0] sm:$0xff]
        %v308 = vld [vmem:[%s195 + $0xe8] sm:$0xff]
        %v309 = vld [vmem:[%s195 + $0xf0] sm:$0xff]
        %v310 = vld [vmem:[%s195 + $0xf8] sm:$0xff]
        %v311 = vld [vmem:[%s195 + $0x100] sm:$0xff]
        %v312 = vld [vmem:[%s195 + $0x108] sm:$0xff]
        %v313 = vld [vmem:[%s195 + $0x110] sm:$0xff]
        %v314 = vld [vmem:[%s195 + $0x118] sm:$0xff]
        %v315 = vld [vmem:[%s195 + $0x120] sm:$0xff]
        %v316 = vld [vmem:[%s195 + $0x128] sm:$0xff]
        %v317 = vld [vmem:[%s195 + $0x130] sm:$0xff]
        %v318 = vld [vmem:[%s195 + $0x138] sm:$0xff]
        %v319 = vld [vmem:[%s195 + $0x140] sm:$0xff]
        %v320 = vld [vmem:[%s195 + $0x148] sm:$0xff]
        %v321 = vld [vmem:[%s195 + $0x150] sm:$0xff]
        %v322 = vld [vmem:[%s195 + $0x158] sm:$0xff]
        %v323 = vld [vmem:[%s195 + $0x160] sm:$0xff]
        %v324 = vld [vmem:[%s195 + $0x168] sm:$0xff]
        %v325 = vld [vmem:[%s195 + $0x170] sm:$0xff]
        %v326 = vld [vmem:[%s195 + $0x178] sm:$0xff]
        %v327 = vld [vmem:[%s195 + $0x180] sm:$0xff]
        %v328 = vld [vmem:[%s195 + $0x188] sm:$0xff]
        %v329 = vld [vmem:[%s195 + $0x190] sm:$0xff]
        %v330 = vld [vmem:[%s195 + $0x198] sm:$0xff]
        %v331 = vld [vmem:[%s195 + $0x1a0] sm:$0xff]
        %v332 = vld [vmem:[%s195 + $0x1a8] sm:$0xff]
        %v333 = vld [vmem:[%s195 + $0x1b0] sm:$0xff]
        %v334 = vld [vmem:[%s195 + $0x1b8] sm:$0xff]
        %v335 = vld [vmem:[%s195 + $0x1c0] sm:$0xff]
        %v336 = vld [vmem:[%s195 + $0x1c8] sm:$0xff]
        %v337 = vld [vmem:[%s195 + $0x1d0] sm:$0xff]
        %v338 = vld [vmem:[%s195 + $0x1d8] sm:$0xff]
        %v339 = vld [vmem:[%s195 + $0x1e0] sm:$0xff]
        %v340 = vld [vmem:[%s195 + $0x1e8] sm:$0xff]
        %v341 = vld [vmem:[%s195 + $0x1f0] sm:$0xff]
        %v342 = vld [vmem:[%s195 + $0x1f8] sm:$0xff]
        %v343 = vld [vmem:[%s195 + $0x200] sm:$0xff]
        %v344 = vld [vmem:[%s195 + $0x208] sm:$0xff]
        %v345 = vld [vmem:[%s195 + $0x210] sm:$0xff]
        %v346 = vld [vmem:[%s195 + $0x218] sm:$0xff]
        %v347 = vld [vmem:[%s195 + $0x220] sm:$0xff]
        %v348 = vld [vmem:[%s195 + $0x228] sm:$0xff]
        %v349 = vld [vmem:[%s195 + $0x230] sm:$0xff]
        %v350 = vld [vmem:[%s195 + $0x238] sm:$0xff]
        %v351 = vld [vmem:[%s195 + $0x240] sm:$0xff]
        %v352 = vld [vmem:[%s195 + $0x248] sm:$0xff]
        %v353 = vld [vmem:[%s195 + $0x250] sm:$0xff]
        %v354 = vld [vmem:[%s195 + $0x258] sm:$0xff]
        %v355 = vld [vmem:[%s195 + $0x260] sm:$0xff]
        %v356 = vld [vmem:[%s195 + $0x268] sm:$0xff]
        %v357 = vld [vmem:[%s195 + $0x270] sm:$0xff]
        %v358 = vld [vmem:[%s195 + $0x278] sm:$0xff]
        %v359 = vld [vmem:[%s195 + $0x280] sm:$0xff]
        %v360 = vld [vmem:[%s195 + $0x288] sm:$0xff]
        %v361 = vld [vmem:[%s195 + $0x290] sm:$0xff]
        %v362 = vld [vmem:[%s195 + $0x298] sm:$0xff]
        %v363 = vld [vmem:[%s195 + $0x2a0] sm:$0xff]
        %v364 = vld [vmem:[%s195 + $0x2a8] sm:$0xff]
        %v365 = vld [vmem:[%s195 + $0x2b0] sm:$0xff]
        %v366 = vld [vmem:[%s195 + $0x2b8] sm:$0xff]
        %v367 = vld [vmem:[%s195 + $0x2c0] sm:$0xff]
        %v368 = vld [vmem:[%s195 + $0x2c8] sm:$0xff]
        %v369 = vld [vmem:[%s195 + $0x2d0] sm:$0xff]
        %v370 = vld [vmem:[%s195 + $0x2d8] sm:$0xff]
        %v371 = vld [vmem:[%s195 + $0x2e0] sm:$0xff]
        %v372 = vld [vmem:[%s195 + $0x2e8] sm:$0xff]
        %v373 = vld [vmem:[%s195 + $0x2f0] sm:$0xff]
        %v374 = vld [vmem:[%s195 + $0x2f8] sm:$0xff]
        %v375 = vld [vmem:[%s195 + $0x300] sm:$0xff]
        %v376 = vld [vmem:[%s195 + $0x308] sm:$0xff]
        %v377 = vld [vmem:[%s195 + $0x310] sm:$0xff]
        %v378 = vld [vmem:[%s195 + $0x318] sm:$0xff]
        %v379 = vld [vmem:[%s195 + $0x320] sm:$0xff]
        %v380 = vld [vmem:[%s195 + $0x328] sm:$0xff]
        %v381 = vld [vmem:[%s195 + $0x330] sm:$0xff]
        %v382 = vld [vmem:[%s195 + $0x338] sm:$0xff]
        %v383 = vld [vmem:[%s195 + $0x340] sm:$0xff]
        %v384 = vld [vmem:[%s195 + $0x348] sm:$0xff]
        %v385 = vld [vmem:[%s195 + $0x350] sm:$0xff]
        %v386 = vld [vmem:[%s195 + $0x358] sm:$0xff]
        %v387 = vld [vmem:[%s195 + $0x360] sm:$0xff]
        %v388 = vld [vmem:[%s195 + $0x368] sm:$0xff]
        %v389 = vld [vmem:[%s195 + $0x370] sm:$0xff]
        %v390 = vld [vmem:[%s195 + $0x378] sm:$0xff]
        %v391 = vld [vmem:[%s195 + $0x380] sm:$0xff]
        %v392 = vld [vmem:[%s195 + $0x388] sm:$0xff]
        %v393 = vld [vmem:[%s195 + $0x390] sm:$0xff]
        %v394 = vld [vmem:[%s195 + $0x398] sm:$0xff]
        %v395 = vld [vmem:[%s195 + $0x3a0] sm:$0xff]
        %v396 = vld [vmem:[%s195 + $0x3a8] sm:$0xff]
        %v397 = vld [vmem:[%s195 + $0x3b0] sm:$0xff]
        %v398 = vld [vmem:[%s195 + $0x3b8] sm:$0xff]
        %v399 = vld [vmem:[%s195 + $0x3c0] sm:$0xff]
        %v400 = vld [vmem:[%s195 + $0x3c8] sm:$0xff]
        %v401 = vld [vmem:[%s195 + $0x3d0] sm:$0xff]
        %v402 = vld [vmem:[%s195 + $0x3d8] sm:$0xff]
        %v403 = vld [vmem:[%s195 + $0x3e0] sm:$0xff]
        %v404 = vld [vmem:[%s195 + $0x3e8] sm:$0xff]
        %v405 = vld [vmem:[%s195 + $0x3f0] sm:$0xff]
        %v406 = vld [vmem:[%s195 + $0x3f8] sm:$0xff]
        %v407 = vld [vmem:[%s195 + $0x400] sm:$0xff]
        %v408 = vld [vmem:[%s195 + $0x408] sm:$0xff]
        %v409 = vld [vmem:[%s195 + $0x410] sm:$0xff]
        %v410 = vld [vmem:[%s195 + $0x418] sm:$0xff]
        %v411 = vld [vmem:[%s195 + $0x420] sm:$0xff]
        %v412 = vld [vmem:[%s195 + $0x428] sm:$0xff]
        %v413 = vld [vmem:[%s195 + $0x430] sm:$0xff]
        %v414 = vld [vmem:[%s195 + $0x438] sm:$0xff]
        %v415 = vld [vmem:[%s195 + $0x440] sm:$0xff]
        %v416 = vld [vmem:[%s195 + $0x448] sm:$0xff]
        %v417 = vld [vmem:[%s195 + $0x450] sm:$0xff]
        %v418 = vld [vmem:[%s195 + $0x458] sm:$0xff]
        %v419 = vld [vmem:[%s195 + $0x460] sm:$0xff]
        %v420 = vld [vmem:[%s195 + $0x468] sm:$0xff]
        %v421 = vld [vmem:[%s195 + $0x470] sm:$0xff]
        %v422 = vld [vmem:[%s195 + $0x478] sm:$0xff]
        %v423 = vld [vmem:[%s195 + $0x480] sm:$0xff]
        %v424 = vld [vmem:[%s195 + $0x488] sm:$0xff]
        %v425 = vld [vmem:[%s195 + $0x490] sm:$0xff]
        %v426 = vld [vmem:[%s195 + $0x498] sm:$0xff]
        %v427 = vld [vmem:[%s195 + $0x4a0] sm:$0xff]
        %v428 = vld [vmem:[%s195 + $0x4a8] sm:$0xff]
        %v429 = vld [vmem:[%s195 + $0x4b0] sm:$0xff]
        %v430 = vld [vmem:[%s195 + $0x4b8] sm:$0xff]
        %v431 = vld [vmem:[%s195 + $0x4c0] sm:$0xff]
        %v432 = vld [vmem:[%s195 + $0x4c8] sm:$0xff]
        %v433 = vld [vmem:[%s195 + $0x4d0] sm:$0xff]
        %v434 = vld [vmem:[%s195 + $0x4d8] sm:$0xff]
        %v435 = vld [vmem:[%s195 + $0x4e0] sm:$0xff]
        %v436 = vld [vmem:[%s195 + $0x4e8] sm:$0xff]
        %v437 = vld [vmem:[%s195 + $0x4f0] sm:$0xff]
        %v438 = vld [vmem:[%s195 + $0x4f8] sm:$0xff]
        %v439 = vld [vmem:[%s195 + $0x500] sm:$0xff]
        %v440 = vld [vmem:[%s195 + $0x508] sm:$0xff]
        %v441 = vld [vmem:[%s195 + $0x510] sm:$0xff]
        %v442 = vld [vmem:[%s195 + $0x518] sm:$0xff]
        %v443 = vld [vmem:[%s195 + $0x520] sm:$0xff]
        %v444 = vld [vmem:[%s195 + $0x528] sm:$0xff]
        %v445 = vld [vmem:[%s195 + $0x530] sm:$0xff]
        %v446 = vld [vmem:[%s195 + $0x538] sm:$0xff]
        %v447 = vld [vmem:[%s195 + $0x540] sm:$0xff]
        %v448 = vld [vmem:[%s195 + $0x548] sm:$0xff]
        %v449 = vld [vmem:[%s195 + $0x550] sm:$0xff]
        %v450 = vld [vmem:[%s195 + $0x558] sm:$0xff]
        %v451 = vld [vmem:[%s195 + $0x560] sm:$0xff]
        %v452 = vld [vmem:[%s195 + $0x568] sm:$0xff]
        %v453 = vld [vmem:[%s195 + $0x570] sm:$0xff]
        %v454 = vld [vmem:[%s195 + $0x578] sm:$0xff]
        %v455 = vld [vmem:[%s195 + $0x580] sm:$0xff]
        %v456 = vld [vmem:[%s195 + $0x588] sm:$0xff]
        %v457 = vld [vmem:[%s195 + $0x590] sm:$0xff]
        %v458 = vld [vmem:[%s195 + $0x598] sm:$0xff]
        %v459 = vld [vmem:[%s195 + $0x5a0] sm:$0xff]
        %v460 = vld [vmem:[%s195 + $0x5a8] sm:$0xff]
        %v461 = vld [vmem:[%s195 + $0x5b0] sm:$0xff]
        %v462 = vld [vmem:[%s195 + $0x5b8] sm:$0xff]
        %v463 = vld [vmem:[%s195 + $0x5c0] sm:$0xff]
        %v464 = vld [vmem:[%s195 + $0x5c8] sm:$0xff]
        %v465 = vld [vmem:[%s195 + $0x5d0] sm:$0xff]
        %v466 = vld [vmem:[%s195 + $0x5d8] sm:$0xff]
        %v467 = vld [vmem:[%s195 + $0x5e0] sm:$0xff]
        %v468 = vld [vmem:[%s195 + $0x5e8] sm:$0xff]
        %v469 = vld [vmem:[%s195 + $0x5f0] sm:$0xff]
        %v470 = vld [vmem:[%s195 + $0x5f8] sm:$0xff]
        %v471 = vld [vmem:[%s195 + $0x600] sm:$0xff]
        %v472 = vld [vmem:[%s195 + $0x608] sm:$0xff]
        %v473 = vld [vmem:[%s195 + $0x610] sm:$0xff]
        %v474 = vld [vmem:[%s195 + $0x618] sm:$0xff]
        %v475 = vld [vmem:[%s195 + $0x620] sm:$0xff]
        %v476 = vld [vmem:[%s195 + $0x628] sm:$0xff]
        %v477 = vld [vmem:[%s195 + $0x630] sm:$0xff]
        %v478 = vld [vmem:[%s195 + $0x638] sm:$0xff]
        %v479 = vld [vmem:[%s195 + $0x640] sm:$0xff]
        %v480 = vld [vmem:[%s195 + $0x648] sm:$0xff]
        %v481 = vld [vmem:[%s195 + $0x650] sm:$0xff]
        %v482 = vld [vmem:[%s195 + $0x658] sm:$0xff]
        %v483 = vld [vmem:[%s195 + $0x660] sm:$0xff]
        %v484 = vld [vmem:[%s195 + $0x668] sm:$0xff]
        %v485 = vld [vmem:[%s195 + $0x670] sm:$0xff]
        %v486 = vld [vmem:[%s195 + $0x678] sm:$0xff]
        %v487 = vld [vmem:[%s195 + $0x680] sm:$0xff]
        %v488 = vld [vmem:[%s195 + $0x688] sm:$0xff]
        %v489 = vld [vmem:[%s195 + $0x690] sm:$0xff]
        %v490 = vld [vmem:[%s195 + $0x698] sm:$0xff]
        %v491 = vld [vmem:[%s195 + $0x6a0] sm:$0xff]
        %v492 = vld [vmem:[%s195 + $0x6a8] sm:$0xff]
        %v493 = vld [vmem:[%s195 + $0x6b0] sm:$0xff]
        %v494 = vld [vmem:[%s195 + $0x6b8] sm:$0xff]
        %v495 = vld [vmem:[%s195 + $0x6c0] sm:$0xff]
        %v496 = vld [vmem:[%s195 + $0x6c8] sm:$0xff]
        %v497 = vld [vmem:[%s195 + $0x6d0] sm:$0xff]
        %v498 = vld [vmem:[%s195 + $0x6d8] sm:$0xff]
        %v499 = vld [vmem:[%s195 + $0x6e0] sm:$0xff]
        %v500 = vld [vmem:[%s195 + $0x6e8] sm:$0xff]
        %v501 = vld [vmem:[%s195 + $0x6f0] sm:$0xff]
        %v502 = vld [vmem:[%s195 + $0x6f8] sm:$0xff]
        %v503 = vld [vmem:[%s195 + $0x700] sm:$0xff]
        %v504 = vld [vmem:[%s195 + $0x708] sm:$0xff]
        %v505 = vld [vmem:[%s195 + $0x710] sm:$0xff]
        %v506 = vld [vmem:[%s195 + $0x718] sm:$0xff]
        %v507 = vld [vmem:[%s195 + $0x720] sm:$0xff]
        %v508 = vld [vmem:[%s195 + $0x728] sm:$0xff]
        %v509 = vld [vmem:[%s195 + $0x730] sm:$0xff]
        %v510 = vld [vmem:[%s195 + $0x738] sm:$0xff]
        %v511 = vld [vmem:[%s195 + $0x740] sm:$0xff]
        %v512 = vld [vmem:[%s195 + $0x748] sm:$0xff]
        %v513 = vld [vmem:[%s195 + $0x750] sm:$0xff]
        %v514 = vld [vmem:[%s195 + $0x758] sm:$0xff]
        %v515 = vld [vmem:[%s195 + $0x760] sm:$0xff]
        %v516 = vld [vmem:[%s195 + $0x768] sm:$0xff]
        %v517 = vld [vmem:[%s195 + $0x770] sm:$0xff]
        %v518 = vld [vmem:[%s195 + $0x778] sm:$0xff]
        %v519 = vld [vmem:[%s195 + $0x780] sm:$0xff]
        %v520 = vld [vmem:[%s195 + $0x788] sm:$0xff]
        %v521 = vld [vmem:[%s195 + $0x790] sm:$0xff]
        %v522 = vld [vmem:[%s195 + $0x798] sm:$0xff]
        %v523 = vld [vmem:[%s195 + $0x7a0] sm:$0xff]
        %v524 = vld [vmem:[%s195 + $0x7a8] sm:$0xff]
        %v525 = vld [vmem:[%s195 + $0x7b0] sm:$0xff]
        %v526 = vld [vmem:[%s195 + $0x7b8] sm:$0xff]
        %v527 = vld [vmem:[%s195 + $0x7c0] sm:$0xf]
        %v528 = vld [vmem:[%s195 + $0x7c8] sm:$0xf]
        %v529 = vld [vmem:[%s195 + $0x7d0] sm:$0xf]
        %v530 = vld [vmem:[%s195 + $0x7d8] sm:$0xf]
        %v659 = vand.u32 %v279, 4294901760
        %v660 = vand.u32 %v280, 4294901760
        %v661 = vand.u32 %v281, 4294901760
        %v662 = vand.u32 %v282, 4294901760
        %v663 = vand.u32 %v283, 4294901760
        %v664 = vand.u32 %v284, 4294901760
        %v665 = vand.u32 %v285, 4294901760
        %v666 = vand.u32 %v286, 4294901760
        %v667 = vand.u32 %v287, 4294901760
        %v668 = vand.u32 %v288, 4294901760
        %v669 = vand.u32 %v289, 4294901760
        %v670 = vand.u32 %v290, 4294901760
        %v671 = vand.u32 %v291, 4294901760
        %v672 = vand.u32 %v292, 4294901760
        %v673 = vand.u32 %v293, 4294901760
        %v674 = vand.u32 %v294, 4294901760
        %v675 = vand.u32 %v295, 4294901760
        %v676 = vand.u32 %v296, 4294901760
        %v677 = vand.u32 %v297, 4294901760
        %v678 = vand.u32 %v298, 4294901760
        %v679 = vand.u32 %v299, 4294901760
        %v680 = vand.u32 %v300, 4294901760
        %v681 = vand.u32 %v301, 4294901760
        %v682 = vand.u32 %v302, 4294901760
        %v683 = vand.u32 %v303, 4294901760
        %v684 = vand.u32 %v304, 4294901760
        %v685 = vand.u32 %v305, 4294901760
        %v686 = vand.u32 %v306, 4294901760
        %v687 = vand.u32 %v307, 4294901760
        %v688 = vand.u32 %v308, 4294901760
        %v689 = vand.u32 %v309, 4294901760
        %v690 = vand.u32 %v310, 4294901760
        %v691 = vand.u32 %v311, 4294901760
        %v692 = vand.u32 %v312, 4294901760
        %v693 = vand.u32 %v313, 4294901760
        %v694 = vand.u32 %v314, 4294901760
        %v695 = vand.u32 %v315, 4294901760
        %v696 = vand.u32 %v316, 4294901760
        %v697 = vand.u32 %v317, 4294901760
        %v698 = vand.u32 %v318, 4294901760
        %v699 = vand.u32 %v319, 4294901760
        %v700 = vand.u32 %v320, 4294901760
        %v701 = vand.u32 %v321, 4294901760
        %v702 = vand.u32 %v322, 4294901760
        %v703 = vand.u32 %v323, 4294901760
        %v704 = vand.u32 %v324, 4294901760
        %v705 = vand.u32 %v325, 4294901760
        %v706 = vand.u32 %v326, 4294901760
        %v707 = vand.u32 %v327, 4294901760
        %v708 = vand.u32 %v328, 4294901760
        %v709 = vand.u32 %v329, 4294901760
        %v710 = vand.u32 %v330, 4294901760
        %v711 = vand.u32 %v331, 4294901760
        %v712 = vand.u32 %v332, 4294901760
        %v713 = vand.u32 %v333, 4294901760
        %v714 = vand.u32 %v334, 4294901760
        %v715 = vand.u32 %v335, 4294901760
        %v716 = vand.u32 %v336, 4294901760
        %v717 = vand.u32 %v337, 4294901760
        %v718 = vand.u32 %v338, 4294901760
        %v719 = vand.u32 %v339, 4294901760
        %v720 = vand.u32 %v340, 4294901760
        %v721 = vand.u32 %v341, 4294901760
        %v722 = vand.u32 %v342, 4294901760
        %v723 = vand.u32 %v343, 4294901760
        %v724 = vand.u32 %v344, 4294901760
        %v725 = vand.u32 %v345, 4294901760
        %v726 = vand.u32 %v346, 4294901760
        %v727 = vand.u32 %v347, 4294901760
        %v728 = vand.u32 %v348, 4294901760
        %v729 = vand.u32 %v349, 4294901760
        %v730 = vand.u32 %v350, 4294901760
        %v731 = vand.u32 %v351, 4294901760
        %v732 = vand.u32 %v352, 4294901760
        %v733 = vand.u32 %v353, 4294901760
        %v734 = vand.u32 %v354, 4294901760
        %v735 = vand.u32 %v355, 4294901760
        %v736 = vand.u32 %v356, 4294901760
        %v737 = vand.u32 %v357, 4294901760
        %v738 = vand.u32 %v358, 4294901760
        %v739 = vand.u32 %v359, 4294901760
        %v740 = vand.u32 %v360, 4294901760
        %v741 = vand.u32 %v361, 4294901760
        %v742 = vand.u32 %v362, 4294901760
        %v743 = vand.u32 %v363, 4294901760
        %v744 = vand.u32 %v364, 4294901760
        %v745 = vand.u32 %v365, 4294901760
        %v746 = vand.u32 %v366, 4294901760
        %v747 = vand.u32 %v367, 4294901760
        %v748 = vand.u32 %v368, 4294901760
        %v749 = vand.u32 %v369, 4294901760
        %v750 = vand.u32 %v370, 4294901760
        %v751 = vand.u32 %v371, 4294901760
        %v752 = vand.u32 %v372, 4294901760
        %v753 = vand.u32 %v373, 4294901760
        %v754 = vand.u32 %v374, 4294901760
        %v755 = vand.u32 %v375, 4294901760
        %v756 = vand.u32 %v376, 4294901760
        %v757 = vand.u32 %v377, 4294901760
        %v758 = vand.u32 %v378, 4294901760
        %v759 = vand.u32 %v379, 4294901760
        %v760 = vand.u32 %v380, 4294901760
        %v761 = vand.u32 %v381, 4294901760
        %v762 = vand.u32 %v382, 4294901760
        %v763 = vand.u32 %v383, 4294901760
        %v764 = vand.u32 %v384, 4294901760
        %v765 = vand.u32 %v385, 4294901760
        %v766 = vand.u32 %v386, 4294901760
        %v767 = vand.u32 %v387, 4294901760
        %v768 = vand.u32 %v388, 4294901760
        %v769 = vand.u32 %v389, 4294901760
        %v770 = vand.u32 %v390, 4294901760
        %v771 = vand.u32 %v391, 4294901760
        %v772 = vand.u32 %v392, 4294901760
        %v773 = vand.u32 %v393, 4294901760
        %v774 = vand.u32 %v394, 4294901760
        %v775 = vand.u32 %v395, 4294901760
        %v776 = vand.u32 %v396, 4294901760
        %v777 = vand.u32 %v397, 4294901760
        %v778 = vand.u32 %v398, 4294901760
        %v779 = vand.u32 %v399, 4294901760
        %v780 = vand.u32 %v400, 4294901760
        %v781 = vand.u32 %v401, 4294901760
        %v782 = vand.u32 %v402, 4294901760
        %v783 = vand.u32 %v403, 4294901760
        %v784 = vand.u32 %v404, 4294901760
        %v785 = vand.u32 %v405, 4294901760
        %v786 = vand.u32 %v406, 4294901760
        %v915 = vsub.f32 %v279, %v659
        %v916 = vsub.f32 %v280, %v660
        %v917 = vsub.f32 %v281, %v661
        %v918 = vsub.f32 %v282, %v662
        %v919 = vsub.f32 %v283, %v663
        %v920 = vsub.f32 %v284, %v664
        %v921 = vsub.f32 %v285, %v665
        %v922 = vsub.f32 %v286, %v666
        %v923 = vsub.f32 %v287, %v667
        %v924 = vsub.f32 %v288, %v668
        %v925 = vsub.f32 %v289, %v669
        %v926 = vsub.f32 %v290, %v670
        %v927 = vsub.f32 %v291, %v671
        %v928 = vsub.f32 %v292, %v672
        %v929 = vsub.f32 %v293, %v673
        %v930 = vsub.f32 %v294, %v674
        %v931 = vsub.f32 %v295, %v675
        %v932 = vsub.f32 %v296, %v676
        %v933 = vsub.f32 %v297, %v677
        %v934 = vsub.f32 %v298, %v678
        %v935 = vsub.f32 %v299, %v679
        %v936 = vsub.f32 %v300, %v680
        %v937 = vsub.f32 %v301, %v681
        %v938 = vsub.f32 %v302, %v682
        %v939 = vsub.f32 %v303, %v683
        %v940 = vsub.f32 %v304, %v684
        %v941 = vsub.f32 %v305, %v685
        %v942 = vsub.f32 %v306, %v686
        %v943 = vsub.f32 %v307, %v687
        %v944 = vsub.f32 %v308, %v688
        %v945 = vsub.f32 %v309, %v689
        %v946 = vsub.f32 %v310, %v690
        %v947 = vsub.f32 %v311, %v691
        %v948 = vsub.f32 %v312, %v692
        %v949 = vsub.f32 %v313, %v693
        %v950 = vsub.f32 %v314, %v694
        %v951 = vsub.f32 %v315, %v695
        %v952 = vsub.f32 %v316, %v696
        %v953 = vsub.f32 %v317, %v697
        %v954 = vsub.f32 %v318, %v698
        %v955 = vsub.f32 %v319, %v699
        %v956 = vsub.f32 %v320, %v700
        %v957 = vsub.f32 %v321, %v701
        %v958 = vsub.f32 %v322, %v702
        %v959 = vsub.f32 %v323, %v703
        %v960 = vsub.f32 %v324, %v704
        %v961 = vsub.f32 %v325, %v705
        %v962 = vsub.f32 %v326, %v706
        %v963 = vsub.f32 %v327, %v707
        %v964 = vsub.f32 %v328, %v708
        %v965 = vsub.f32 %v329, %v709
        %v966 = vsub.f32 %v330, %v710
        %v967 = vsub.f32 %v331, %v711
        %v968 = vsub.f32 %v332, %v712
        %v969 = vsub.f32 %v333, %v713
        %v970 = vsub.f32 %v334, %v714
        %v971 = vsub.f32 %v335, %v715
        %v972 = vsub.f32 %v336, %v716
        %v973 = vsub.f32 %v337, %v717
        %v974 = vsub.f32 %v338, %v718
        %v975 = vsub.f32 %v339, %v719
        %v976 = vsub.f32 %v340, %v720
        %v977 = vsub.f32 %v341, %v721
        %v978 = vsub.f32 %v342, %v722
        %v979 = vsub.f32 %v343, %v723
        %v980 = vsub.f32 %v344, %v724
        %v981 = vsub.f32 %v345, %v725
        %v982 = vsub.f32 %v346, %v726
        %v983 = vsub.f32 %v347, %v727
        %v984 = vsub.f32 %v348, %v728
        %v985 = vsub.f32 %v349, %v729
        %v986 = vsub.f32 %v350, %v730
        %v987 = vsub.f32 %v351, %v731
        %v988 = vsub.f32 %v352, %v732
        %v989 = vsub.f32 %v353, %v733
        %v990 = vsub.f32 %v354, %v734
        %v991 = vsub.f32 %v355, %v735
        %v992 = vsub.f32 %v356, %v736
        %v993 = vsub.f32 %v357, %v737
        %v994 = vsub.f32 %v358, %v738
        %v995 = vsub.f32 %v359, %v739
        %v996 = vsub.f32 %v360, %v740
        %v997 = vsub.f32 %v361, %v741
        %v998 = vsub.f32 %v362, %v742
        %v999 = vsub.f32 %v363, %v743
        %v1000 = vsub.f32 %v364, %v744
        %v1001 = vsub.f32 %v365, %v745
        %v1002 = vsub.f32 %v366, %v746
        %v1003 = vsub.f32 %v367, %v747
        %v1004 = vsub.f32 %v368, %v748
        %v1005 = vsub.f32 %v369, %v749
        %v1006 = vsub.f32 %v370, %v750
        %v1007 = vsub.f32 %v371, %v751
        %v1008 = vsub.f32 %v372, %v752
        %v1009 = vsub.f32 %v373, %v753
        %v1010 = vsub.f32 %v374, %v754
        %v1011 = vsub.f32 %v375, %v755
        %v1012 = vsub.f32 %v376, %v756
        %v1013 = vsub.f32 %v377, %v757
        %v1014 = vsub.f32 %v378, %v758
        %v1015 = vsub.f32 %v379, %v759
        %v1016 = vsub.f32 %v380, %v760
        %v1017 = vsub.f32 %v381, %v761
        %v1018 = vsub.f32 %v382, %v762
        %v1019 = vsub.f32 %v383, %v763
        %v1020 = vsub.f32 %v384, %v764
        %v1021 = vsub.f32 %v385, %v765
        %v1022 = vsub.f32 %v386, %v766
        %v1023 = vsub.f32 %v387, %v767
        %v1024 = vsub.f32 %v388, %v768
        %v1025 = vsub.f32 %v389, %v769
        %v1026 = vsub.f32 %v390, %v770
        %v1027 = vsub.f32 %v391, %v771
        %v1028 = vsub.f32 %v392, %v772
        %v1029 = vsub.f32 %v393, %v773
        %v1030 = vsub.f32 %v394, %v774
        %v1031 = vsub.f32 %v395, %v775
        %v1032 = vsub.f32 %v396, %v776
        %v1033 = vsub.f32 %v397, %v777
        %v1034 = vsub.f32 %v398, %v778
        %v1035 = vsub.f32 %v399, %v779
        %v1036 = vsub.f32 %v400, %v780
        %v1037 = vsub.f32 %v401, %v781
        %v1038 = vsub.f32 %v402, %v782
        %v1039 = vsub.f32 %v403, %v783
        %v1040 = vsub.f32 %v404, %v784
        %v1041 = vsub.f32 %v405, %v785
        %v1042 = vsub.f32 %v406, %v786
        %v1171 = vand.u32 %v915, 4294901760
        %v1172 = vand.u32 %v916, 4294901760
        %v1173 = vand.u32 %v917, 4294901760
        %v1174 = vand.u32 %v918, 4294901760
        %v1175 = vand.u32 %v919, 4294901760
        %v1176 = vand.u32 %v920, 4294901760
        %v1177 = vand.u32 %v921, 4294901760
        %v1178 = vand.u32 %v922, 4294901760
        %v1179 = vand.u32 %v923, 4294901760
        %v1180 = vand.u32 %v924, 4294901760
        %v1181 = vand.u32 %v925, 4294901760
        %v1182 = vand.u32 %v926, 4294901760
        %v1183 = vand.u32 %v927, 4294901760
        %v1184 = vand.u32 %v928, 4294901760
        %v1185 = vand.u32 %v929, 4294901760
        %v1186 = vand.u32 %v930, 4294901760
        %v1187 = vand.u32 %v931, 4294901760
        %v1188 = vand.u32 %v932, 4294901760
        %v1189 = vand.u32 %v933, 4294901760
        %v1190 = vand.u32 %v934, 4294901760
        %v1191 = vand.u32 %v935, 4294901760
        %v1192 = vand.u32 %v936, 4294901760
        %v1193 = vand.u32 %v937, 4294901760
        %v1194 = vand.u32 %v938, 4294901760
        %v1195 = vand.u32 %v939, 4294901760
        %v1196 = vand.u32 %v940, 4294901760
        %v1197 = vand.u32 %v941, 4294901760
        %v1198 = vand.u32 %v942, 4294901760
        %v1199 = vand.u32 %v943, 4294901760
        %v1200 = vand.u32 %v944, 4294901760
        %v1201 = vand.u32 %v945, 4294901760
        %v1202 = vand.u32 %v946, 4294901760
        %v1203 = vand.u32 %v947, 4294901760
        %v1204 = vand.u32 %v948, 4294901760
        %v1205 = vand.u32 %v949, 4294901760
        %v1206 = vand.u32 %v950, 4294901760
        %v1207 = vand.u32 %v951, 4294901760
        %v1208 = vand.u32 %v952, 4294901760
        %v1209 = vand.u32 %v953, 4294901760
        %v1210 = vand.u32 %v954, 4294901760
        %v1211 = vand.u32 %v955, 4294901760
        %v1212 = vand.u32 %v956, 4294901760
        %v1213 = vand.u32 %v957, 4294901760
        %v1214 = vand.u32 %v958, 4294901760
        %v1215 = vand.u32 %v959, 4294901760
        %v1216 = vand.u32 %v960, 4294901760
        %v1217 = vand.u32 %v961, 4294901760
        %v1218 = vand.u32 %v962, 4294901760
        %v1219 = vand.u32 %v963, 4294901760
        %v1220 = vand.u32 %v964, 4294901760
        %v1221 = vand.u32 %v965, 4294901760
        %v1222 = vand.u32 %v966, 4294901760
        %v1223 = vand.u32 %v967, 4294901760
        %v1224 = vand.u32 %v968, 4294901760
        %v1225 = vand.u32 %v969, 4294901760
        %v1226 = vand.u32 %v970, 4294901760
        %v1227 = vand.u32 %v971, 4294901760
        %v1228 = vand.u32 %v972, 4294901760
        %v1229 = vand.u32 %v973, 4294901760
        %v1230 = vand.u32 %v974, 4294901760
        %v1231 = vand.u32 %v975, 4294901760
        %v1232 = vand.u32 %v976, 4294901760
        %v1233 = vand.u32 %v977, 4294901760
        %v1234 = vand.u32 %v978, 4294901760
        %v1235 = vand.u32 %v979, 4294901760
        %v1236 = vand.u32 %v980, 4294901760
        %v1237 = vand.u32 %v981, 4294901760
        %v1238 = vand.u32 %v982, 4294901760
        %v1239 = vand.u32 %v983, 4294901760
        %v1240 = vand.u32 %v984, 4294901760
        %v1241 = vand.u32 %v985, 4294901760
        %v1242 = vand.u32 %v986, 4294901760
        %v1243 = vand.u32 %v987, 4294901760
        %v1244 = vand.u32 %v988, 4294901760
        %v1245 = vand.u32 %v989, 4294901760
        %v1246 = vand.u32 %v990, 4294901760
        %v1247 = vand.u32 %v991, 4294901760
        %v1248 = vand.u32 %v992, 4294901760
        %v1249 = vand.u32 %v993, 4294901760
        %v1250 = vand.u32 %v994, 4294901760
        %v1251 = vand.u32 %v995, 4294901760
        %v1252 = vand.u32 %v996, 4294901760
        %v1253 = vand.u32 %v997, 4294901760
        %v1254 = vand.u32 %v998, 4294901760
        %v1255 = vand.u32 %v999, 4294901760
        %v1256 = vand.u32 %v1000, 4294901760
        %v1257 = vand.u32 %v1001, 4294901760
        %v1258 = vand.u32 %v1002, 4294901760
        %v1259 = vand.u32 %v1003, 4294901760
        %v1260 = vand.u32 %v1004, 4294901760
        %v1261 = vand.u32 %v1005, 4294901760
        %v1262 = vand.u32 %v1006, 4294901760
        %v1263 = vand.u32 %v1007, 4294901760
        %v1264 = vand.u32 %v1008, 4294901760
        %v1265 = vand.u32 %v1009, 4294901760
        %v1266 = vand.u32 %v1010, 4294901760
        %v1267 = vand.u32 %v1011, 4294901760
        %v1268 = vand.u32 %v1012, 4294901760
        %v1269 = vand.u32 %v1013, 4294901760
        %v1270 = vand.u32 %v1014, 4294901760
        %v1271 = vand.u32 %v1015, 4294901760
        %v1272 = vand.u32 %v1016, 4294901760
        %v1273 = vand.u32 %v1017, 4294901760
        %v1274 = vand.u32 %v1018, 4294901760
        %v1275 = vand.u32 %v1019, 4294901760
        %v1276 = vand.u32 %v1020, 4294901760
        %v1277 = vand.u32 %v1021, 4294901760
        %v1278 = vand.u32 %v1022, 4294901760
        %v1279 = vand.u32 %v1023, 4294901760
        %v1280 = vand.u32 %v1024, 4294901760
        %v1281 = vand.u32 %v1025, 4294901760
        %v1282 = vand.u32 %v1026, 4294901760
        %v1283 = vand.u32 %v1027, 4294901760
        %v1284 = vand.u32 %v1028, 4294901760
        %v1285 = vand.u32 %v1029, 4294901760
        %v1286 = vand.u32 %v1030, 4294901760
        %v1287 = vand.u32 %v1031, 4294901760
        %v1288 = vand.u32 %v1032, 4294901760
        %v1289 = vand.u32 %v1033, 4294901760
        %v1290 = vand.u32 %v1034, 4294901760
        %v1291 = vand.u32 %v1035, 4294901760
        %v1292 = vand.u32 %v1036, 4294901760
        %v1293 = vand.u32 %v1037, 4294901760
        %v1294 = vand.u32 %v1038, 4294901760
        %v1295 = vand.u32 %v1039, 4294901760
        %v1296 = vand.u32 %v1040, 4294901760
        %v1297 = vand.u32 %v1041, 4294901760
        %v1298 = vand.u32 %v1042, 4294901760
        %v1427 = vsub.f32 %v915, %v1171
        %v1428 = vsub.f32 %v916, %v1172
        %v1429 = vsub.f32 %v917, %v1173
        %v1430 = vsub.f32 %v918, %v1174
        %v1431 = vsub.f32 %v919, %v1175
        %v1432 = vsub.f32 %v920, %v1176
        %v1433 = vsub.f32 %v921, %v1177
        %v1434 = vsub.f32 %v922, %v1178
        %v1435 = vsub.f32 %v923, %v1179
        %v1436 = vsub.f32 %v924, %v1180
        %v1437 = vsub.f32 %v925, %v1181
        %v1438 = vsub.f32 %v926, %v1182
        %v1439 = vsub.f32 %v927, %v1183
        %v1440 = vsub.f32 %v928, %v1184
        %v1441 = vsub.f32 %v929, %v1185
        %v1442 = vsub.f32 %v930, %v1186
        %v1443 = vsub.f32 %v931, %v1187
        %v1444 = vsub.f32 %v932, %v1188
        %v1445 = vsub.f32 %v933, %v1189
        %v1446 = vsub.f32 %v934, %v1190
        %v1447 = vsub.f32 %v935, %v1191
        %v1448 = vsub.f32 %v936, %v1192
        %v1449 = vsub.f32 %v937, %v1193
        %v1450 = vsub.f32 %v938, %v1194
        %v1451 = vsub.f32 %v939, %v1195
        %v1452 = vsub.f32 %v940, %v1196
        %v1453 = vsub.f32 %v941, %v1197
        %v1454 = vsub.f32 %v942, %v1198
        %v1455 = vsub.f32 %v943, %v1199
        %v1456 = vsub.f32 %v944, %v1200
        %v1457 = vsub.f32 %v945, %v1201
        %v1458 = vsub.f32 %v946, %v1202
        %v1459 = vsub.f32 %v947, %v1203
        %v1460 = vsub.f32 %v948, %v1204
        %v1461 = vsub.f32 %v949, %v1205
        %v1462 = vsub.f32 %v950, %v1206
        %v1463 = vsub.f32 %v951, %v1207
        %v1464 = vsub.f32 %v952, %v1208
        %v1465 = vsub.f32 %v953, %v1209
        %v1466 = vsub.f32 %v954, %v1210
        %v1467 = vsub.f32 %v955, %v1211
        %v1468 = vsub.f32 %v956, %v1212
        %v1469 = vsub.f32 %v957, %v1213
        %v1470 = vsub.f32 %v958, %v1214
        %v1471 = vsub.f32 %v959, %v1215
        %v1472 = vsub.f32 %v960, %v1216
        %v1473 = vsub.f32 %v961, %v1217
        %v1474 = vsub.f32 %v962, %v1218
        %v1475 = vsub.f32 %v963, %v1219
        %v1476 = vsub.f32 %v964, %v1220
        %v1477 = vsub.f32 %v965, %v1221
        %v1478 = vsub.f32 %v966, %v1222
        %v1479 = vsub.f32 %v967, %v1223
        %v1480 = vsub.f32 %v968, %v1224
        %v1481 = vsub.f32 %v969, %v1225
        %v1482 = vsub.f32 %v970, %v1226
        %v1483 = vsub.f32 %v971, %v1227
        %v1484 = vsub.f32 %v972, %v1228
        %v1485 = vsub.f32 %v973, %v1229
        %v1486 = vsub.f32 %v974, %v1230
        %v1487 = vsub.f32 %v975, %v1231
        %v1488 = vsub.f32 %v976, %v1232
        %v1489 = vsub.f32 %v977, %v1233
        %v1490 = vsub.f32 %v978, %v1234
        %v1491 = vsub.f32 %v979, %v1235
        %v1492 = vsub.f32 %v980, %v1236
        %v1493 = vsub.f32 %v981, %v1237
        %v1494 = vsub.f32 %v982, %v1238
        %v1495 = vsub.f32 %v983, %v1239
        %v1496 = vsub.f32 %v984, %v1240
        %v1497 = vsub.f32 %v985, %v1241
        %v1498 = vsub.f32 %v986, %v1242
        %v1499 = vsub.f32 %v987, %v1243
        %v1500 = vsub.f32 %v988, %v1244
        %v1501 = vsub.f32 %v989, %v1245
        %v1502 = vsub.f32 %v990, %v1246
        %v1503 = vsub.f32 %v991, %v1247
        %v1504 = vsub.f32 %v992, %v1248
        %v1505 = vsub.f32 %v993, %v1249
        %v1506 = vsub.f32 %v994, %v1250
        %v1507 = vsub.f32 %v995, %v1251
        %v1508 = vsub.f32 %v996, %v1252
        %v1509 = vsub.f32 %v997, %v1253
        %v1510 = vsub.f32 %v998, %v1254
        %v1511 = vsub.f32 %v999, %v1255
        %v1512 = vsub.f32 %v1000, %v1256
        %v1513 = vsub.f32 %v1001, %v1257
        %v1514 = vsub.f32 %v1002, %v1258
        %v1515 = vsub.f32 %v1003, %v1259
        %v1516 = vsub.f32 %v1004, %v1260
        %v1517 = vsub.f32 %v1005, %v1261
        %v1518 = vsub.f32 %v1006, %v1262
        %v1519 = vsub.f32 %v1007, %v1263
        %v1520 = vsub.f32 %v1008, %v1264
        %v1521 = vsub.f32 %v1009, %v1265
        %v1522 = vsub.f32 %v1010, %v1266
        %v1523 = vsub.f32 %v1011, %v1267
        %v1524 = vsub.f32 %v1012, %v1268
        %v1525 = vsub.f32 %v1013, %v1269
        %v1526 = vsub.f32 %v1014, %v1270
        %v1527 = vsub.f32 %v1015, %v1271
        %v1528 = vsub.f32 %v1016, %v1272
        %v1529 = vsub.f32 %v1017, %v1273
        %v1530 = vsub.f32 %v1018, %v1274
        %v1531 = vsub.f32 %v1019, %v1275
        %v1532 = vsub.f32 %v1020, %v1276
        %v1533 = vsub.f32 %v1021, %v1277
        %v1534 = vsub.f32 %v1022, %v1278
        %v1535 = vsub.f32 %v1023, %v1279
        %v1536 = vsub.f32 %v1024, %v1280
        %v1537 = vsub.f32 %v1025, %v1281
        %v1538 = vsub.f32 %v1026, %v1282
        %v1539 = vsub.f32 %v1027, %v1283
        %v1540 = vsub.f32 %v1028, %v1284
        %v1541 = vsub.f32 %v1029, %v1285
        %v1542 = vsub.f32 %v1030, %v1286
        %v1543 = vsub.f32 %v1031, %v1287
        %v1544 = vsub.f32 %v1032, %v1288
        %v1545 = vsub.f32 %v1033, %v1289
        %v1546 = vsub.f32 %v1034, %v1290
        %v1547 = vsub.f32 %v1035, %v1291
        %v1548 = vsub.f32 %v1036, %v1292
        %v1549 = vsub.f32 %v1037, %v1293
        %v1550 = vsub.f32 %v1038, %v1294
        %v1551 = vsub.f32 %v1039, %v1295
        %v1552 = vsub.f32 %v1040, %v1296
        %v1553 = vsub.f32 %v1041, %v1297
        %v1554 = vsub.f32 %v1042, %v1298
        %v1555 = vpack.c.bf16 %v663, %v659
        %v1556 = vpack.c.bf16 %v664, %v660
        %v1557 = vpack.c.bf16 %v665, %v661
        %v1558 = vpack.c.bf16 %v666, %v662
        %v1559 = vpack.c.bf16 %v671, %v667
        %v1560 = vpack.c.bf16 %v672, %v668
        %v1561 = vpack.c.bf16 %v673, %v669
        %v1562 = vpack.c.bf16 %v674, %v670
        %v1563 = vpack.c.bf16 %v679, %v675
        %v1564 = vpack.c.bf16 %v680, %v676
        %v1565 = vpack.c.bf16 %v681, %v677
        %v1566 = vpack.c.bf16 %v682, %v678
        %v1567 = vpack.c.bf16 %v687, %v683
        %v1568 = vpack.c.bf16 %v688, %v684
        %v1569 = vpack.c.bf16 %v689, %v685
        %v1570 = vpack.c.bf16 %v690, %v686
        %v1571 = vpack.c.bf16 %v695, %v691
        %v1572 = vpack.c.bf16 %v696, %v692
        %v1573 = vpack.c.bf16 %v697, %v693
        %v1574 = vpack.c.bf16 %v698, %v694
        %v1575 = vpack.c.bf16 %v703, %v699
        %v1576 = vpack.c.bf16 %v704, %v700
        %v1577 = vpack.c.bf16 %v705, %v701
        %v1578 = vpack.c.bf16 %v706, %v702
        %v1579 = vpack.c.bf16 %v711, %v707
        %v1580 = vpack.c.bf16 %v712, %v708
        %v1581 = vpack.c.bf16 %v713, %v709
        %v1582 = vpack.c.bf16 %v714, %v710
        %v1583 = vpack.c.bf16 %v719, %v715
        %v1584 = vpack.c.bf16 %v720, %v716
        %v1585 = vpack.c.bf16 %v721, %v717
        %v1586 = vpack.c.bf16 %v722, %v718
        %v1587 = vpack.c.bf16 %v727, %v723
        %v1588 = vpack.c.bf16 %v728, %v724
        %v1589 = vpack.c.bf16 %v729, %v725
        %v1590 = vpack.c.bf16 %v730, %v726
        %v1591 = vpack.c.bf16 %v735, %v731
        %v1592 = vpack.c.bf16 %v736, %v732
        %v1593 = vpack.c.bf16 %v737, %v733
        %v1594 = vpack.c.bf16 %v738, %v734
        %v1595 = vpack.c.bf16 %v743, %v739
        %v1596 = vpack.c.bf16 %v744, %v740
        %v1597 = vpack.c.bf16 %v745, %v741
        %v1598 = vpack.c.bf16 %v746, %v742
        %v1599 = vpack.c.bf16 %v751, %v747
        %v1600 = vpack.c.bf16 %v752, %v748
        %v1601 = vpack.c.bf16 %v753, %v749
        %v1602 = vpack.c.bf16 %v754, %v750
        %v1603 = vpack.c.bf16 %v759, %v755
        %v1604 = vpack.c.bf16 %v760, %v756
        %v1605 = vpack.c.bf16 %v761, %v757
        %v1606 = vpack.c.bf16 %v762, %v758
        %v1607 = vpack.c.bf16 %v767, %v763
        %v1608 = vpack.c.bf16 %v768, %v764
        %v1609 = vpack.c.bf16 %v769, %v765
        %v1610 = vpack.c.bf16 %v770, %v766
        %v1611 = vpack.c.bf16 %v775, %v771
        %v1612 = vpack.c.bf16 %v776, %v772
        %v1613 = vpack.c.bf16 %v777, %v773
        %v1614 = vpack.c.bf16 %v778, %v774
        %v1615 = vpack.c.bf16 %v783, %v779
        %v1616 = vpack.c.bf16 %v784, %v780
        %v1617 = vpack.c.bf16 %v785, %v781
        %v1618 = vpack.c.bf16 %v786, %v782
        %v1619 = vpack.c.bf16 %v1175, %v1171
        %v1620 = vpack.c.bf16 %v1176, %v1172
        %v1621 = vpack.c.bf16 %v1177, %v1173
        %v1622 = vpack.c.bf16 %v1178, %v1174
        %v1623 = vpack.c.bf16 %v1183, %v1179
        %v1624 = vpack.c.bf16 %v1184, %v1180
        %v1625 = vpack.c.bf16 %v1185, %v1181
        %v1626 = vpack.c.bf16 %v1186, %v1182
        %v1627 = vpack.c.bf16 %v1191, %v1187
        %v1628 = vpack.c.bf16 %v1192, %v1188
        %v1629 = vpack.c.bf16 %v1193, %v1189
        %v1630 = vpack.c.bf16 %v1194, %v1190
        %v1631 = vpack.c.bf16 %v1199, %v1195
        %v1632 = vpack.c.bf16 %v1200, %v1196
        %v1633 = vpack.c.bf16 %v1201, %v1197
        %v1634 = vpack.c.bf16 %v1202, %v1198
        %v1635 = vpack.c.bf16 %v1207, %v1203
        %v1636 = vpack.c.bf16 %v1208, %v1204
        %v1637 = vpack.c.bf16 %v1209, %v1205
        %v1638 = vpack.c.bf16 %v1210, %v1206
        %v1639 = vpack.c.bf16 %v1215, %v1211
        %v1640 = vpack.c.bf16 %v1216, %v1212
        %v1641 = vpack.c.bf16 %v1217, %v1213
        %v1642 = vpack.c.bf16 %v1218, %v1214
        %v1643 = vpack.c.bf16 %v1223, %v1219
        %v1644 = vpack.c.bf16 %v1224, %v1220
        %v1645 = vpack.c.bf16 %v1225, %v1221
        %v1646 = vpack.c.bf16 %v1226, %v1222
        %v1647 = vpack.c.bf16 %v1231, %v1227
        %v1648 = vpack.c.bf16 %v1232, %v1228
        %v1649 = vpack.c.bf16 %v1233, %v1229
        %v1650 = vpack.c.bf16 %v1234, %v1230
        %v1651 = vpack.c.bf16 %v1239, %v1235
        %v1652 = vpack.c.bf16 %v1240, %v1236
        %v1653 = vpack.c.bf16 %v1241, %v1237
        %v1654 = vpack.c.bf16 %v1242, %v1238
        %v1655 = vpack.c.bf16 %v1247, %v1243
        %v1656 = vpack.c.bf16 %v1248, %v1244
        %v1657 = vpack.c.bf16 %v1249, %v1245
        %v1658 = vpack.c.bf16 %v1250, %v1246
        %v1659 = vpack.c.bf16 %v1255, %v1251
        %v1660 = vpack.c.bf16 %v1256, %v1252
        %v1661 = vpack.c.bf16 %v1257, %v1253
        %v1662 = vpack.c.bf16 %v1258, %v1254
        %v1663 = vpack.c.bf16 %v1263, %v1259
        %v1664 = vpack.c.bf16 %v1264, %v1260
        %v1665 = vpack.c.bf16 %v1265, %v1261
        %v1666 = vpack.c.bf16 %v1266, %v1262
        %v1667 = vpack.c.bf16 %v1271, %v1267
        %v1668 = vpack.c.bf16 %v1272, %v1268
        %v1669 = vpack.c.bf16 %v1273, %v1269
        %v1670 = vpack.c.bf16 %v1274, %v1270
        %v1671 = vpack.c.bf16 %v1279, %v1275
        %v1672 = vpack.c.bf16 %v1280, %v1276
        %v1673 = vpack.c.bf16 %v1281, %v1277
        %v1674 = vpack.c.bf16 %v1282, %v1278
        %v1675 = vpack.c.bf16 %v1287, %v1283
        %v1676 = vpack.c.bf16 %v1288, %v1284
        %v1677 = vpack.c.bf16 %v1289, %v1285
        %v1678 = vpack.c.bf16 %v1290, %v1286
        %v1679 = vpack.c.bf16 %v1295, %v1291
        %v1680 = vpack.c.bf16 %v1296, %v1292
        %v1681 = vpack.c.bf16 %v1297, %v1293
        %v1682 = vpack.c.bf16 %v1298, %v1294
        %v1683 = vpack.c.bf16 %v1431, %v1427
        %v1684 = vpack.c.bf16 %v1432, %v1428
        %v1685 = vpack.c.bf16 %v1433, %v1429
        %v1686 = vpack.c.bf16 %v1434, %v1430
        %v1687 = vpack.c.bf16 %v1439, %v1435
        %v1688 = vpack.c.bf16 %v1440, %v1436
        %v1689 = vpack.c.bf16 %v1441, %v1437
        %v1690 = vpack.c.bf16 %v1442, %v1438
        %v1691 = vpack.c.bf16 %v1447, %v1443
        %v1692 = vpack.c.bf16 %v1448, %v1444
        %v1693 = vpack.c.bf16 %v1449, %v1445
        %v1694 = vpack.c.bf16 %v1450, %v1446
        %v1695 = vpack.c.bf16 %v1455, %v1451
        %v1696 = vpack.c.bf16 %v1456, %v1452
        %v1697 = vpack.c.bf16 %v1457, %v1453
        %v1698 = vpack.c.bf16 %v1458, %v1454
        %v1699 = vpack.c.bf16 %v1463, %v1459
        %v1700 = vpack.c.bf16 %v1464, %v1460
        %v1701 = vpack.c.bf16 %v1465, %v1461
        %v1702 = vpack.c.bf16 %v1466, %v1462
        %v1703 = vpack.c.bf16 %v1471, %v1467
        %v1704 = vpack.c.bf16 %v1472, %v1468
        %v1705 = vpack.c.bf16 %v1473, %v1469
        %v1706 = vpack.c.bf16 %v1474, %v1470
        %v1707 = vpack.c.bf16 %v1479, %v1475
        %v1708 = vpack.c.bf16 %v1480, %v1476
        %v1709 = vpack.c.bf16 %v1481, %v1477
        %v1710 = vpack.c.bf16 %v1482, %v1478
        %v1711 = vpack.c.bf16 %v1487, %v1483
        %v1712 = vpack.c.bf16 %v1488, %v1484
        %v1713 = vpack.c.bf16 %v1489, %v1485
        %v1714 = vpack.c.bf16 %v1490, %v1486
        %v1715 = vpack.c.bf16 %v1495, %v1491
        %v1716 = vpack.c.bf16 %v1496, %v1492
        %v1717 = vpack.c.bf16 %v1497, %v1493
        %v1718 = vpack.c.bf16 %v1498, %v1494
        %v1719 = vpack.c.bf16 %v1503, %v1499
        %v1720 = vpack.c.bf16 %v1504, %v1500
        %v1721 = vpack.c.bf16 %v1505, %v1501
        %v1722 = vpack.c.bf16 %v1506, %v1502
        %v1723 = vpack.c.bf16 %v1511, %v1507
        %v1724 = vpack.c.bf16 %v1512, %v1508
        %v1725 = vpack.c.bf16 %v1513, %v1509
        %v1726 = vpack.c.bf16 %v1514, %v1510
        %v1727 = vpack.c.bf16 %v1519, %v1515
        %v1728 = vpack.c.bf16 %v1520, %v1516
        %v1729 = vpack.c.bf16 %v1521, %v1517
        %v1730 = vpack.c.bf16 %v1522, %v1518
        %v1731 = vpack.c.bf16 %v1527, %v1523
        %v1732 = vpack.c.bf16 %v1528, %v1524
        %v1733 = vpack.c.bf16 %v1529, %v1525
        %v1734 = vpack.c.bf16 %v1530, %v1526
        %v1735 = vpack.c.bf16 %v1535, %v1531
        %v1736 = vpack.c.bf16 %v1536, %v1532
        %v1737 = vpack.c.bf16 %v1537, %v1533
        %v1738 = vpack.c.bf16 %v1538, %v1534
        %v1739 = vpack.c.bf16 %v1543, %v1539
        %v1740 = vpack.c.bf16 %v1544, %v1540
        %v1741 = vpack.c.bf16 %v1545, %v1541
        %v1742 = vpack.c.bf16 %v1546, %v1542
        %v1743 = vpack.c.bf16 %v1551, %v1547
        %v1744 = vpack.c.bf16 %v1552, %v1548
        %v1745 = vpack.c.bf16 %v1553, %v1549
        %v1746 = vpack.c.bf16 %v1554, %v1550
        %v1871 = vand.u32 %v407, 4294901760
        %v1872 = vand.u32 %v408, 4294901760
        %v1873 = vand.u32 %v409, 4294901760
        %v1874 = vand.u32 %v410, 4294901760
        %v1875 = vand.u32 %v411, 4294901760
        %v1876 = vand.u32 %v412, 4294901760
        %v1877 = vand.u32 %v413, 4294901760
        %v1878 = vand.u32 %v414, 4294901760
        %v1879 = vand.u32 %v415, 4294901760
        %v1880 = vand.u32 %v416, 4294901760
        %v1881 = vand.u32 %v417, 4294901760
        %v1882 = vand.u32 %v418, 4294901760
        %v1883 = vand.u32 %v419, 4294901760
        %v1884 = vand.u32 %v420, 4294901760
        %v1885 = vand.u32 %v421, 4294901760
        %v1886 = vand.u32 %v422, 4294901760
        %v1887 = vand.u32 %v423, 4294901760
        %v1888 = vand.u32 %v424, 4294901760
        %v1889 = vand.u32 %v425, 4294901760
        %v1890 = vand.u32 %v426, 4294901760
        %v1891 = vand.u32 %v427, 4294901760
        %v1892 = vand.u32 %v428, 4294901760
        %v1893 = vand.u32 %v429, 4294901760
        %v1894 = vand.u32 %v430, 4294901760
        %v1895 = vand.u32 %v431, 4294901760
        %v1896 = vand.u32 %v432, 4294901760
        %v1897 = vand.u32 %v433, 4294901760
        %v1898 = vand.u32 %v434, 4294901760
        %v1899 = vand.u32 %v435, 4294901760
        %v1900 = vand.u32 %v436, 4294901760
        %v1901 = vand.u32 %v437, 4294901760
        %v1902 = vand.u32 %v438, 4294901760
        %v1903 = vand.u32 %v439, 4294901760
        %v1904 = vand.u32 %v440, 4294901760
        %v1905 = vand.u32 %v441, 4294901760
        %v1906 = vand.u32 %v442, 4294901760
        %v1907 = vand.u32 %v443, 4294901760
        %v1908 = vand.u32 %v444, 4294901760
        %v1909 = vand.u32 %v445, 4294901760
        %v1910 = vand.u32 %v446, 4294901760
        %v1911 = vand.u32 %v447, 4294901760
        %v1912 = vand.u32 %v448, 4294901760
        %v1913 = vand.u32 %v449, 4294901760
        %v1914 = vand.u32 %v450, 4294901760
        %v1915 = vand.u32 %v451, 4294901760
        %v1916 = vand.u32 %v452, 4294901760
        %v1917 = vand.u32 %v453, 4294901760
        %v1918 = vand.u32 %v454, 4294901760
        %v1919 = vand.u32 %v455, 4294901760
        %v1920 = vand.u32 %v456, 4294901760
        %v1921 = vand.u32 %v457, 4294901760
        %v1922 = vand.u32 %v458, 4294901760
        %v1923 = vand.u32 %v459, 4294901760
        %v1924 = vand.u32 %v460, 4294901760
        %v1925 = vand.u32 %v461, 4294901760
        %v1926 = vand.u32 %v462, 4294901760
        %v1927 = vand.u32 %v463, 4294901760
        %v1928 = vand.u32 %v464, 4294901760
        %v1929 = vand.u32 %v465, 4294901760
        %v1930 = vand.u32 %v466, 4294901760
        %v1931 = vand.u32 %v467, 4294901760
        %v1932 = vand.u32 %v468, 4294901760
        %v1933 = vand.u32 %v469, 4294901760
        %v1934 = vand.u32 %v470, 4294901760
        %v1935 = vand.u32 %v471, 4294901760
        %v1936 = vand.u32 %v472, 4294901760
        %v1937 = vand.u32 %v473, 4294901760
        %v1938 = vand.u32 %v474, 4294901760
        %v1939 = vand.u32 %v475, 4294901760
        %v1940 = vand.u32 %v476, 4294901760
        %v1941 = vand.u32 %v477, 4294901760
        %v1942 = vand.u32 %v478, 4294901760
        %v1943 = vand.u32 %v479, 4294901760
        %v1944 = vand.u32 %v480, 4294901760
        %v1945 = vand.u32 %v481, 4294901760
        %v1946 = vand.u32 %v482, 4294901760
        %v1947 = vand.u32 %v483, 4294901760
        %v1948 = vand.u32 %v484, 4294901760
        %v1949 = vand.u32 %v485, 4294901760
        %v1950 = vand.u32 %v486, 4294901760
        %v1951 = vand.u32 %v487, 4294901760
        %v1952 = vand.u32 %v488, 4294901760
        %v1953 = vand.u32 %v489, 4294901760
        %v1954 = vand.u32 %v490, 4294901760
        %v1955 = vand.u32 %v491, 4294901760
        %v1956 = vand.u32 %v492, 4294901760
        %v1957 = vand.u32 %v493, 4294901760
        %v1958 = vand.u32 %v494, 4294901760
        %v1959 = vand.u32 %v495, 4294901760
        %v1960 = vand.u32 %v496, 4294901760
        %v1961 = vand.u32 %v497, 4294901760
        %v1962 = vand.u32 %v498, 4294901760
        %v1963 = vand.u32 %v499, 4294901760
        %v1964 = vand.u32 %v500, 4294901760
        %v1965 = vand.u32 %v501, 4294901760
        %v1966 = vand.u32 %v502, 4294901760
        %v1967 = vand.u32 %v503, 4294901760
        %v1968 = vand.u32 %v504, 4294901760
        %v1969 = vand.u32 %v505, 4294901760
        %v1970 = vand.u32 %v506, 4294901760
        %v1971 = vand.u32 %v507, 4294901760
        %v1972 = vand.u32 %v508, 4294901760
        %v1973 = vand.u32 %v509, 4294901760
        %v1974 = vand.u32 %v510, 4294901760
        %v1975 = vand.u32 %v511, 4294901760
        %v1976 = vand.u32 %v512, 4294901760
        %v1977 = vand.u32 %v513, 4294901760
        %v1978 = vand.u32 %v514, 4294901760
        %v1979 = vand.u32 %v515, 4294901760
        %v1980 = vand.u32 %v516, 4294901760
        %v1981 = vand.u32 %v517, 4294901760
        %v1982 = vand.u32 %v518, 4294901760
        %v1983 = vand.u32 %v519, 4294901760
        %v1984 = vand.u32 %v520, 4294901760
        %v1985 = vand.u32 %v521, 4294901760
        %v1986 = vand.u32 %v522, 4294901760
        %v1987 = vand.u32 %v523, 4294901760
        %v1988 = vand.u32 %v524, 4294901760
        %v1989 = vand.u32 %v525, 4294901760
        %v1990 = vand.u32 %v526, 4294901760
        %v1991 = vand.u32 %v527, 4294901760
        %v1992 = vand.u32 %v528, 4294901760
        %v1993 = vand.u32 %v529, 4294901760
        %v1994 = vand.u32 %v530, 4294901760
        %v2119 = vsub.f32 %v407, %v1871
        %v2120 = vsub.f32 %v408, %v1872
        %v2121 = vsub.f32 %v409, %v1873
        %v2122 = vsub.f32 %v410, %v1874
        %v2123 = vsub.f32 %v411, %v1875
        %v2124 = vsub.f32 %v412, %v1876
        %v2125 = vsub.f32 %v413, %v1877
        %v2126 = vsub.f32 %v414, %v1878
        %v2127 = vsub.f32 %v415, %v1879
        %v2128 = vsub.f32 %v416, %v1880
        %v2129 = vsub.f32 %v417, %v1881
        %v2130 = vsub.f32 %v418, %v1882
        %v2131 = vsub.f32 %v419, %v1883
        %v2132 = vsub.f32 %v420, %v1884
        %v2133 = vsub.f32 %v421, %v1885
        %v2134 = vsub.f32 %v422, %v1886
        %v2135 = vsub.f32 %v423, %v1887
        %v2136 = vsub.f32 %v424, %v1888
        %v2137 = vsub.f32 %v425, %v1889
        %v2138 = vsub.f32 %v426, %v1890
        %v2139 = vsub.f32 %v427, %v1891
        %v2140 = vsub.f32 %v428, %v1892
        %v2141 = vsub.f32 %v429, %v1893
        %v2142 = vsub.f32 %v430, %v1894
        %v2143 = vsub.f32 %v431, %v1895
        %v2144 = vsub.f32 %v432, %v1896
        %v2145 = vsub.f32 %v433, %v1897
        %v2146 = vsub.f32 %v434, %v1898
        %v2147 = vsub.f32 %v435, %v1899
        %v2148 = vsub.f32 %v436, %v1900
        %v2149 = vsub.f32 %v437, %v1901
        %v2150 = vsub.f32 %v438, %v1902
        %v2151 = vsub.f32 %v439, %v1903
        %v2152 = vsub.f32 %v440, %v1904
        %v2153 = vsub.f32 %v441, %v1905
        %v2154 = vsub.f32 %v442, %v1906
        %v2155 = vsub.f32 %v443, %v1907
        %v2156 = vsub.f32 %v444, %v1908
        %v2157 = vsub.f32 %v445, %v1909
        %v2158 = vsub.f32 %v446, %v1910
        %v2159 = vsub.f32 %v447, %v1911
        %v2160 = vsub.f32 %v448, %v1912
        %v2161 = vsub.f32 %v449, %v1913
        %v2162 = vsub.f32 %v450, %v1914
        %v2163 = vsub.f32 %v451, %v1915
        %v2164 = vsub.f32 %v452, %v1916
        %v2165 = vsub.f32 %v453, %v1917
        %v2166 = vsub.f32 %v454, %v1918
        %v2167 = vsub.f32 %v455, %v1919
        %v2168 = vsub.f32 %v456, %v1920
        %v2169 = vsub.f32 %v457, %v1921
        %v2170 = vsub.f32 %v458, %v1922
        %v2171 = vsub.f32 %v459, %v1923
        %v2172 = vsub.f32 %v460, %v1924
        %v2173 = vsub.f32 %v461, %v1925
        %v2174 = vsub.f32 %v462, %v1926
        %v2175 = vsub.f32 %v463, %v1927
        %v2176 = vsub.f32 %v464, %v1928
        %v2177 = vsub.f32 %v465, %v1929
        %v2178 = vsub.f32 %v466, %v1930
        %v2179 = vsub.f32 %v467, %v1931
        %v2180 = vsub.f32 %v468, %v1932
        %v2181 = vsub.f32 %v469, %v1933
        %v2182 = vsub.f32 %v470, %v1934
        %v2183 = vsub.f32 %v471, %v1935
        %v2184 = vsub.f32 %v472, %v1936
        %v2185 = vsub.f32 %v473, %v1937
        %v2186 = vsub.f32 %v474, %v1938
        %v2187 = vsub.f32 %v475, %v1939
        %v2188 = vsub.f32 %v476, %v1940
        %v2189 = vsub.f32 %v477, %v1941
        %v2190 = vsub.f32 %v478, %v1942
        %v2191 = vsub.f32 %v479, %v1943
        %v2192 = vsub.f32 %v480, %v1944
        %v2193 = vsub.f32 %v481, %v1945
        %v2194 = vsub.f32 %v482, %v1946
        %v2195 = vsub.f32 %v483, %v1947
        %v2196 = vsub.f32 %v484, %v1948
        %v2197 = vsub.f32 %v485, %v1949
        %v2198 = vsub.f32 %v486, %v1950
        %v2199 = vsub.f32 %v487, %v1951
        %v2200 = vsub.f32 %v488, %v1952
        %v2201 = vsub.f32 %v489, %v1953
        %v2202 = vsub.f32 %v490, %v1954
        %v2203 = vsub.f32 %v491, %v1955
        %v2204 = vsub.f32 %v492, %v1956
        %v2205 = vsub.f32 %v493, %v1957
        %v2206 = vsub.f32 %v494, %v1958
        %v2207 = vsub.f32 %v495, %v1959
        %v2208 = vsub.f32 %v496, %v1960
        %v2209 = vsub.f32 %v497, %v1961
        %v2210 = vsub.f32 %v498, %v1962
        %v2211 = vsub.f32 %v499, %v1963
        %v2212 = vsub.f32 %v500, %v1964
        %v2213 = vsub.f32 %v501, %v1965
        %v2214 = vsub.f32 %v502, %v1966
        %v2215 = vsub.f32 %v503, %v1967
        %v2216 = vsub.f32 %v504, %v1968
        %v2217 = vsub.f32 %v505, %v1969
        %v2218 = vsub.f32 %v506, %v1970
        %v2219 = vsub.f32 %v507, %v1971
        %v2220 = vsub.f32 %v508, %v1972
        %v2221 = vsub.f32 %v509, %v1973
        %v2222 = vsub.f32 %v510, %v1974
        %v2223 = vsub.f32 %v511, %v1975
        %v2224 = vsub.f32 %v512, %v1976
        %v2225 = vsub.f32 %v513, %v1977
        %v2226 = vsub.f32 %v514, %v1978
        %v2227 = vsub.f32 %v515, %v1979
        %v2228 = vsub.f32 %v516, %v1980
        %v2229 = vsub.f32 %v517, %v1981
        %v2230 = vsub.f32 %v518, %v1982
        %v2231 = vsub.f32 %v519, %v1983
        %v2232 = vsub.f32 %v520, %v1984
        %v2233 = vsub.f32 %v521, %v1985
        %v2234 = vsub.f32 %v522, %v1986
        %v2235 = vsub.f32 %v523, %v1987
        %v2236 = vsub.f32 %v524, %v1988
        %v2237 = vsub.f32 %v525, %v1989
        %v2238 = vsub.f32 %v526, %v1990
        %v2239 = vsub.f32 %v527, %v1991
        %v2240 = vsub.f32 %v528, %v1992
        %v2241 = vsub.f32 %v529, %v1993
        %v2242 = vsub.f32 %v530, %v1994
        %v2367 = vand.u32 %v2119, 4294901760
        %v2368 = vand.u32 %v2120, 4294901760
        %v2369 = vand.u32 %v2121, 4294901760
        %v2370 = vand.u32 %v2122, 4294901760
        %v2371 = vand.u32 %v2123, 4294901760
        %v2372 = vand.u32 %v2124, 4294901760
        %v2373 = vand.u32 %v2125, 4294901760
        %v2374 = vand.u32 %v2126, 4294901760
        %v2375 = vand.u32 %v2127, 4294901760
        %v2376 = vand.u32 %v2128, 4294901760
        %v2377 = vand.u32 %v2129, 4294901760
        %v2378 = vand.u32 %v2130, 4294901760
        %v2379 = vand.u32 %v2131, 4294901760
        %v2380 = vand.u32 %v2132, 4294901760
        %v2381 = vand.u32 %v2133, 4294901760
        %v2382 = vand.u32 %v2134, 4294901760
        %v2383 = vand.u32 %v2135, 4294901760
        %v2384 = vand.u32 %v2136, 4294901760
        %v2385 = vand.u32 %v2137, 4294901760
        %v2386 = vand.u32 %v2138, 4294901760
        %v2387 = vand.u32 %v2139, 4294901760
        %v2388 = vand.u32 %v2140, 4294901760
        %v2389 = vand.u32 %v2141, 4294901760
        %v2390 = vand.u32 %v2142, 4294901760
        %v2391 = vand.u32 %v2143, 4294901760
        %v2392 = vand.u32 %v2144, 4294901760
        %v2393 = vand.u32 %v2145, 4294901760
        %v2394 = vand.u32 %v2146, 4294901760
        %v2395 = vand.u32 %v2147, 4294901760
        %v2396 = vand.u32 %v2148, 4294901760
        %v2397 = vand.u32 %v2149, 4294901760
        %v2398 = vand.u32 %v2150, 4294901760
        %v2399 = vand.u32 %v2151, 4294901760
        %v2400 = vand.u32 %v2152, 4294901760
        %v2401 = vand.u32 %v2153, 4294901760
        %v2402 = vand.u32 %v2154, 4294901760
        %v2403 = vand.u32 %v2155, 4294901760
        %v2404 = vand.u32 %v2156, 4294901760
        %v2405 = vand.u32 %v2157, 4294901760
        %v2406 = vand.u32 %v2158, 4294901760
        %v2407 = vand.u32 %v2159, 4294901760
        %v2408 = vand.u32 %v2160, 4294901760
        %v2409 = vand.u32 %v2161, 4294901760
        %v2410 = vand.u32 %v2162, 4294901760
        %v2411 = vand.u32 %v2163, 4294901760
        %v2412 = vand.u32 %v2164, 4294901760
        %v2413 = vand.u32 %v2165, 4294901760
        %v2414 = vand.u32 %v2166, 4294901760
        %v2415 = vand.u32 %v2167, 4294901760
        %v2416 = vand.u32 %v2168, 4294901760
        %v2417 = vand.u32 %v2169, 4294901760
        %v2418 = vand.u32 %v2170, 4294901760
        %v2419 = vand.u32 %v2171, 4294901760
        %v2420 = vand.u32 %v2172, 4294901760
        %v2421 = vand.u32 %v2173, 4294901760
        %v2422 = vand.u32 %v2174, 4294901760
        %v2423 = vand.u32 %v2175, 4294901760
        %v2424 = vand.u32 %v2176, 4294901760
        %v2425 = vand.u32 %v2177, 4294901760
        %v2426 = vand.u32 %v2178, 4294901760
        %v2427 = vand.u32 %v2179, 4294901760
        %v2428 = vand.u32 %v2180, 4294901760
        %v2429 = vand.u32 %v2181, 4294901760
        %v2430 = vand.u32 %v2182, 4294901760
        %v2431 = vand.u32 %v2183, 4294901760
        %v2432 = vand.u32 %v2184, 4294901760
        %v2433 = vand.u32 %v2185, 4294901760
        %v2434 = vand.u32 %v2186, 4294901760
        %v2435 = vand.u32 %v2187, 4294901760
        %v2436 = vand.u32 %v2188, 4294901760
        %v2437 = vand.u32 %v2189, 4294901760
        %v2438 = vand.u32 %v2190, 4294901760
        %v2439 = vand.u32 %v2191, 4294901760
        %v2440 = vand.u32 %v2192, 4294901760
        %v2441 = vand.u32 %v2193, 4294901760
        %v2442 = vand.u32 %v2194, 4294901760
        %v2443 = vand.u32 %v2195, 4294901760
        %v2444 = vand.u32 %v2196, 4294901760
        %v2445 = vand.u32 %v2197, 4294901760
        %v2446 = vand.u32 %v2198, 4294901760
        %v2447 = vand.u32 %v2199, 4294901760
        %v2448 = vand.u32 %v2200, 4294901760
        %v2449 = vand.u32 %v2201, 4294901760
        %v2450 = vand.u32 %v2202, 4294901760
        %v2451 = vand.u32 %v2203, 4294901760
        %v2452 = vand.u32 %v2204, 4294901760
        %v2453 = vand.u32 %v2205, 4294901760
        %v2454 = vand.u32 %v2206, 4294901760
        %v2455 = vand.u32 %v2207, 4294901760
        %v2456 = vand.u32 %v2208, 4294901760
        %v2457 = vand.u32 %v2209, 4294901760
        %v2458 = vand.u32 %v2210, 4294901760
        %v2459 = vand.u32 %v2211, 4294901760
        %v2460 = vand.u32 %v2212, 4294901760
        %v2461 = vand.u32 %v2213, 4294901760
        %v2462 = vand.u32 %v2214, 4294901760
        %v2463 = vand.u32 %v2215, 4294901760
        %v2464 = vand.u32 %v2216, 4294901760
        %v2465 = vand.u32 %v2217, 4294901760
        %v2466 = vand.u32 %v2218, 4294901760
        %v2467 = vand.u32 %v2219, 4294901760
        %v2468 = vand.u32 %v2220, 4294901760
        %v2469 = vand.u32 %v2221, 4294901760
        %v2470 = vand.u32 %v2222, 4294901760
        %v2471 = vand.u32 %v2223, 4294901760
        %v2472 = vand.u32 %v2224, 4294901760
        %v2473 = vand.u32 %v2225, 4294901760
        %v2474 = vand.u32 %v2226, 4294901760
        %v2475 = vand.u32 %v2227, 4294901760
        %v2476 = vand.u32 %v2228, 4294901760
        %v2477 = vand.u32 %v2229, 4294901760
        %v2478 = vand.u32 %v2230, 4294901760
        %v2479 = vand.u32 %v2231, 4294901760
        %v2480 = vand.u32 %v2232, 4294901760
        %v2481 = vand.u32 %v2233, 4294901760
        %v2482 = vand.u32 %v2234, 4294901760
        %v2483 = vand.u32 %v2235, 4294901760
        %v2484 = vand.u32 %v2236, 4294901760
        %v2485 = vand.u32 %v2237, 4294901760
        %v2486 = vand.u32 %v2238, 4294901760
        %v2487 = vand.u32 %v2239, 4294901760
        %v2488 = vand.u32 %v2240, 4294901760
        %v2489 = vand.u32 %v2241, 4294901760
        %v2490 = vand.u32 %v2242, 4294901760
        %v2615 = vsub.f32 %v2119, %v2367
        %v2616 = vsub.f32 %v2120, %v2368
        %v2617 = vsub.f32 %v2121, %v2369
        %v2618 = vsub.f32 %v2122, %v2370
        %v2619 = vsub.f32 %v2123, %v2371
        %v2620 = vsub.f32 %v2124, %v2372
        %v2621 = vsub.f32 %v2125, %v2373
        %v2622 = vsub.f32 %v2126, %v2374
        %v2623 = vsub.f32 %v2127, %v2375
        %v2624 = vsub.f32 %v2128, %v2376
        %v2625 = vsub.f32 %v2129, %v2377
        %v2626 = vsub.f32 %v2130, %v2378
        %v2627 = vsub.f32 %v2131, %v2379
        %v2628 = vsub.f32 %v2132, %v2380
        %v2629 = vsub.f32 %v2133, %v2381
        %v2630 = vsub.f32 %v2134, %v2382
        %v2631 = vsub.f32 %v2135, %v2383
        %v2632 = vsub.f32 %v2136, %v2384
        %v2633 = vsub.f32 %v2137, %v2385
        %v2634 = vsub.f32 %v2138, %v2386
        %v2635 = vsub.f32 %v2139, %v2387
        %v2636 = vsub.f32 %v2140, %v2388
        %v2637 = vsub.f32 %v2141, %v2389
        %v2638 = vsub.f32 %v2142, %v2390
        %v2639 = vsub.f32 %v2143, %v2391
        %v2640 = vsub.f32 %v2144, %v2392
        %v2641 = vsub.f32 %v2145, %v2393
        %v2642 = vsub.f32 %v2146, %v2394
        %v2643 = vsub.f32 %v2147, %v2395
        %v2644 = vsub.f32 %v2148, %v2396
        %v2645 = vsub.f32 %v2149, %v2397
        %v2646 = vsub.f32 %v2150, %v2398
        %v2647 = vsub.f32 %v2151, %v2399
        %v2648 = vsub.f32 %v2152, %v2400
        %v2649 = vsub.f32 %v2153, %v2401
        %v2650 = vsub.f32 %v2154, %v2402
        %v2651 = vsub.f32 %v2155, %v2403
        %v2652 = vsub.f32 %v2156, %v2404
        %v2653 = vsub.f32 %v2157, %v2405
        %v2654 = vsub.f32 %v2158, %v2406
        %v2655 = vsub.f32 %v2159, %v2407
        %v2656 = vsub.f32 %v2160, %v2408
        %v2657 = vsub.f32 %v2161, %v2409
        %v2658 = vsub.f32 %v2162, %v2410
        %v2659 = vsub.f32 %v2163, %v2411
        %v2660 = vsub.f32 %v2164, %v2412
        %v2661 = vsub.f32 %v2165, %v2413
        %v2662 = vsub.f32 %v2166, %v2414
        %v2663 = vsub.f32 %v2167, %v2415
        %v2664 = vsub.f32 %v2168, %v2416
        %v2665 = vsub.f32 %v2169, %v2417
        %v2666 = vsub.f32 %v2170, %v2418
        %v2667 = vsub.f32 %v2171, %v2419
        %v2668 = vsub.f32 %v2172, %v2420
        %v2669 = vsub.f32 %v2173, %v2421
        %v2670 = vsub.f32 %v2174, %v2422
        %v2671 = vsub.f32 %v2175, %v2423
        %v2672 = vsub.f32 %v2176, %v2424
        %v2673 = vsub.f32 %v2177, %v2425
        %v2674 = vsub.f32 %v2178, %v2426
        %v2675 = vsub.f32 %v2179, %v2427
        %v2676 = vsub.f32 %v2180, %v2428
        %v2677 = vsub.f32 %v2181, %v2429
        %v2678 = vsub.f32 %v2182, %v2430
        %v2679 = vsub.f32 %v2183, %v2431
        %v2680 = vsub.f32 %v2184, %v2432
        %v2681 = vsub.f32 %v2185, %v2433
        %v2682 = vsub.f32 %v2186, %v2434
        %v2683 = vsub.f32 %v2187, %v2435
        %v2684 = vsub.f32 %v2188, %v2436
        %v2685 = vsub.f32 %v2189, %v2437
        %v2686 = vsub.f32 %v2190, %v2438
        %v2687 = vsub.f32 %v2191, %v2439
        %v2688 = vsub.f32 %v2192, %v2440
        %v2689 = vsub.f32 %v2193, %v2441
        %v2690 = vsub.f32 %v2194, %v2442
        %v2691 = vsub.f32 %v2195, %v2443
        %v2692 = vsub.f32 %v2196, %v2444
        %v2693 = vsub.f32 %v2197, %v2445
        %v2694 = vsub.f32 %v2198, %v2446
        %v2695 = vsub.f32 %v2199, %v2447
        %v2696 = vsub.f32 %v2200, %v2448
        %v2697 = vsub.f32 %v2201, %v2449
        %v2698 = vsub.f32 %v2202, %v2450
        %v2699 = vsub.f32 %v2203, %v2451
        %v2700 = vsub.f32 %v2204, %v2452
        %v2701 = vsub.f32 %v2205, %v2453
        %v2702 = vsub.f32 %v2206, %v2454
        %v2703 = vsub.f32 %v2207, %v2455
        %v2704 = vsub.f32 %v2208, %v2456
        %v2705 = vsub.f32 %v2209, %v2457
        %v2706 = vsub.f32 %v2210, %v2458
        %v2707 = vsub.f32 %v2211, %v2459
        %v2708 = vsub.f32 %v2212, %v2460
        %v2709 = vsub.f32 %v2213, %v2461
        %v2710 = vsub.f32 %v2214, %v2462
        %v2711 = vsub.f32 %v2215, %v2463
        %v2712 = vsub.f32 %v2216, %v2464
        %v2713 = vsub.f32 %v2217, %v2465
        %v2714 = vsub.f32 %v2218, %v2466
        %v2715 = vsub.f32 %v2219, %v2467
        %v2716 = vsub.f32 %v2220, %v2468
        %v2717 = vsub.f32 %v2221, %v2469
        %v2718 = vsub.f32 %v2222, %v2470
        %v2719 = vsub.f32 %v2223, %v2471
        %v2720 = vsub.f32 %v2224, %v2472
        %v2721 = vsub.f32 %v2225, %v2473
        %v2722 = vsub.f32 %v2226, %v2474
        %v2723 = vsub.f32 %v2227, %v2475
        %v2724 = vsub.f32 %v2228, %v2476
        %v2725 = vsub.f32 %v2229, %v2477
        %v2726 = vsub.f32 %v2230, %v2478
        %v2727 = vsub.f32 %v2231, %v2479
        %v2728 = vsub.f32 %v2232, %v2480
        %v2729 = vsub.f32 %v2233, %v2481
        %v2730 = vsub.f32 %v2234, %v2482
        %v2731 = vsub.f32 %v2235, %v2483
        %v2732 = vsub.f32 %v2236, %v2484
        %v2733 = vsub.f32 %v2237, %v2485
        %v2734 = vsub.f32 %v2238, %v2486
        %v2735 = vsub.f32 %v2239, %v2487
        %v2736 = vsub.f32 %v2240, %v2488
        %v2737 = vsub.f32 %v2241, %v2489
        %v2738 = vsub.f32 %v2242, %v2490
        %v2739 = vpack.c.bf16 %v1871, %v783
        %v2740 = vpack.c.bf16 %v1872, %v784
        %v2741 = vpack.c.bf16 %v1873, %v785
        %v2742 = vpack.c.bf16 %v1874, %v786
        %v2743 = vpack.c.bf16 %v1879, %v1875
        %v2744 = vpack.c.bf16 %v1880, %v1876
        %v2745 = vpack.c.bf16 %v1881, %v1877
        %v2746 = vpack.c.bf16 %v1882, %v1878
        %v2747 = vpack.c.bf16 %v1887, %v1883
        %v2748 = vpack.c.bf16 %v1888, %v1884
        %v2749 = vpack.c.bf16 %v1889, %v1885
        %v2750 = vpack.c.bf16 %v1890, %v1886
        %v2751 = vpack.c.bf16 %v1895, %v1891
        %v2752 = vpack.c.bf16 %v1896, %v1892
        %v2753 = vpack.c.bf16 %v1897, %v1893
        %v2754 = vpack.c.bf16 %v1898, %v1894
        %v2755 = vpack.c.bf16 %v1903, %v1899
        %v2756 = vpack.c.bf16 %v1904, %v1900
        %v2757 = vpack.c.bf16 %v1905, %v1901
        %v2758 = vpack.c.bf16 %v1906, %v1902
        %v2759 = vpack.c.bf16 %v1911, %v1907
        %v2760 = vpack.c.bf16 %v1912, %v1908
        %v2761 = vpack.c.bf16 %v1913, %v1909
        %v2762 = vpack.c.bf16 %v1914, %v1910
        %v2763 = vpack.c.bf16 %v1919, %v1915
        %v2764 = vpack.c.bf16 %v1920, %v1916
        %v2765 = vpack.c.bf16 %v1921, %v1917
        %v2766 = vpack.c.bf16 %v1922, %v1918
        %v2767 = vpack.c.bf16 %v1927, %v1923
        %v2768 = vpack.c.bf16 %v1928, %v1924
        %v2769 = vpack.c.bf16 %v1929, %v1925
        %v2770 = vpack.c.bf16 %v1930, %v1926
        %v2771 = vpack.c.bf16 %v1935, %v1931
        %v2772 = vpack.c.bf16 %v1936, %v1932
        %v2773 = vpack.c.bf16 %v1937, %v1933
        %v2774 = vpack.c.bf16 %v1938, %v1934
        %v2775 = vpack.c.bf16 %v1943, %v1939
        %v2776 = vpack.c.bf16 %v1944, %v1940
        %v2777 = vpack.c.bf16 %v1945, %v1941
        %v2778 = vpack.c.bf16 %v1946, %v1942
        %v2779 = vpack.c.bf16 %v1951, %v1947
        %v2780 = vpack.c.bf16 %v1952, %v1948
        %v2781 = vpack.c.bf16 %v1953, %v1949
        %v2782 = vpack.c.bf16 %v1954, %v1950
        %v2783 = vpack.c.bf16 %v1959, %v1955
        %v2784 = vpack.c.bf16 %v1960, %v1956
        %v2785 = vpack.c.bf16 %v1961, %v1957
        %v2786 = vpack.c.bf16 %v1962, %v1958
        %v2787 = vpack.c.bf16 %v1967, %v1963
        %v2788 = vpack.c.bf16 %v1968, %v1964
        %v2789 = vpack.c.bf16 %v1969, %v1965
        %v2790 = vpack.c.bf16 %v1970, %v1966
        %v2791 = vpack.c.bf16 %v1975, %v1971
        %v2792 = vpack.c.bf16 %v1976, %v1972
        %v2793 = vpack.c.bf16 %v1977, %v1973
        %v2794 = vpack.c.bf16 %v1978, %v1974
        %v2795 = vpack.c.bf16 %v1983, %v1979
        %v2796 = vpack.c.bf16 %v1984, %v1980
        %v2797 = vpack.c.bf16 %v1985, %v1981
        %v2798 = vpack.c.bf16 %v1986, %v1982
        %v2799 = vpack.c.bf16 %v1991, %v1987
        %v2800 = vpack.c.bf16 %v1992, %v1988
        %v2801 = vpack.c.bf16 %v1993, %v1989
        %v2802 = vpack.c.bf16 %v1994, %v1990
        %v2803 = vpack.c.bf16 %v2367, %v1295
        %v2804 = vpack.c.bf16 %v2368, %v1296
        %v2805 = vpack.c.bf16 %v2369, %v1297
        %v2806 = vpack.c.bf16 %v2370, %v1298
        %v2807 = vpack.c.bf16 %v2375, %v2371
        %v2808 = vpack.c.bf16 %v2376, %v2372
        %v2809 = vpack.c.bf16 %v2377, %v2373
        %v2810 = vpack.c.bf16 %v2378, %v2374
        %v2811 = vpack.c.bf16 %v2383, %v2379
        %v2812 = vpack.c.bf16 %v2384, %v2380
        %v2813 = vpack.c.bf16 %v2385, %v2381
        %v2814 = vpack.c.bf16 %v2386, %v2382
        %v2815 = vpack.c.bf16 %v2391, %v2387
        %v2816 = vpack.c.bf16 %v2392, %v2388
        %v2817 = vpack.c.bf16 %v2393, %v2389
        %v2818 = vpack.c.bf16 %v2394, %v2390
        %v2819 = vpack.c.bf16 %v2399, %v2395
        %v2820 = vpack.c.bf16 %v2400, %v2396
        %v2821 = vpack.c.bf16 %v2401, %v2397
        %v2822 = vpack.c.bf16 %v2402, %v2398
        %v2823 = vpack.c.bf16 %v2407, %v2403
        %v2824 = vpack.c.bf16 %v2408, %v2404
        %v2825 = vpack.c.bf16 %v2409, %v2405
        %v2826 = vpack.c.bf16 %v2410, %v2406
        %v2827 = vpack.c.bf16 %v2415, %v2411
        %v2828 = vpack.c.bf16 %v2416, %v2412
        %v2829 = vpack.c.bf16 %v2417, %v2413
        %v2830 = vpack.c.bf16 %v2418, %v2414
        %v2831 = vpack.c.bf16 %v2423, %v2419
        %v2832 = vpack.c.bf16 %v2424, %v2420
        %v2833 = vpack.c.bf16 %v2425, %v2421
        %v2834 = vpack.c.bf16 %v2426, %v2422
        %v2835 = vpack.c.bf16 %v2431, %v2427
        %v2836 = vpack.c.bf16 %v2432, %v2428
        %v2837 = vpack.c.bf16 %v2433, %v2429
        %v2838 = vpack.c.bf16 %v2434, %v2430
        %v2839 = vpack.c.bf16 %v2439, %v2435
        %v2840 = vpack.c.bf16 %v2440, %v2436
        %v2841 = vpack.c.bf16 %v2441, %v2437
        %v2842 = vpack.c.bf16 %v2442, %v2438
        %v2843 = vpack.c.bf16 %v2447, %v2443
        %v2844 = vpack.c.bf16 %v2448, %v2444
        %v2845 = vpack.c.bf16 %v2449, %v2445
        %v2846 = vpack.c.bf16 %v2450, %v2446
        %v2847 = vpack.c.bf16 %v2455, %v2451
        %v2848 = vpack.c.bf16 %v2456, %v2452
        %v2849 = vpack.c.bf16 %v2457, %v2453
        %v2850 = vpack.c.bf16 %v2458, %v2454
        %v2851 = vpack.c.bf16 %v2463, %v2459
        %v2852 = vpack.c.bf16 %v2464, %v2460
        %v2853 = vpack.c.bf16 %v2465, %v2461
        %v2854 = vpack.c.bf16 %v2466, %v2462
        %v2855 = vpack.c.bf16 %v2471, %v2467
        %v2856 = vpack.c.bf16 %v2472, %v2468
        %v2857 = vpack.c.bf16 %v2473, %v2469
        %v2858 = vpack.c.bf16 %v2474, %v2470
        %v2859 = vpack.c.bf16 %v2479, %v2475
        %v2860 = vpack.c.bf16 %v2480, %v2476
        %v2861 = vpack.c.bf16 %v2481, %v2477
        %v2862 = vpack.c.bf16 %v2482, %v2478
        %v2863 = vpack.c.bf16 %v2487, %v2483
        %v2864 = vpack.c.bf16 %v2488, %v2484
        %v2865 = vpack.c.bf16 %v2489, %v2485
        %v2866 = vpack.c.bf16 %v2490, %v2486
        %v2867 = vpack.c.bf16 %v2615, %v1551
        %v2868 = vpack.c.bf16 %v2616, %v1552
        %v2869 = vpack.c.bf16 %v2617, %v1553
        %v2870 = vpack.c.bf16 %v2618, %v1554
        %v2871 = vpack.c.bf16 %v2623, %v2619
        %v2872 = vpack.c.bf16 %v2624, %v2620
        %v2873 = vpack.c.bf16 %v2625, %v2621
        %v2874 = vpack.c.bf16 %v2626, %v2622
        %v2875 = vpack.c.bf16 %v2631, %v2627
        %v2876 = vpack.c.bf16 %v2632, %v2628
        %v2877 = vpack.c.bf16 %v2633, %v2629
        %v2878 = vpack.c.bf16 %v2634, %v2630
        %v2879 = vpack.c.bf16 %v2639, %v2635
        %v2880 = vpack.c.bf16 %v2640, %v2636
        %v2881 = vpack.c.bf16 %v2641, %v2637
        %v2882 = vpack.c.bf16 %v2642, %v2638
        %v2883 = vpack.c.bf16 %v2647, %v2643
        %v2884 = vpack.c.bf16 %v2648, %v2644
        %v2885 = vpack.c.bf16 %v2649, %v2645
        %v2886 = vpack.c.bf16 %v2650, %v2646
        %v2887 = vpack.c.bf16 %v2655, %v2651
        %v2888 = vpack.c.bf16 %v2656, %v2652
        %v2889 = vpack.c.bf16 %v2657, %v2653
        %v2890 = vpack.c.bf16 %v2658, %v2654
        %v2891 = vpack.c.bf16 %v2663, %v2659
        %v2892 = vpack.c.bf16 %v2664, %v2660
        %v2893 = vpack.c.bf16 %v2665, %v2661
        %v2894 = vpack.c.bf16 %v2666, %v2662
        %v2895 = vpack.c.bf16 %v2671, %v2667
        %v2896 = vpack.c.bf16 %v2672, %v2668
        %v2897 = vpack.c.bf16 %v2673, %v2669
        %v2898 = vpack.c.bf16 %v2674, %v2670
        %v2899 = vpack.c.bf16 %v2679, %v2675
        %v2900 = vpack.c.bf16 %v2680, %v2676
        %v2901 = vpack.c.bf16 %v2681, %v2677
        %v2902 = vpack.c.bf16 %v2682, %v2678
        %v2903 = vpack.c.bf16 %v2687, %v2683
        %v2904 = vpack.c.bf16 %v2688, %v2684
        %v2905 = vpack.c.bf16 %v2689, %v2685
        %v2906 = vpack.c.bf16 %v2690, %v2686
        %v2907 = vpack.c.bf16 %v2695, %v2691
        %v2908 = vpack.c.bf16 %v2696, %v2692
        %v2909 = vpack.c.bf16 %v2697, %v2693
        %v2910 = vpack.c.bf16 %v2698, %v2694
        %v2911 = vpack.c.bf16 %v2703, %v2699
        %v2912 = vpack.c.bf16 %v2704, %v2700
        %v2913 = vpack.c.bf16 %v2705, %v2701
        %v2914 = vpack.c.bf16 %v2706, %v2702
        %v2915 = vpack.c.bf16 %v2711, %v2707
        %v2916 = vpack.c.bf16 %v2712, %v2708
        %v2917 = vpack.c.bf16 %v2713, %v2709
        %v2918 = vpack.c.bf16 %v2714, %v2710
        %v2919 = vpack.c.bf16 %v2719, %v2715
        %v2920 = vpack.c.bf16 %v2720, %v2716
        %v2921 = vpack.c.bf16 %v2721, %v2717
        %v2922 = vpack.c.bf16 %v2722, %v2718
        %v2923 = vpack.c.bf16 %v2727, %v2723
        %v2924 = vpack.c.bf16 %v2728, %v2724
        %v2925 = vpack.c.bf16 %v2729, %v2725
        %v2926 = vpack.c.bf16 %v2730, %v2726
        %v2927 = vpack.c.bf16 %v2735, %v2731
        %v2928 = vpack.c.bf16 %v2736, %v2732
        %v2929 = vpack.c.bf16 %v2737, %v2733
        %v2930 = vpack.c.bf16 %v2738, %v2734
        %v2947 = vunpack.c.l.b16 %v197
        %v2948 = vunpack.c.h.b16 %v197
        %v2949 = vunpack.c.l.b16 %v198
        %v2950 = vunpack.c.h.b16 %v198
        %v2951 = vunpack.c.l.b16 %v199
        %v2952 = vunpack.c.h.b16 %v199
        %v2953 = vunpack.c.l.b16 %v200
        %v2954 = vunpack.c.h.b16 %v200
        %v2955 = vunpack.c.l.b16 %v201
        %v2956 = vunpack.c.h.b16 %v201
        %v2957 = vunpack.c.l.b16 %v202
        %v2958 = vunpack.c.h.b16 %v202
        %v2959 = vunpack.c.l.b16 %v203
        %v2960 = vunpack.c.h.b16 %v203
        %v2961 = vunpack.c.l.b16 %v204
        %v2962 = vunpack.c.h.b16 %v204
        %v2963 = vunpack.c.l.b16 %v205
        %v2964 = vunpack.c.h.b16 %v205
        %v2965 = vunpack.c.l.b16 %v206
        %v2966 = vunpack.c.h.b16 %v206
        %v2967 = vunpack.c.l.b16 %v207
        %v2968 = vunpack.c.h.b16 %v207
        %v2969 = vunpack.c.l.b16 %v208
        %v2970 = vunpack.c.h.b16 %v208
        %v2971 = vunpack.c.l.b16 %v209
        %v2972 = vunpack.c.h.b16 %v209
        %v2973 = vunpack.c.l.b16 %v210
        %v2974 = vunpack.c.h.b16 %v210
        %v2975 = vunpack.c.l.b16 %v211
        %v2976 = vunpack.c.h.b16 %v211
        %v2977 = vunpack.c.l.b16 %v212
        %v2978 = vunpack.c.h.b16 %v212
        %v2979 = vpack.c.b16 %v2949, %v2947
        %v2980 = vpack.c.b16 %v2950, %v2948
        %v2981 = vpack.c.b16 %v2953, %v2951
        %v2982 = vpack.c.b16 %v2954, %v2952
        %v2983 = vpack.c.b16 %v2957, %v2955
        %v2984 = vpack.c.b16 %v2958, %v2956
        %v2985 = vpack.c.b16 %v2961, %v2959
        %v2986 = vpack.c.b16 %v2962, %v2960
        %v2987 = vpack.c.b16 %v2965, %v2963
        %v2988 = vpack.c.b16 %v2966, %v2964
        %v2989 = vpack.c.b16 %v2969, %v2967
        %v2990 = vpack.c.b16 %v2970, %v2968
        %v2991 = vpack.c.b16 %v2973, %v2971
        %v2992 = vpack.c.b16 %v2974, %v2972
        %v2993 = vpack.c.b16 %v2977, %v2975
        %v2994 = vpack.c.b16 %v2978, %v2976
        %3011 = vmatprep.subr.bf16.mxu0 %v1684
        %3012 = vmatpush1.bf16.msra.mxu0 %v1683
        %3013 = vmatprep.subr.bf16.mxu0 %v1688
        %3014 = vmatpush1.bf16.msra.mxu0 %v1687
        %3015 = vmatprep.subr.bf16.mxu0 %v1692
        %3016 = vmatpush1.bf16.msra.mxu0 %v1691
        %3017 = vmatprep.subr.bf16.mxu0 %v1696
        %3018 = vmatpush1.bf16.msra.mxu0 %v1695
        %3019 = vmatprep.subr.bf16.mxu0 %v1700
        %3020 = vmatpush1.bf16.msra.mxu0 %v1699
        %3021 = vmatprep.subr.bf16.mxu0 %v1704
        %3022 = vmatpush1.bf16.msra.mxu0 %v1703
        %3023 = vmatprep.subr.bf16.mxu0 %v1708
        %3024 = vmatpush1.bf16.msra.mxu0 %v1707
        %3025 = vmatprep.subr.bf16.mxu0 %v1712
        %3026 = vmatpush1.bf16.msra.mxu0 %v1711
        %3027 = vmatprep.subr.bf16.mxu0 %v1716
        %3028 = vmatpush1.bf16.msra.mxu0 %v1715
        %3029 = vmatprep.subr.bf16.mxu0 %v1720
        %3030 = vmatpush1.bf16.msra.mxu0 %v1719
        %3031 = vmatprep.subr.bf16.mxu0 %v1724
        %3032 = vmatpush1.bf16.msra.mxu0 %v1723
        %3033 = vmatprep.subr.bf16.mxu0 %v1728
        %3034 = vmatpush1.bf16.msra.mxu0 %v1727
        %3035 = vmatprep.subr.bf16.mxu0 %v1732
        %3036 = vmatpush1.bf16.msra.mxu0 %v1731
        %3037 = vmatprep.subr.bf16.mxu0 %v1736
        %3038 = vmatpush1.bf16.msra.mxu0 %v1735
        %3039 = vmatprep.subr.bf16.mxu0 %v1740
        %3040 = vmatpush1.bf16.msra.mxu0 %v1739
        %3041 = vmatprep.subr.bf16.mxu0 %v1744
        %3042 = vmatpush1.bf16.msra.mxu0 %v1743
        %3043 = vmatprep.mubr.bf16.mxu0 %v2980
        %3044 = vmatmul.mubr.bf16.gmra.mrb[0].mxu0 %v2979
        %v3045 = vpop.f32.mrb[0].mxu0
        %v3046 = vadd.f32 0.0, %v3045
        %v3047 = vpop.f32.mrb[0].mxu0
        %v3048 = vadd.f32 0.0, %v3047
        %v3049 = vpop.f32.mrb[0].mxu0
        %v3050 = vadd.f32 0.0, %v3049
        %v3051 = vpop.f32.mrb[0].mxu0
        %v3052 = vadd.f32 0.0, %v3051
        %3053 = vmatprep.mubr.bf16.mxu0 %v2982
        %3054 = vmatmul.mubr.bf16.gmra.mrb[0].mxu0 %v2981
        %v3055 = vpop.f32.mrb[0].mxu0
        %v3056 = vadd.f32 0.0, %v3055
        %v3057 = vpop.f32.mrb[0].mxu0
        %v3058 = vadd.f32 0.0, %v3057
        %v3059 = vpop.f32.mrb[0].mxu0
        %v3060 = vadd.f32 0.0, %v3059
        %v3061 = vpop.f32.mrb[0].mxu0
        %v3062 = vadd.f32 0.0, %v3061
        %3063 = vmatprep.mubr.bf16.mxu0 %v2984
        %3064 = vmatmul.mubr.bf16.gmra.mrb[0].mxu0 %v2983
        %v3065 = vpop.f32.mrb[0].mxu0
        %v3066 = vadd.f32 0.0, %v3065
        %v3067 = vpop.f32.mrb[0].mxu0
        %v3068 = vadd.f32 0.0, %v3067
        %v3069 = vpop.f32.mrb[0].mxu0
        %v3070 = vadd.f32 0.0, %v3069
        %v3071 = vpop.f32.mrb[0].mxu0
        %v3072 = vadd.f32 0.0, %v3071
        %3073 = vmatprep.mubr.bf16.mxu0 %v2986
        %3074 = vmatmul.mubr.bf16.gmra.mrb[0].mxu0 %v2985
        %v3075 = vpop.f32.mrb[0].mxu0
        %v3076 = vadd.f32 0.0, %v3075
        %v3077 = vpop.f32.mrb[0].mxu0
        %v3078 = vadd.f32 0.0, %v3077
        %v3079 = vpop.f32.mrb[0].mxu0
        %v3080 = vadd.f32 0.0, %v3079
        %v3081 = vpop.f32.mrb[0].mxu0
        %v3082 = vadd.f32 0.0, %v3081
        %3083 = vmatprep.mubr.bf16.mxu0 %v2988
        %3084 = vmatmul.mubr.bf16.gmra.mrb[0].mxu0 %v2987
        %v3085 = vpop.f32.mrb[0].mxu0
        %v3086 = vadd.f32 0.0, %v3085
        %v3087 = vpop.f32.mrb[0].mxu0
        %v3088 = vadd.f32 0.0, %v3087
        %v3089 = vpop.f32.mrb[0].mxu0
        %v3090 = vadd.f32 0.0, %v3089
        %v3091 = vpop.f32.mrb[0].mxu0
        %v3092 = vadd.f32 0.0, %v3091
        %3093 = vmatprep.mubr.bf16.mxu0 %v2990
        %3094 = vmatmul.mubr.bf16.gmra.mrb[0].mxu0 %v2989
        %v3095 = vpop.f32.mrb[0].mxu0
        %v3096 = vadd.f32 0.0, %v3095
        %v3097 = vpop.f32.mrb[0].mxu0
        %v3098 = vadd.f32 0.0, %v3097
        %v3099 = vpop.f32.mrb[0].mxu0
        %v3100 = vadd.f32 0.0, %v3099
        %v3101 = vpop.f32.mrb[0].mxu0
        %v3102 = vadd.f32 0.0, %v3101
        %3103 = vmatprep.mubr.bf16.mxu0 %v2992
        %3104 = vmatmul.mubr.bf16.gmra.mrb[0].mxu0 %v2991
        %v3105 = vpop.f32.mrb[0].mxu0
        %v3106 = vadd.f32 0.0, %v3105
        %v3107 = vpop.f32.mrb[0].mxu0
        %v3108 = vadd.f32 0.0, %v3107
        %v3109 = vpop.f32.mrb[0].mxu0
        %v3110 = vadd.f32 0.0, %v3109
        %v3111 = vpop.f32.mrb[0].mxu0
        %v3112 = vadd.f32 0.0, %v3111
        %3113 = vmatprep.mubr.bf16.mxu0 %v2994
        %3114 = vmatmul.mubr.bf16.gmra.mrb[0].mxu0 %v2993
        %v3115 = vpop.f32.mrb[0].mxu0
        %v3116 = vadd.f32 0.0, %v3115
        %v3117 = vpop.f32.mrb[0].mxu0
        %v3118 = vadd.f32 0.0, %v3117
        %v3119 = vpop.f32.mrb[0].mxu0
        %v3120 = vadd.f32 0.0, %v3119
        %v3121 = vpop.f32.mrb[0].mxu0
        %v3122 = vadd.f32 0.0, %v3121
        %3123 = vdwg.mxu0
        %3124 = vmatprep.subr.bf16.mxu0 %v1686
        %3125 = vmatpush1.bf16.msra.mxu0 %v1685
        %3126 = vmatprep.subr.bf16.mxu0 %v1690
        %3127 = vmatpush1.bf16.msra.mxu0 %v1689
        %3128 = vmatprep.subr.bf16.mxu0 %v1694
        %3129 = vmatpush1.bf16.msra.mxu0 %v1693
        %3130 = vmatprep.subr.bf16.mxu0 %v1698
        %3131 = vmatpush1.bf16.msra.mxu0 %v1697
        %3132 = vmatprep.subr.bf16.mxu0 %v1702
        %3133 = vmatpush1.bf16.msra.mxu0 %v1701
        %3134 = vmatprep.subr.bf16.mxu0 %v1706
        %3135 = vmatpush1.bf16.msra.mxu0 %v1705
        %3136 = vmatprep.subr.bf16.mxu0 %v1710
        %3137 = vmatpush1.bf16.msra.mxu0 %v1709
        %3138 = vmatprep.subr.bf16.mxu0 %v1714
        %3139 = vmatpush1.bf16.msra.mxu0 %v1713
        %3140 = vmatprep.subr.bf16.mxu0 %v1718
        %3141 = vmatpush1.bf16.msra.mxu0 %v1717
        %3142 = vmatprep.subr.bf16.mxu0 %v1722
        %3143 = vmatpush1.bf16.msra.mxu0 %v1721
        %3144 = vmatprep.subr.bf16.mxu0 %v1726
        %3145 = vmatpush1.bf16.msra.mxu0 %v1725
        %3146 = vmatprep.subr.bf16.mxu0 %v1730
        %3147 = vmatpush1.bf16.msra.mxu0 %v1729
        %3148 = vmatprep.subr.bf16.mxu0 %v1734
        %3149 = vmatpush1.bf16.msra.mxu0 %v1733
        %3150 = vmatprep.subr.bf16.mxu0 %v1738
        %3151 = vmatpush1.bf16.msra.mxu0 %v1737
        %3152 = vmatprep.subr.bf16.mxu0 %v1742
        %3153 = vmatpush1.bf16.msra.mxu0 %v1741
        %3154 = vmatprep.subr.bf16.mxu0 %v1746
        %3155 = vmatpush1.bf16.msra.mxu0 %v1745
        %3156 = vmatprep.mubr.bf16.mxu0 %v2980
        %3157 = vmatmul.mubr.bf16.gmra.mrb[0].mxu0 %v2979
        %v3158 = vpop.f32.mrb[0].mxu0
        %v3159 = vadd.f32 0.0, %v3158
        %v3160 = vpop.f32.mrb[0].mxu0
        %v3161 = vadd.f32 0.0, %v3160
        %v3162 = vpop.f32.mrb[0].mxu0
        %v3163 = vadd.f32 0.0, %v3162
        %v3164 = vpop.f32.mrb[0].mxu0
        %v3165 = vadd.f32 0.0, %v3164
        %3166 = vmatprep.mubr.bf16.mxu0 %v2982
        %3167 = vmatmul.mubr.bf16.gmra.mrb[0].mxu0 %v2981
        %v3168 = vpop.f32.mrb[0].mxu0
        %v3169 = vadd.f32 0.0, %v3168
        %v3170 = vpop.f32.mrb[0].mxu0
        %v3171 = vadd.f32 0.0, %v3170
        %v3172 = vpop.f32.mrb[0].mxu0
        %v3173 = vadd.f32 0.0, %v3172
        %v3174 = vpop.f32.mrb[0].mxu0
        %v3175 = vadd.f32 0.0, %v3174
        %3176 = vmatprep.mubr.bf16.mxu0 %v2984
        %3177 = vmatmul.mubr.bf16.gmra.mrb[0].mxu0 %v2983
        %v3178 = vpop.f32.mrb[0].mxu0
        %v3179 = vadd.f32 0.0, %v3178
        %v3180 = vpop.f32.mrb[0].mxu0
        %v3181 = vadd.f32 0.0, %v3180
        %v3182 = vpop.f32.mrb[0].mxu0
        %v3183 = vadd.f32 0.0, %v3182
        %v3184 = vpop.f32.mrb[0].mxu0
        %v3185 = vadd.f32 0.0, %v3184
        %3186 = vmatprep.mubr.bf16.mxu0 %v2986
        %3187 = vmatmul.mubr.bf16.gmra.mrb[0].mxu0 %v2985
        %v3188 = vpop.f32.mrb[0].mxu0
        %v3189 = vadd.f32 0.0, %v3188
        %v3190 = vpop.f32.mrb[0].mxu0
        %v3191 = vadd.f32 0.0, %v3190
        %v3192 = vpop.f32.mrb[0].mxu0
        %v3193 = vadd.f32 0.0, %v3192
        %v3194 = vpop.f32.mrb[0].mxu0
        %v3195 = vadd.f32 0.0, %v3194
        %3196 = vmatprep.mubr.bf16.mxu0 %v2988
        %3197 = vmatmul.mubr.bf16.gmra.mrb[0].mxu0 %v2987
        %v3198 = vpop.f32.mrb[0].mxu0
        %v3199 = vadd.f32 0.0, %v3198
        %v3200 = vpop.f32.mrb[0].mxu0
        %v3201 = vadd.f32 0.0, %v3200
        %v3202 = vpop.f32.mrb[0].mxu0
        %v3203 = vadd.f32 0.0, %v3202
        %v3204 = vpop.f32.mrb[0].mxu0
        %v3205 = vadd.f32 0.0, %v3204
        %3206 = vmatprep.mubr.bf16.mxu0 %v2990
        %3207 = vmatmul.mubr.bf16.gmra.mrb[0].mxu0 %v2989
        %v3208 = vpop.f32.mrb[0].mxu0
        %v3209 = vadd.f32 0.0, %v3208
        %v3210 = vpop.f32.mrb[0].mxu0
        %v3211 = vadd.f32 0.0, %v3210
        %v3212 = vpop.f32.mrb[0].mxu0
        %v3213 = vadd.f32 0.0, %v3212
        %v3214 = vpop.f32.mrb[0].mxu0
        %v3215 = vadd.f32 0.0, %v3214
        %3216 = vmatprep.mubr.bf16.mxu0 %v2992
        %3217 = vmatmul.mubr.bf16.gmra.mrb[0].mxu0 %v2991
        %v3218 = vpop.f32.mrb[0].mxu0
        %v3219 = vadd.f32 0.0, %v3218
        %v3220 = vpop.f32.mrb[0].mxu0
        %v3221 = vadd.f32 0.0, %v3220
        %v3222 = vpop.f32.mrb[0].mxu0
        %v3223 = vadd.f32 0.0, %v3222
        %v3224 = vpop.f32.mrb[0].mxu0
        %v3225 = vadd.f32 0.0, %v3224
        %3226 = vmatprep.mubr.bf16.mxu0 %v2994
        %3227 = vmatmul.mubr.bf16.gmra.mrb[0].mxu0 %v2993
        %v3228 = vpop.f32.mrb[0].mxu0
        %v3229 = vadd.f32 0.0, %v3228
        %v3230 = vpop.f32.mrb[0].mxu0
        %v3231 = vadd.f32 0.0, %v3230
        %v3232 = vpop.f32.mrb[0].mxu0
        %v3233 = vadd.f32 0.0, %v3232
        %v3234 = vpop.f32.mrb[0].mxu0
        %v3235 = vadd.f32 0.0, %v3234
        %3236 = vdwg.mxu0
        %v3237 = vpack.c.bf16 %v3050, %v3046
        %v3238 = vpack.c.bf16 %v3052, %v3048
        %v3239 = vpack.c.bf16 %v3163, %v3159
        %v3240 = vpack.c.bf16 %v3165, %v3161
        %v3241 = vpack.c.bf16 %v3060, %v3056
        %v3242 = vpack.c.bf16 %v3062, %v3058
        %v3243 = vpack.c.bf16 %v3173, %v3169
        %v3244 = vpack.c.bf16 %v3175, %v3171
        %v3245 = vpack.c.bf16 %v3070, %v3066
        %v3246 = vpack.c.bf16 %v3072, %v3068
        %v3247 = vpack.c.bf16 %v3183, %v3179
        %v3248 = vpack.c.bf16 %v3185, %v3181
        %v3249 = vpack.c.bf16 %v3080, %v3076
        %v3250 = vpack.c.bf16 %v3082, %v3078
        %v3251 = vpack.c.bf16 %v3193, %v3189
        %v3252 = vpack.c.bf16 %v3195, %v3191
        %v3253 = vpack.c.bf16 %v3090, %v3086
        %v3254 = vpack.c.bf16 %v3092, %v3088
        %v3255 = vpack.c.bf16 %v3203, %v3199
        %v3256 = vpack.c.bf16 %v3205, %v3201
        %v3257 = vpack.c.bf16 %v3100, %v3096
        %v3258 = vpack.c.bf16 %v3102, %v3098
        %v3259 = vpack.c.bf16 %v3213, %v3209
        %v3260 = vpack.c.bf16 %v3215, %v3211
        %v3261 = vpack.c.bf16 %v3110, %v3106
        %v3262 = vpack.c.bf16 %v3112, %v3108
        %v3263 = vpack.c.bf16 %v3223, %v3219
        %v3264 = vpack.c.bf16 %v3225, %v3221
        %v3265 = vpack.c.bf16 %v3120, %v3116
        %v3266 = vpack.c.bf16 %v3122, %v3118
        %v3267 = vpack.c.bf16 %v3233, %v3229
        %v3268 = vpack.c.bf16 %v3235, %v3231
        %v3285 = vunpack.c.l.b16 %v213
        %v3286 = vunpack.c.h.b16 %v213
        %v3287 = vunpack.c.l.b16 %v214
        %v3288 = vunpack.c.h.b16 %v214
        %v3289 = vunpack.c.l.b16 %v215
        %v3290 = vunpack.c.h.b16 %v215
        %v3291 = vunpack.c.l.b16 %v216
        %v3292 = vunpack.c.h.b16 %v216
        %v3293 = vunpack.c.l.b16 %v217
        %v3294 = vunpack.c.h.b16 %v217
        %v3295 = vunpack.c.l.b16 %v218
        %v3296 = vunpack.c.h.b16 %v218
        %v3297 = vunpack.c.l.b16 %v219
        %v3298 = vunpack.c.h.b16 %v219
        %v3299 = vunpack.c.l.b16 %v220
        %v3300 = vunpack.c.h.b16 %v220
        %v3301 = vunpack.c.l.b16 %v221
        %v3302 = vunpack.c.h.b16 %v221
        %v3303 = vunpack.c.l.b16 %v222
        %v3304 = vunpack.c.h.b16 %v222
        %v3305 = vunpack.c.l.b16 %v223
        %v3306 = vunpack.c.h.b16 %v223
        %v3307 = vunpack.c.l.b16 %v224
        %v3308 = vunpack.c.h.b16 %v224
        %v3309 = vunpack.c.l.b16 %v225
        %v3310 = vunpack.c.h.b16 %v225
        %v3311 = vunpack.c.l.b16 %v226
        %v3312 = vunpack.c.h.b16 %v226
        %v3313 = vunpack.c.l.b16 %v227
        %v3314 = vunpack.c.h.b16 %v227
        %v3315 = vunpack.c.l.b16 %v228
        %v3316 = vunpack.c.h.b16 %v228
        %v3317 = vpack.c.b16 %v3287, %v3285
        %v3318 = vpack.c.b16 %v3288, %v3286
        %v3319 = vpack.c.b16 %v3291, %v3289
        %v3320 = vpack.c.b16 %v3292, %v3290
        %v3321 = vpack.c.b16 %v3295, %v3293
        %v3322 = vpack.c.b16 %v3296, %v3294
        %v3323 = vpack.c.b16 %v3299, %v3297
        %v3324 = vpack.c.b16 %v3300, %v3298
        %v3325 = vpack.c.b16 %v3303, %v3301
        %v3326 = vpack.c.b16 %v3304, %v3302
        %v3327 = vpack.c.b16 %v3307, %v3305
        %v3328 = vpack.c.b16 %v3308, %v3306
        %v3329 = vpack.c.b16 %v3311, %v3309
        %v3330 = vpack.c.b16 %v3312, %v3310
        %v3331 = vpack.c.b16 %v3315, %v3313
        %v3332 = vpack.c.b16 %v3316, %v3314
        %vm3341 = vcmask 1014784
        %v3343 = vsel %vm3341, %v3318, 0
        %v3346 = vsel %vm3341, %v3320, 0
        %v3349 = vsel %vm3341, %v3322, 0
        %v3352 = vsel %vm3341, %v3324, 0
        %v3355 = vsel %vm3341, %v3326, 0
        %v3358 = vsel %vm3341, %v3328, 0
        %v3361 = vsel %vm3341, %v3330, 0
        %v3364 = vsel %vm3341, %v3332, 0
        %vm3366 = vcmask 1045504
        %v3368 = vsel %vm3366, %v2927, 0
        %v3371 = vsel %vm3366, %v2928, 0
        %v3374 = vsel %vm3366, %v2929, 0
        %v3377 = vsel %vm3366, %v2930, 0
        %3379 = vmatprep.subr.bf16.mxu0 %v2868
        %3380 = vmatpush1.bf16.msra.mxu0 %v2867
        %3381 = vmatprep.subr.bf16.mxu0 %v2872
        %3382 = vmatpush1.bf16.msra.mxu0 %v2871
        %3383 = vmatprep.subr.bf16.mxu0 %v2876
        %3384 = vmatpush1.bf16.msra.mxu0 %v2875
        %3385 = vmatprep.subr.bf16.mxu0 %v2880
        %3386 = vmatpush1.bf16.msra.mxu0 %v2879
        %3387 = vmatprep.subr.bf16.mxu0 %v2884
        %3388 = vmatpush1.bf16.msra.mxu0 %v2883
        %3389 = vmatprep.subr.bf16.mxu0 %v2888
        %3390 = vmatpush1.bf16.msra.mxu0 %v2887
        %3391 = vmatprep.subr.bf16.mxu0 %v2892
        %3392 = vmatpush1.bf16.msra.mxu0 %v2891
        %3393 = vmatprep.subr.bf16.mxu0 %v2896
        %3394 = vmatpush1.bf16.msra.mxu0 %v2895
        %3395 = vmatprep.subr.bf16.mxu0 %v2900
        %3396 = vmatpush1.bf16.msra.mxu0 %v2899
        %3397 = vmatprep.subr.bf16.mxu0 %v2904
        %3398 = vmatpush1.bf16.msra.mxu0 %v2903
        %3399 = vmatprep.subr.bf16.mxu0 %v2908
        %3400 = vmatpush1.bf16.msra.mxu0 %v2907
        %3401 = vmatprep.subr.bf16.mxu0 %v2912
        %3402 = vmatpush1.bf16.msra.mxu0 %v2911
        %3403 = vmatprep.subr.bf16.mxu0 %v2916
        %3404 = vmatpush1.bf16.msra.mxu0 %v2915
        %3405 = vmatprep.subr.bf16.mxu0 %v2920
        %3406 = vmatpush1.bf16.msra.mxu0 %v2919
        %3407 = vmatprep.subr.bf16.mxu0 %v2924
        %3408 = vmatpush1.bf16.msra.mxu0 %v2923
        %3409 = vmatprep.subr.bf16.mxu0 %v3371
        %3410 = vmatpush1.bf16.msra.mxu0 %v3368
        %3411 = vmatprep.mubr.bf16.mxu0 %v3343
        %3412 = vmatmul.mubr.bf16.gmra.mrb[0].mxu0 %v3317
        %v3413 = vpop.f32.mrb[0].mxu0
        %v3414 = vadd.f32 0.0, %v3413
        %v3415 = vpop.f32.mrb[0].mxu0
        %v3416 = vadd.f32 0.0, %v3415
        %v3417 = vpop.f32.mrb[0].mxu0
        %v3418 = vadd.f32 0.0, %v3417
        %v3419 = vpop.f32.mrb[0].mxu0
        %v3420 = vadd.f32 0.0, %v3419
        %3421 = vmatprep.mubr.bf16.mxu0 %v3346
        %3422 = vmatmul.mubr.bf16.gmra.mrb[0].mxu0 %v3319
        %v3423 = vpop.f32.mrb[0].mxu0
        %v3424 = vadd.f32 0.0, %v3423
        %v3425 = vpop.f32.mrb[0].mxu0
        %v3426 = vadd.f32 0.0, %v3425
        %v3427 = vpop.f32.mrb[0].mxu0
        %v3428 = vadd.f32 0.0, %v3427
        %v3429 = vpop.f32.mrb[0].mxu0
        %v3430 = vadd.f32 0.0, %v3429
        %3431 = vmatprep.mubr.bf16.mxu0 %v3349
        %3432 = vmatmul.mubr.bf16.gmra.mrb[0].mxu0 %v3321
        %v3433 = vpop.f32.mrb[0].mxu0
        %v3434 = vadd.f32 0.0, %v3433
        %v3435 = vpop.f32.mrb[0].mxu0
        %v3436 = vadd.f32 0.0, %v3435
        %v3437 = vpop.f32.mrb[0].mxu0
        %v3438 = vadd.f32 0.0, %v3437
        %v3439 = vpop.f32.mrb[0].mxu0
        %v3440 = vadd.f32 0.0, %v3439
        %3441 = vmatprep.mubr.bf16.mxu0 %v3352
        %3442 = vmatmul.mubr.bf16.gmra.mrb[0].mxu0 %v3323
        %v3443 = vpop.f32.mrb[0].mxu0
        %v3444 = vadd.f32 0.0, %v3443
        %v3445 = vpop.f32.mrb[0].mxu0
        %v3446 = vadd.f32 0.0, %v3445
        %v3447 = vpop.f32.mrb[0].mxu0
        %v3448 = vadd.f32 0.0, %v3447
        %v3449 = vpop.f32.mrb[0].mxu0
        %v3450 = vadd.f32 0.0, %v3449
        %3451 = vmatprep.mubr.bf16.mxu0 %v3355
        %3452 = vmatmul.mubr.bf16.gmra.mrb[0].mxu0 %v3325
        %v3453 = vpop.f32.mrb[0].mxu0
        %v3454 = vadd.f32 0.0, %v3453
        %v3455 = vpop.f32.mrb[0].mxu0
        %v3456 = vadd.f32 0.0, %v3455
        %v3457 = vpop.f32.mrb[0].mxu0
        %v3458 = vadd.f32 0.0, %v3457
        %v3459 = vpop.f32.mrb[0].mxu0
        %v3460 = vadd.f32 0.0, %v3459
        %3461 = vmatprep.mubr.bf16.mxu0 %v3358
        %3462 = vmatmul.mubr.bf16.gmra.mrb[0].mxu0 %v3327
        %v3463 = vpop.f32.mrb[0].mxu0
        %v3464 = vadd.f32 0.0, %v3463
        %v3465 = vpop.f32.mrb[0].mxu0
        %v3466 = vadd.f32 0.0, %v3465
        %v3467 = vpop.f32.mrb[0].mxu0
        %v3468 = vadd.f32 0.0, %v3467
        %v3469 = vpop.f32.mrb[0].mxu0
        %v3470 = vadd.f32 0.0, %v3469
        %3471 = vmatprep.mubr.bf16.mxu0 %v3361
        %3472 = vmatmul.mubr.bf16.gmra.mrb[0].mxu0 %v3329
        %v3473 = vpop.f32.mrb[0].mxu0
        %v3474 = vadd.f32 0.0, %v3473
        %v3475 = vpop.f32.mrb[0].mxu0
        %v3476 = vadd.f32 0.0, %v3475
        %v3477 = vpop.f32.mrb[0].mxu0
        %v3478 = vadd.f32 0.0, %v3477
        %v3479 = vpop.f32.mrb[0].mxu0
        %v3480 = vadd.f32 0.0, %v3479
        %3481 = vmatprep.mubr.bf16.mxu0 %v3364
        %3482 = vmatmul.mubr.bf16.gmra.mrb[0].mxu0 %v3331
        %v3483 = vpop.f32.mrb[0].mxu0
        %v3484 = vadd.f32 0.0, %v3483
        %v3485 = vpop.f32.mrb[0].mxu0
        %v3486 = vadd.f32 0.0, %v3485
        %v3487 = vpop.f32.mrb[0].mxu0
        %v3488 = vadd.f32 0.0, %v3487
        %v3489 = vpop.f32.mrb[0].mxu0
        %v3490 = vadd.f32 0.0, %v3489
        %3491 = vdwg.mxu0
        %3492 = vmatprep.subr.bf16.mxu0 %v2870
        %3493 = vmatpush1.bf16.msra.mxu0 %v2869
        %3494 = vmatprep.subr.bf16.mxu0 %v2874
        %3495 = vmatpush1.bf16.msra.mxu0 %v2873
        %3496 = vmatprep.subr.bf16.mxu0 %v2878
        %3497 = vmatpush1.bf16.msra.mxu0 %v2877
        %3498 = vmatprep.subr.bf16.mxu0 %v2882
        %3499 = vmatpush1.bf16.msra.mxu0 %v2881
        %3500 = vmatprep.subr.bf16.mxu0 %v2886
        %3501 = vmatpush1.bf16.msra.mxu0 %v2885
        %3502 = vmatprep.subr.bf16.mxu0 %v2890
        %3503 = vmatpush1.bf16.msra.mxu0 %v2889
        %3504 = vmatprep.subr.bf16.mxu0 %v2894
        %3505 = vmatpush1.bf16.msra.mxu0 %v2893
        %3506 = vmatprep.subr.bf16.mxu0 %v2898
        %3507 = vmatpush1.bf16.msra.mxu0 %v2897
        %3508 = vmatprep.subr.bf16.mxu0 %v2902
        %3509 = vmatpush1.bf16.msra.mxu0 %v2901
        %3510 = vmatprep.subr.bf16.mxu0 %v2906
        %3511 = vmatpush1.bf16.msra.mxu0 %v2905
        %3512 = vmatprep.subr.bf16.mxu0 %v2910
        %3513 = vmatpush1.bf16.msra.mxu0 %v2909
        %3514 = vmatprep.subr.bf16.mxu0 %v2914
        %3515 = vmatpush1.bf16.msra.mxu0 %v2913
        %3516 = vmatprep.subr.bf16.mxu0 %v2918
        %3517 = vmatpush1.bf16.msra.mxu0 %v2917
        %3518 = vmatprep.subr.bf16.mxu0 %v2922
        %3519 = vmatpush1.bf16.msra.mxu0 %v2921
        %3520 = vmatprep.subr.bf16.mxu0 %v2926
        %3521 = vmatpush1.bf16.msra.mxu0 %v2925
        %3522 = vmatprep.subr.bf16.mxu0 %v3377
        %3523 = vmatpush1.bf16.msra.mxu0 %v3374
        %3524 = vmatprep.mubr.bf16.mxu0 %v3343
        %3525 = vmatmul.mubr.bf16.gmra.mrb[0].mxu0 %v3317
        %v3526 = vpop.f32.mrb[0].mxu0
        %v3527 = vadd.f32 0.0, %v3526
        %v3528 = vpop.f32.mrb[0].mxu0
        %v3529 = vadd.f32 0.0, %v3528
        %v3530 = vpop.f32.mrb[0].mxu0
        %v3531 = vadd.f32 0.0, %v3530
        %v3532 = vpop.f32.mrb[0].mxu0
        %v3533 = vadd.f32 0.0, %v3532
        %3534 = vmatprep.mubr.bf16.mxu0 %v3346
        %3535 = vmatmul.mubr.bf16.gmra.mrb[0].mxu0 %v3319
        %v3536 = vpop.f32.mrb[0].mxu0
        %v3537 = vadd.f32 0.0, %v3536
        %v3538 = vpop.f32.mrb[0].mxu0
        %v3539 = vadd.f32 0.0, %v3538
        %v3540 = vpop.f32.mrb[0].mxu0
        %v3541 = vadd.f32 0.0, %v3540
        %v3542 = vpop.f32.mrb[0].mxu0
        %v3543 = vadd.f32 0.0, %v3542
        %3544 = vmatprep.mubr.bf16.mxu0 %v3349
        %3545 = vmatmul.mubr.bf16.gmra.mrb[0].mxu0 %v3321
        %v3546 = vpop.f32.mrb[0].mxu0
        %v3547 = vadd.f32 0.0, %v3546
        %v3548 = vpop.f32.mrb[0].mxu0
        %v3549 = vadd.f32 0.0, %v3548
        %v3550 = vpop.f32.mrb[0].mxu0
        %v3551 = vadd.f32 0.0, %v3550
        %v3552 = vpop.f32.mrb[0].mxu0
        %v3553 = vadd.f32 0.0, %v3552
        %3554 = vmatprep.mubr.bf16.mxu0 %v3352
        %3555 = vmatmul.mubr.bf16.gmra.mrb[0].mxu0 %v3323
        %v3556 = vpop.f32.mrb[0].mxu0
        %v3557 = vadd.f32 0.0, %v3556
        %v3558 = vpop.f32.mrb[0].mxu0
        %v3559 = vadd.f32 0.0, %v3558
        %v3560 = vpop.f32.mrb[0].mxu0
        %v3561 = vadd.f32 0.0, %v3560
        %v3562 = vpop.f32.mrb[0].mxu0
        %v3563 = vadd.f32 0.0, %v3562
        %3564 = vmatprep.mubr.bf16.mxu0 %v3355
        %3565 = vmatmul.mubr.bf16.gmra.mrb[0].mxu0 %v3325
        %v3566 = vpop.f32.mrb[0].mxu0
        %v3567 = vadd.f32 0.0, %v3566
        %v3568 = vpop.f32.mrb[0].mxu0
        %v3569 = vadd.f32 0.0, %v3568
        %v3570 = vpop.f32.mrb[0].mxu0
        %v3571 = vadd.f32 0.0, %v3570
        %v3572 = vpop.f32.mrb[0].mxu0
        %v3573 = vadd.f32 0.0, %v3572
        %3574 = vmatprep.mubr.bf16.mxu0 %v3358
        %3575 = vmatmul.mubr.bf16.gmra.mrb[0].mxu0 %v3327
        %v3576 = vpop.f32.mrb[0].mxu0
        %v3577 = vadd.f32 0.0, %v3576
        %v3578 = vpop.f32.mrb[0].mxu0
        %v3579 = vadd.f32 0.0, %v3578
        %v3580 = vpop.f32.mrb[0].mxu0
        %v3581 = vadd.f32 0.0, %v3580
        %v3582 = vpop.f32.mrb[0].mxu0
        %v3583 = vadd.f32 0.0, %v3582
        %3584 = vmatprep.mubr.bf16.mxu0 %v3361
        %3585 = vmatmul.mubr.bf16.gmra.mrb[0].mxu0 %v3329
        %v3586 = vpop.f32.mrb[0].mxu0
        %v3587 = vadd.f32 0.0, %v3586
        %v3588 = vpop.f32.mrb[0].mxu0
        %v3589 = vadd.f32 0.0, %v3588
        %v3590 = vpop.f32.mrb[0].mxu0
        %v3591 = vadd.f32 0.0, %v3590
        %v3592 = vpop.f32.mrb[0].mxu0
        %v3593 = vadd.f32 0.0, %v3592
        %3594 = vmatprep.mubr.bf16.mxu0 %v3364
        %3595 = vmatmul.mubr.bf16.gmra.mrb[0].mxu0 %v3331
        %v3596 = vpop.f32.mrb[0].mxu0
        %v3597 = vadd.f32 0.0, %v3596
        %v3598 = vpop.f32.mrb[0].mxu0
        %v3599 = vadd.f32 0.0, %v3598
        %v3600 = vpop.f32.mrb[0].mxu0
        %v3601 = vadd.f32 0.0, %v3600
        %v3602 = vpop.f32.mrb[0].mxu0
        %v3603 = vadd.f32 0.0, %v3602
        %3604 = vdwg.mxu0
        %v3605 = vpack.c.bf16 %v3418, %v3414
        %v3606 = vpack.c.bf16 %v3420, %v3416
        %v3607 = vpack.c.bf16 %v3531, %v3527
        %v3608 = vpack.c.bf16 %v3533, %v3529
        %v3609 = vpack.c.bf16 %v3428, %v3424
        %v3610 = vpack.c.bf16 %v3430, %v3426
        %v3611 = vpack.c.bf16 %v3541, %v3537
        %v3612 = vpack.c.bf16 %v3543, %v3539
        %v3613 = vpack.c.bf16 %v3438, %v3434
        %v3614 = vpack.c.bf16 %v3440, %v3436
        %v3615 = vpack.c.bf16 %v3551, %v3547
        %v3616 = vpack.c.bf16 %v3553, %v3549
        %v3617 = vpack.c.bf16 %v3448, %v3444
        %v3618 = vpack.c.bf16 %v3450, %v3446
        %v3619 = vpack.c.bf16 %v3561, %v3557
        %v3620 = vpack.c.bf16 %v3563, %v3559
        %v3621 = vpack.c.bf16 %v3458, %v3454
        %v3622 = vpack.c.bf16 %v3460, %v3456
        %v3623 = vpack.c.bf16 %v3571, %v3567
        %v3624 = vpack.c.bf16 %v3573, %v3569
        %v3625 = vpack.c.bf16 %v3468, %v3464
        %v3626 = vpack.c.bf16 %v3470, %v3466
        %v3627 = vpack.c.bf16 %v3581, %v3577
        %v3628 = vpack.c.bf16 %v3583, %v3579
        %v3629 = vpack.c.bf16 %v3478, %v3474
        %v3630 = vpack.c.bf16 %v3480, %v3476
        %v3631 = vpack.c.bf16 %v3591, %v3587
        %v3632 = vpack.c.bf16 %v3593, %v3589
        %v3633 = vpack.c.bf16 %v3488, %v3484
        %v3634 = vpack.c.bf16 %v3490, %v3486
        %v3635 = vpack.c.bf16 %v3601, %v3597
        %v3636 = vpack.c.bf16 %v3603, %v3599
        %3637 = vmatprep.subr.bf16.mxu0 %v1620
        %3638 = vmatpush1.bf16.msra.mxu0 %v1619
        %3639 = vmatprep.subr.bf16.mxu0 %v1624
        %3640 = vmatpush1.bf16.msra.mxu0 %v1623
        %3641 = vmatprep.subr.bf16.mxu0 %v1628
        %3642 = vmatpush1.bf16.msra.mxu0 %v1627
        %3643 = vmatprep.subr.bf16.mxu0 %v1632
        %3644 = vmatpush1.bf16.msra.mxu0 %v1631
        %3645 = vmatprep.subr.bf16.mxu0 %v1636
        %3646 = vmatpush1.bf16.msra.mxu0 %v1635
        %3647 = vmatprep.subr.bf16.mxu0 %v1640
        %3648 = vmatpush1.bf16.msra.mxu0 %v1639
        %3649 = vmatprep.subr.bf16.mxu0 %v1644
        %3650 = vmatpush1.bf16.msra.mxu0 %v1643
        %3651 = vmatprep.subr.bf16.mxu0 %v1648
        %3652 = vmatpush1.bf16.msra.mxu0 %v1647
        %3653 = vmatprep.subr.bf16.mxu0 %v1652
        %3654 = vmatpush1.bf16.msra.mxu0 %v1651
        %3655 = vmatprep.subr.bf16.mxu0 %v1656
        %3656 = vmatpush1.bf16.msra.mxu0 %v1655
        %3657 = vmatprep.subr.bf16.mxu0 %v1660
        %3658 = vmatpush1.bf16.msra.mxu0 %v1659
        %3659 = vmatprep.subr.bf16.mxu0 %v1664
        %3660 = vmatpush1.bf16.msra.mxu0 %v1663
        %3661 = vmatprep.subr.bf16.mxu0 %v1668
        %3662 = vmatpush1.bf16.msra.mxu0 %v1667
        %3663 = vmatprep.subr.bf16.mxu0 %v1672
        %3664 = vmatpush1.bf16.msra.mxu0 %v1671
        %3665 = vmatprep.subr.bf16.mxu0 %v1676
        %3666 = vmatpush1.bf16.msra.mxu0 %v1675
        %3667 = vmatprep.subr.bf16.mxu0 %v1680
        %3668 = vmatpush1.bf16.msra.mxu0 %v1679
        %3669 = vmatprep.mubr.bf16.mxu0 %v2980
        %3670 = vmatmul.mubr.bf16.gmra.mrb[0].mxu0 %v2979
        %v3671 = vpop.f32.mrb[0].mxu0
        %v3672 = vadd.f32 0.0, %v3671
        %v3673 = vpop.f32.mrb[0].mxu0
        %v3674 = vadd.f32 0.0, %v3673
        %v3675 = vpop.f32.mrb[0].mxu0
        %v3676 = vadd.f32 0.0, %v3675
        %v3677 = vpop.f32.mrb[0].mxu0
        %v3678 = vadd.f32 0.0, %v3677
        %3679 = vmatprep.mubr.bf16.mxu0 %v2982
        %3680 = vmatmul.mubr.bf16.gmra.mrb[0].mxu0 %v2981
        %v3681 = vpop.f32.mrb[0].mxu0
        %v3682 = vadd.f32 0.0, %v3681
        %v3683 = vpop.f32.mrb[0].mxu0
        %v3684 = vadd.f32 0.0, %v3683
        %v3685 = vpop.f32.mrb[0].mxu0
        %v3686 = vadd.f32 0.0, %v3685
        %v3687 = vpop.f32.mrb[0].mxu0
        %v3688 = vadd.f32 0.0, %v3687
        %3689 = vmatprep.mubr.bf16.mxu0 %v2984
        %3690 = vmatmul.mubr.bf16.gmra.mrb[0].mxu0 %v2983
        %v3691 = vpop.f32.mrb[0].mxu0
        %v3692 = vadd.f32 0.0, %v3691
        %v3693 = vpop.f32.mrb[0].mxu0
        %v3694 = vadd.f32 0.0, %v3693
        %v3695 = vpop.f32.mrb[0].mxu0
        %v3696 = vadd.f32 0.0, %v3695
        %v3697 = vpop.f32.mrb[0].mxu0
        %v3698 = vadd.f32 0.0, %v3697
        %3699 = vmatprep.mubr.bf16.mxu0 %v2986
        %3700 = vmatmul.mubr.bf16.gmra.mrb[0].mxu0 %v2985
        %v3701 = vpop.f32.mrb[0].mxu0
        %v3702 = vadd.f32 0.0, %v3701
        %v3703 = vpop.f32.mrb[0].mxu0
        %v3704 = vadd.f32 0.0, %v3703
        %v3705 = vpop.f32.mrb[0].mxu0
        %v3706 = vadd.f32 0.0, %v3705
        %v3707 = vpop.f32.mrb[0].mxu0
        %v3708 = vadd.f32 0.0, %v3707
        %3709 = vmatprep.mubr.bf16.mxu0 %v2988
        %3710 = vmatmul.mubr.bf16.gmra.mrb[0].mxu0 %v2987
        %v3711 = vpop.f32.mrb[0].mxu0
        %v3712 = vadd.f32 0.0, %v3711
        %v3713 = vpop.f32.mrb[0].mxu0
        %v3714 = vadd.f32 0.0, %v3713
        %v3715 = vpop.f32.mrb[0].mxu0
        %v3716 = vadd.f32 0.0, %v3715
        %v3717 = vpop.f32.mrb[0].mxu0
        %v3718 = vadd.f32 0.0, %v3717
        %3719 = vmatprep.mubr.bf16.mxu0 %v2990
        %3720 = vmatmul.mubr.bf16.gmra.mrb[0].mxu0 %v2989
        %v3721 = vpop.f32.mrb[0].mxu0
        %v3722 = vadd.f32 0.0, %v3721
        %v3723 = vpop.f32.mrb[0].mxu0
        %v3724 = vadd.f32 0.0, %v3723
        %v3725 = vpop.f32.mrb[0].mxu0
        %v3726 = vadd.f32 0.0, %v3725
        %v3727 = vpop.f32.mrb[0].mxu0
        %v3728 = vadd.f32 0.0, %v3727
        %3729 = vmatprep.mubr.bf16.mxu0 %v2992
        %3730 = vmatmul.mubr.bf16.gmra.mrb[0].mxu0 %v2991
        %v3731 = vpop.f32.mrb[0].mxu0
        %v3732 = vadd.f32 0.0, %v3731
        %v3733 = vpop.f32.mrb[0].mxu0
        %v3734 = vadd.f32 0.0, %v3733
        %v3735 = vpop.f32.mrb[0].mxu0
        %v3736 = vadd.f32 0.0, %v3735
        %v3737 = vpop.f32.mrb[0].mxu0
        %v3738 = vadd.f32 0.0, %v3737
        %3739 = vmatprep.mubr.bf16.mxu0 %v2994
        %3740 = vmatmul.mubr.bf16.gmra.mrb[0].mxu0 %v2993
        %v3741 = vpop.f32.mrb[0].mxu0
        %v3742 = vadd.f32 0.0, %v3741
        %v3743 = vpop.f32.mrb[0].mxu0
        %v3744 = vadd.f32 0.0, %v3743
        %v3745 = vpop.f32.mrb[0].mxu0
        %v3746 = vadd.f32 0.0, %v3745
        %v3747 = vpop.f32.mrb[0].mxu0
        %v3748 = vadd.f32 0.0, %v3747
        %3749 = vdwg.mxu0
        %3750 = vmatprep.subr.bf16.mxu0 %v1622
        %3751 = vmatpush1.bf16.msra.mxu0 %v1621
        %3752 = vmatprep.subr.bf16.mxu0 %v1626
        %3753 = vmatpush1.bf16.msra.mxu0 %v1625
        %3754 = vmatprep.subr.bf16.mxu0 %v1630
        %3755 = vmatpush1.bf16.msra.mxu0 %v1629
        %3756 = vmatprep.subr.bf16.mxu0 %v1634
        %3757 = vmatpush1.bf16.msra.mxu0 %v1633
        %3758 = vmatprep.subr.bf16.mxu0 %v1638
        %3759 = vmatpush1.bf16.msra.mxu0 %v1637
        %3760 = vmatprep.subr.bf16.mxu0 %v1642
        %3761 = vmatpush1.bf16.msra.mxu0 %v1641
        %3762 = vmatprep.subr.bf16.mxu0 %v1646
        %3763 = vmatpush1.bf16.msra.mxu0 %v1645
        %3764 = vmatprep.subr.bf16.mxu0 %v1650
        %3765 = vmatpush1.bf16.msra.mxu0 %v1649
        %3766 = vmatprep.subr.bf16.mxu0 %v1654
        %3767 = vmatpush1.bf16.msra.mxu0 %v1653
        %3768 = vmatprep.subr.bf16.mxu0 %v1658
        %3769 = vmatpush1.bf16.msra.mxu0 %v1657
        %3770 = vmatprep.subr.bf16.mxu0 %v1662
        %3771 = vmatpush1.bf16.msra.mxu0 %v1661
        %3772 = vmatprep.subr.bf16.mxu0 %v1666
        %3773 = vmatpush1.bf16.msra.mxu0 %v1665
        %3774 = vmatprep.subr.bf16.mxu0 %v1670
        %3775 = vmatpush1.bf16.msra.mxu0 %v1669
        %3776 = vmatprep.subr.bf16.mxu0 %v1674
        %3777 = vmatpush1.bf16.msra.mxu0 %v1673
        %3778 = vmatprep.subr.bf16.mxu0 %v1678
        %3779 = vmatpush1.bf16.msra.mxu0 %v1677
        %3780 = vmatprep.subr.bf16.mxu0 %v1682
        %3781 = vmatpush1.bf16.msra.mxu0 %v1681
        %3782 = vmatprep.mubr.bf16.mxu0 %v2980
        %3783 = vmatmul.mubr.bf16.gmra.mrb[0].mxu0 %v2979
        %v3784 = vpop.f32.mrb[0].mxu0
        %v3785 = vadd.f32 0.0, %v3784
        %v3786 = vpop.f32.mrb[0].mxu0
        %v3787 = vadd.f32 0.0, %v3786
        %v3788 = vpop.f32.mrb[0].mxu0
        %v3789 = vadd.f32 0.0, %v3788
        %v3790 = vpop.f32.mrb[0].mxu0
        %v3791 = vadd.f32 0.0, %v3790
        %3792 = vmatprep.mubr.bf16.mxu0 %v2982
        %3793 = vmatmul.mubr.bf16.gmra.mrb[0].mxu0 %v2981
        %v3794 = vpop.f32.mrb[0].mxu0
        %v3795 = vadd.f32 0.0, %v3794
        %v3796 = vpop.f32.mrb[0].mxu0
        %v3797 = vadd.f32 0.0, %v3796
        %v3798 = vpop.f32.mrb[0].mxu0
        %v3799 = vadd.f32 0.0, %v3798
        %v3800 = vpop.f32.mrb[0].mxu0
        %v3801 = vadd.f32 0.0, %v3800
        %3802 = vmatprep.mubr.bf16.mxu0 %v2984
        %3803 = vmatmul.mubr.bf16.gmra.mrb[0].mxu0 %v2983
        %v3804 = vpop.f32.mrb[0].mxu0
        %v3805 = vadd.f32 0.0, %v3804
        %v3806 = vpop.f32.mrb[0].mxu0
        %v3807 = vadd.f32 0.0, %v3806
        %v3808 = vpop.f32.mrb[0].mxu0
        %v3809 = vadd.f32 0.0, %v3808
        %v3810 = vpop.f32.mrb[0].mxu0
        %v3811 = vadd.f32 0.0, %v3810
        %3812 = vmatprep.mubr.bf16.mxu0 %v2986
        %3813 = vmatmul.mubr.bf16.gmra.mrb[0].mxu0 %v2985
        %v3814 = vpop.f32.mrb[0].mxu0
        %v3815 = vadd.f32 0.0, %v3814
        %v3816 = vpop.f32.mrb[0].mxu0
        %v3817 = vadd.f32 0.0, %v3816
        %v3818 = vpop.f32.mrb[0].mxu0
        %v3819 = vadd.f32 0.0, %v3818
        %v3820 = vpop.f32.mrb[0].mxu0
        %v3821 = vadd.f32 0.0, %v3820
        %3822 = vmatprep.mubr.bf16.mxu0 %v2988
        %3823 = vmatmul.mubr.bf16.gmra.mrb[0].mxu0 %v2987
        %v3824 = vpop.f32.mrb[0].mxu0
        %v3825 = vadd.f32 0.0, %v3824
        %v3826 = vpop.f32.mrb[0].mxu0
        %v3827 = vadd.f32 0.0, %v3826
        %v3828 = vpop.f32.mrb[0].mxu0
        %v3829 = vadd.f32 0.0, %v3828
        %v3830 = vpop.f32.mrb[0].mxu0
        %v3831 = vadd.f32 0.0, %v3830
        %3832 = vmatprep.mubr.bf16.mxu0 %v2990
        %3833 = vmatmul.mubr.bf16.gmra.mrb[0].mxu0 %v2989
        %v3834 = vpop.f32.mrb[0].mxu0
        %v3835 = vadd.f32 0.0, %v3834
        %v3836 = vpop.f32.mrb[0].mxu0
        %v3837 = vadd.f32 0.0, %v3836
        %v3838 = vpop.f32.mrb[0].mxu0
        %v3839 = vadd.f32 0.0, %v3838
        %v3840 = vpop.f32.mrb[0].mxu0
        %v3841 = vadd.f32 0.0, %v3840
        %3842 = vmatprep.mubr.bf16.mxu0 %v2992
        %3843 = vmatmul.mubr.bf16.gmra.mrb[0].mxu0 %v2991
        %v3844 = vpop.f32.mrb[0].mxu0
        %v3845 = vadd.f32 0.0, %v3844
        %v3846 = vpop.f32.mrb[0].mxu0
        %v3847 = vadd.f32 0.0, %v3846
        %v3848 = vpop.f32.mrb[0].mxu0
        %v3849 = vadd.f32 0.0, %v3848
        %v3850 = vpop.f32.mrb[0].mxu0
        %v3851 = vadd.f32 0.0, %v3850
        %3852 = vmatprep.mubr.bf16.mxu0 %v2994
        %3853 = vmatmul.mubr.bf16.gmra.mrb[0].mxu0 %v2993
        %v3854 = vpop.f32.mrb[0].mxu0
        %v3855 = vadd.f32 0.0, %v3854
        %v3856 = vpop.f32.mrb[0].mxu0
        %v3857 = vadd.f32 0.0, %v3856
        %v3858 = vpop.f32.mrb[0].mxu0
        %v3859 = vadd.f32 0.0, %v3858
        %v3860 = vpop.f32.mrb[0].mxu0
        %v3861 = vadd.f32 0.0, %v3860
        %3862 = vdwg.mxu0
        %v3863 = vpack.c.bf16 %v3676, %v3672
        %v3864 = vpack.c.bf16 %v3678, %v3674
        %v3865 = vpack.c.bf16 %v3789, %v3785
        %v3866 = vpack.c.bf16 %v3791, %v3787
        %v3867 = vpack.c.bf16 %v3686, %v3682
        %v3868 = vpack.c.bf16 %v3688, %v3684
        %v3869 = vpack.c.bf16 %v3799, %v3795
        %v3870 = vpack.c.bf16 %v3801, %v3797
        %v3871 = vpack.c.bf16 %v3696, %v3692
        %v3872 = vpack.c.bf16 %v3698, %v3694
        %v3873 = vpack.c.bf16 %v3809, %v3805
        %v3874 = vpack.c.bf16 %v3811, %v3807
        %v3875 = vpack.c.bf16 %v3706, %v3702
        %v3876 = vpack.c.bf16 %v3708, %v3704
        %v3877 = vpack.c.bf16 %v3819, %v3815
        %v3878 = vpack.c.bf16 %v3821, %v3817
        %v3879 = vpack.c.bf16 %v3716, %v3712
        %v3880 = vpack.c.bf16 %v3718, %v3714
        %v3881 = vpack.c.bf16 %v3829, %v3825
        %v3882 = vpack.c.bf16 %v3831, %v3827
        %v3883 = vpack.c.bf16 %v3726, %v3722
        %v3884 = vpack.c.bf16 %v3728, %v3724
        %v3885 = vpack.c.bf16 %v3839, %v3835
        %v3886 = vpack.c.bf16 %v3841, %v3837
        %v3887 = vpack.c.bf16 %v3736, %v3732
        %v3888 = vpack.c.bf16 %v3738, %v3734
        %v3889 = vpack.c.bf16 %v3849, %v3845
        %v3890 = vpack.c.bf16 %v3851, %v3847
        %v3891 = vpack.c.bf16 %v3746, %v3742
        %v3892 = vpack.c.bf16 %v3748, %v3744
        %v3893 = vpack.c.bf16 %v3859, %v3855
        %v3894 = vpack.c.bf16 %v3861, %v3857
        %v3896 = vsel %vm3366, %v2863, 0
        %v3899 = vsel %vm3366, %v2864, 0
        %v3902 = vsel %vm3366, %v2865, 0
        %v3905 = vsel %vm3366, %v2866, 0
        %3907 = vmatprep.subr.bf16.mxu0 %v2804
        %3908 = vmatpush1.bf16.msra.mxu0 %v2803
        %3909 = vmatprep.subr.bf16.mxu0 %v2808
        %3910 = vmatpush1.bf16.msra.mxu0 %v2807
        %3911 = vmatprep.subr.bf16.mxu0 %v2812
        %3912 = vmatpush1.bf16.msra.mxu0 %v2811
        %3913 = vmatprep.subr.bf16.mxu0 %v2816
        %3914 = vmatpush1.bf16.msra.mxu0 %v2815
        %3915 = vmatprep.subr.bf16.mxu0 %v2820
        %3916 = vmatpush1.bf16.msra.mxu0 %v2819
        %3917 = vmatprep.subr.bf16.mxu0 %v2824
        %3918 = vmatpush1.bf16.msra.mxu0 %v2823
        %3919 = vmatprep.subr.bf16.mxu0 %v2828
        %3920 = vmatpush1.bf16.msra.mxu0 %v2827
        %3921 = vmatprep.subr.bf16.mxu0 %v2832
        %3922 = vmatpush1.bf16.msra.mxu0 %v2831
        %3923 = vmatprep.subr.bf16.mxu0 %v2836
        %3924 = vmatpush1.bf16.msra.mxu0 %v2835
        %3925 = vmatprep.subr.bf16.mxu0 %v2840
        %3926 = vmatpush1.bf16.msra.mxu0 %v2839
        %3927 = vmatprep.subr.bf16.mxu0 %v2844
        %3928 = vmatpush1.bf16.msra.mxu0 %v2843
        %3929 = vmatprep.subr.bf16.mxu0 %v2848
        %3930 = vmatpush1.bf16.msra.mxu0 %v2847
        %3931 = vmatprep.subr.bf16.mxu0 %v2852
        %3932 = vmatpush1.bf16.msra.mxu0 %v2851
        %3933 = vmatprep.subr.bf16.mxu0 %v2856
        %3934 = vmatpush1.bf16.msra.mxu0 %v2855
        %3935 = vmatprep.subr.bf16.mxu0 %v2860
        %3936 = vmatpush1.bf16.msra.mxu0 %v2859
        %3937 = vmatprep.subr.bf16.mxu0 %v3899
        %3938 = vmatpush1.bf16.msra.mxu0 %v3896
        %3939 = vmatprep.mubr.bf16.mxu0 %v3343
        %3940 = vmatmul.mubr.bf16.gmra.mrb[0].mxu0 %v3317
        %v3941 = vpop.f32.mrb[0].mxu0
        %v3942 = vadd.f32 0.0, %v3941
        %v3943 = vpop.f32.mrb[0].mxu0
        %v3944 = vadd.f32 0.0, %v3943
        %v3945 = vpop.f32.mrb[0].mxu0
        %v3946 = vadd.f32 0.0, %v3945
        %v3947 = vpop.f32.mrb[0].mxu0
        %v3948 = vadd.f32 0.0, %v3947
        %3949 = vmatprep.mubr.bf16.mxu0 %v3346
        %3950 = vmatmul.mubr.bf16.gmra.mrb[0].mxu0 %v3319
        %v3951 = vpop.f32.mrb[0].mxu0
        %v3952 = vadd.f32 0.0, %v3951
        %v3953 = vpop.f32.mrb[0].mxu0
        %v3954 = vadd.f32 0.0, %v3953
        %v3955 = vpop.f32.mrb[0].mxu0
        %v3956 = vadd.f32 0.0, %v3955
        %v3957 = vpop.f32.mrb[0].mxu0
        %v3958 = vadd.f32 0.0, %v3957
        %3959 = vmatprep.mubr.bf16.mxu0 %v3349
        %3960 = vmatmul.mubr.bf16.gmra.mrb[0].mxu0 %v3321
        %v3961 = vpop.f32.mrb[0].mxu0
        %v3962 = vadd.f32 0.0, %v3961
        %v3963 = vpop.f32.mrb[0].mxu0
        %v3964 = vadd.f32 0.0, %v3963
        %v3965 = vpop.f32.mrb[0].mxu0
        %v3966 = vadd.f32 0.0, %v3965
        %v3967 = vpop.f32.mrb[0].mxu0
        %v3968 = vadd.f32 0.0, %v3967
        %3969 = vmatprep.mubr.bf16.mxu0 %v3352
        %3970 = vmatmul.mubr.bf16.gmra.mrb[0].mxu0 %v3323
        %v3971 = vpop.f32.mrb[0].mxu0
        %v3972 = vadd.f32 0.0, %v3971
        %v3973 = vpop.f32.mrb[0].mxu0
        %v3974 = vadd.f32 0.0, %v3973
        %v3975 = vpop.f32.mrb[0].mxu0
        %v3976 = vadd.f32 0.0, %v3975
        %v3977 = vpop.f32.mrb[0].mxu0
        %v3978 = vadd.f32 0.0, %v3977
        %3979 = vmatprep.mubr.bf16.mxu0 %v3355
        %3980 = vmatmul.mubr.bf16.gmra.mrb[0].mxu0 %v3325
        %v3981 = vpop.f32.mrb[0].mxu0
        %v3982 = vadd.f32 0.0, %v3981
        %v3983 = vpop.f32.mrb[0].mxu0
        %v3984 = vadd.f32 0.0, %v3983
        %v3985 = vpop.f32.mrb[0].mxu0
        %v3986 = vadd.f32 0.0, %v3985
        %v3987 = vpop.f32.mrb[0].mxu0
        %v3988 = vadd.f32 0.0, %v3987
        %3989 = vmatprep.mubr.bf16.mxu0 %v3358
        %3990 = vmatmul.mubr.bf16.gmra.mrb[0].mxu0 %v3327
        %v3991 = vpop.f32.mrb[0].mxu0
        %v3992 = vadd.f32 0.0, %v3991
        %v3993 = vpop.f32.mrb[0].mxu0
        %v3994 = vadd.f32 0.0, %v3993
        %v3995 = vpop.f32.mrb[0].mxu0
        %v3996 = vadd.f32 0.0, %v3995
        %v3997 = vpop.f32.mrb[0].mxu0
        %v3998 = vadd.f32 0.0, %v3997
        %3999 = vmatprep.mubr.bf16.mxu0 %v3361
        %4000 = vmatmul.mubr.bf16.gmra.mrb[0].mxu0 %v3329
        %v4001 = vpop.f32.mrb[0].mxu0
        %v4002 = vadd.f32 0.0, %v4001
        %v4003 = vpop.f32.mrb[0].mxu0
        %v4004 = vadd.f32 0.0, %v4003
        %v4005 = vpop.f32.mrb[0].mxu0
        %v4006 = vadd.f32 0.0, %v4005
        %v4007 = vpop.f32.mrb[0].mxu0
        %v4008 = vadd.f32 0.0, %v4007
        %4009 = vmatprep.mubr.bf16.mxu0 %v3364
        %4010 = vmatmul.mubr.bf16.gmra.mrb[0].mxu0 %v3331
        %v4011 = vpop.f32.mrb[0].mxu0
        %v4012 = vadd.f32 0.0, %v4011
        %v4013 = vpop.f32.mrb[0].mxu0
        %v4014 = vadd.f32 0.0, %v4013
        %v4015 = vpop.f32.mrb[0].mxu0
        %v4016 = vadd.f32 0.0, %v4015
        %v4017 = vpop.f32.mrb[0].mxu0
        %v4018 = vadd.f32 0.0, %v4017
        %4019 = vdwg.mxu0
        %4020 = vmatprep.subr.bf16.mxu0 %v2806
        %4021 = vmatpush1.bf16.msra.mxu0 %v2805
        %4022 = vmatprep.subr.bf16.mxu0 %v2810
        %4023 = vmatpush1.bf16.msra.mxu0 %v2809
        %4024 = vmatprep.subr.bf16.mxu0 %v2814
        %4025 = vmatpush1.bf16.msra.mxu0 %v2813
        %4026 = vmatprep.subr.bf16.mxu0 %v2818
        %4027 = vmatpush1.bf16.msra.mxu0 %v2817
        %4028 = vmatprep.subr.bf16.mxu0 %v2822
        %4029 = vmatpush1.bf16.msra.mxu0 %v2821
        %4030 = vmatprep.subr.bf16.mxu0 %v2826
        %4031 = vmatpush1.bf16.msra.mxu0 %v2825
        %4032 = vmatprep.subr.bf16.mxu0 %v2830
        %4033 = vmatpush1.bf16.msra.mxu0 %v2829
        %4034 = vmatprep.subr.bf16.mxu0 %v2834
        %4035 = vmatpush1.bf16.msra.mxu0 %v2833
        %4036 = vmatprep.subr.bf16.mxu0 %v2838
        %4037 = vmatpush1.bf16.msra.mxu0 %v2837
        %4038 = vmatprep.subr.bf16.mxu0 %v2842
        %4039 = vmatpush1.bf16.msra.mxu0 %v2841
        %4040 = vmatprep.subr.bf16.mxu0 %v2846
        %4041 = vmatpush1.bf16.msra.mxu0 %v2845
        %4042 = vmatprep.subr.bf16.mxu0 %v2850
        %4043 = vmatpush1.bf16.msra.mxu0 %v2849
        %4044 = vmatprep.subr.bf16.mxu0 %v2854
        %4045 = vmatpush1.bf16.msra.mxu0 %v2853
        %4046 = vmatprep.subr.bf16.mxu0 %v2858
        %4047 = vmatpush1.bf16.msra.mxu0 %v2857
        %4048 = vmatprep.subr.bf16.mxu0 %v2862
        %4049 = vmatpush1.bf16.msra.mxu0 %v2861
        %4050 = vmatprep.subr.bf16.mxu0 %v3905
        %4051 = vmatpush1.bf16.msra.mxu0 %v3902
        %4052 = vmatprep.mubr.bf16.mxu0 %v3343
        %4053 = vmatmul.mubr.bf16.gmra.mrb[0].mxu0 %v3317
        %v4054 = vpop.f32.mrb[0].mxu0
        %v4055 = vadd.f32 0.0, %v4054
        %v4056 = vpop.f32.mrb[0].mxu0
        %v4057 = vadd.f32 0.0, %v4056
        %v4058 = vpop.f32.mrb[0].mxu0
        %v4059 = vadd.f32 0.0, %v4058
        %v4060 = vpop.f32.mrb[0].mxu0
        %v4061 = vadd.f32 0.0, %v4060
        %4062 = vmatprep.mubr.bf16.mxu0 %v3346
        %4063 = vmatmul.mubr.bf16.gmra.mrb[0].mxu0 %v3319
        %v4064 = vpop.f32.mrb[0].mxu0
        %v4065 = vadd.f32 0.0, %v4064
        %v4066 = vpop.f32.mrb[0].mxu0
        %v4067 = vadd.f32 0.0, %v4066
        %v4068 = vpop.f32.mrb[0].mxu0
        %v4069 = vadd.f32 0.0, %v4068
        %v4070 = vpop.f32.mrb[0].mxu0
        %v4071 = vadd.f32 0.0, %v4070
        %4072 = vmatprep.mubr.bf16.mxu0 %v3349
        %4073 = vmatmul.mubr.bf16.gmra.mrb[0].mxu0 %v3321
        %v4074 = vpop.f32.mrb[0].mxu0
        %v4075 = vadd.f32 0.0, %v4074
        %v4076 = vpop.f32.mrb[0].mxu0
        %v4077 = vadd.f32 0.0, %v4076
        %v4078 = vpop.f32.mrb[0].mxu0
        %v4079 = vadd.f32 0.0, %v4078
        %v4080 = vpop.f32.mrb[0].mxu0
        %v4081 = vadd.f32 0.0, %v4080
        %4082 = vmatprep.mubr.bf16.mxu0 %v3352
        %4083 = vmatmul.mubr.bf16.gmra.mrb[0].mxu0 %v3323
        %v4084 = vpop.f32.mrb[0].mxu0
        %v4085 = vadd.f32 0.0, %v4084
        %v4086 = vpop.f32.mrb[0].mxu0
        %v4087 = vadd.f32 0.0, %v4086
        %v4088 = vpop.f32.mrb[0].mxu0
        %v4089 = vadd.f32 0.0, %v4088
        %v4090 = vpop.f32.mrb[0].mxu0
        %v4091 = vadd.f32 0.0, %v4090
        %4092 = vmatprep.mubr.bf16.mxu0 %v3355
        %4093 = vmatmul.mubr.bf16.gmra.mrb[0].mxu0 %v3325
        %v4094 = vpop.f32.mrb[0].mxu0
        %v4095 = vadd.f32 0.0, %v4094
        %v4096 = vpop.f32.mrb[0].mxu0
        %v4097 = vadd.f32 0.0, %v4096
        %v4098 = vpop.f32.mrb[0].mxu0
        %v4099 = vadd.f32 0.0, %v4098
        %v4100 = vpop.f32.mrb[0].mxu0
        %v4101 = vadd.f32 0.0, %v4100
        %4102 = vmatprep.mubr.bf16.mxu0 %v3358
        %4103 = vmatmul.mubr.bf16.gmra.mrb[0].mxu0 %v3327
        %v4104 = vpop.f32.mrb[0].mxu0
        %v4105 = vadd.f32 0.0, %v4104
        %v4106 = vpop.f32.mrb[0].mxu0
        %v4107 = vadd.f32 0.0, %v4106
        %v4108 = vpop.f32.mrb[0].mxu0
        %v4109 = vadd.f32 0.0, %v4108
        %v4110 = vpop.f32.mrb[0].mxu0
        %v4111 = vadd.f32 0.0, %v4110
        %4112 = vmatprep.mubr.bf16.mxu0 %v3361
        %4113 = vmatmul.mubr.bf16.gmra.mrb[0].mxu0 %v3329
        %v4114 = vpop.f32.mrb[0].mxu0
        %v4115 = vadd.f32 0.0, %v4114
        %v4116 = vpop.f32.mrb[0].mxu0
        %v4117 = vadd.f32 0.0, %v4116
        %v4118 = vpop.f32.mrb[0].mxu0
        %v4119 = vadd.f32 0.0, %v4118
        %v4120 = vpop.f32.mrb[0].mxu0
        %v4121 = vadd.f32 0.0, %v4120
        %4122 = vmatprep.mubr.bf16.mxu0 %v3364
        %4123 = vmatmul.mubr.bf16.gmra.mrb[0].mxu0 %v3331
        %v4124 = vpop.f32.mrb[0].mxu0
        %v4125 = vadd.f32 0.0, %v4124
        %v4126 = vpop.f32.mrb[0].mxu0
        %v4127 = vadd.f32 0.0, %v4126
        %v4128 = vpop.f32.mrb[0].mxu0
        %v4129 = vadd.f32 0.0, %v4128
        %v4130 = vpop.f32.mrb[0].mxu0
        %v4131 = vadd.f32 0.0, %v4130
        %4132 = vdwg.mxu0
        %v4133 = vpack.c.bf16 %v3946, %v3942
        %v4134 = vpack.c.bf16 %v3948, %v3944
        %v4135 = vpack.c.bf16 %v4059, %v4055
        %v4136 = vpack.c.bf16 %v4061, %v4057
        %v4137 = vpack.c.bf16 %v3956, %v3952
        %v4138 = vpack.c.bf16 %v3958, %v3954
        %v4139 = vpack.c.bf16 %v4069, %v4065
        %v4140 = vpack.c.bf16 %v4071, %v4067
        %v4141 = vpack.c.bf16 %v3966, %v3962
        %v4142 = vpack.c.bf16 %v3968, %v3964
        %v4143 = vpack.c.bf16 %v4079, %v4075
        %v4144 = vpack.c.bf16 %v4081, %v4077
        %v4145 = vpack.c.bf16 %v3976, %v3972
        %v4146 = vpack.c.bf16 %v3978, %v3974
        %v4147 = vpack.c.bf16 %v4089, %v4085
        %v4148 = vpack.c.bf16 %v4091, %v4087
        %v4149 = vpack.c.bf16 %v3986, %v3982
        %v4150 = vpack.c.bf16 %v3988, %v3984
        %v4151 = vpack.c.bf16 %v4099, %v4095
        %v4152 = vpack.c.bf16 %v4101, %v4097
        %v4153 = vpack.c.bf16 %v3996, %v3992
        %v4154 = vpack.c.bf16 %v3998, %v3994
        %v4155 = vpack.c.bf16 %v4109, %v4105
        %v4156 = vpack.c.bf16 %v4111, %v4107
        %v4157 = vpack.c.bf16 %v4006, %v4002
        %v4158 = vpack.c.bf16 %v4008, %v4004
        %v4159 = vpack.c.bf16 %v4119, %v4115
        %v4160 = vpack.c.bf16 %v4121, %v4117
        %v4161 = vpack.c.bf16 %v4016, %v4012
        %v4162 = vpack.c.bf16 %v4018, %v4014
        %v4163 = vpack.c.bf16 %v4129, %v4125
        %v4164 = vpack.c.bf16 %v4131, %v4127
        %v4215 = vunpack.c.l.b16 %v229
        %v4216 = vunpack.c.h.b16 %v229
        %v4217 = vunpack.c.l.b16 %v230
        %v4218 = vunpack.c.h.b16 %v230
        %v4219 = vunpack.c.l.b16 %v231
        %v4220 = vunpack.c.h.b16 %v231
        %v4221 = vunpack.c.l.b16 %v232
        %v4222 = vunpack.c.h.b16 %v232
        %v4223 = vunpack.c.l.b16 %v233
        %v4224 = vunpack.c.h.b16 %v233
        %v4225 = vunpack.c.l.b16 %v234
        %v4226 = vunpack.c.h.b16 %v234
        %v4227 = vunpack.c.l.b16 %v235
        %v4228 = vunpack.c.h.b16 %v235
        %v4229 = vunpack.c.l.b16 %v236
        %v4230 = vunpack.c.h.b16 %v236
        %v4231 = vunpack.c.l.b16 %v237
        %v4232 = vunpack.c.h.b16 %v237
        %v4233 = vunpack.c.l.b16 %v238
        %v4234 = vunpack.c.h.b16 %v238
        %v4235 = vunpack.c.l.b16 %v239
        %v4236 = vunpack.c.h.b16 %v239
        %v4237 = vunpack.c.l.b16 %v240
        %v4238 = vunpack.c.h.b16 %v240
        %v4239 = vunpack.c.l.b16 %v241
        %v4240 = vunpack.c.h.b16 %v241
        %v4241 = vunpack.c.l.b16 %v242
        %v4242 = vunpack.c.h.b16 %v242
        %v4243 = vunpack.c.l.b16 %v243
        %v4244 = vunpack.c.h.b16 %v243
        %v4245 = vunpack.c.l.b16 %v244
        %v4246 = vunpack.c.h.b16 %v244
        %v4247 = vunpack.c.l.b16 %v245
        %v4248 = vunpack.c.h.b16 %v245
        %v4249 = vunpack.c.l.b16 %v246
        %v4250 = vunpack.c.h.b16 %v246
        %v4251 = vunpack.c.l.b16 %v247
        %v4252 = vunpack.c.h.b16 %v247
        %v4253 = vunpack.c.l.b16 %v248
        %v4254 = vunpack.c.h.b16 %v248
        %v4255 = vunpack.c.l.b16 %v249
        %v4256 = vunpack.c.h.b16 %v249
        %v4257 = vunpack.c.l.b16 %v250
        %v4258 = vunpack.c.h.b16 %v250
        %v4259 = vunpack.c.l.b16 %v251
        %v4260 = vunpack.c.h.b16 %v251
        %v4261 = vunpack.c.l.b16 %v252
        %v4262 = vunpack.c.h.b16 %v252
        %v4263 = vunpack.c.l.b16 %v253
        %v4264 = vunpack.c.h.b16 %v253
        %v4265 = vunpack.c.l.b16 %v254
        %v4266 = vunpack.c.h.b16 %v254
        %v4267 = vunpack.c.l.b16 %v255
        %v4268 = vunpack.c.h.b16 %v255
        %v4269 = vunpack.c.l.b16 %v256
        %v4270 = vunpack.c.h.b16 %v256
        %v4271 = vunpack.c.l.b16 %v257
        %v4272 = vunpack.c.h.b16 %v257
        %v4273 = vunpack.c.l.b16 %v258
        %v4274 = vunpack.c.h.b16 %v258
        %v4275 = vunpack.c.l.b16 %v259
        %v4276 = vunpack.c.h.b16 %v259
        %v4277 = vunpack.c.l.b16 %v260
        %v4278 = vunpack.c.h.b16 %v260
        %v4279 = vunpack.c.l.b16 %v261
        %v4280 = vunpack.c.h.b16 %v261
        %v4281 = vunpack.c.l.b16 %v262
        %v4282 = vunpack.c.h.b16 %v262
        %v4283 = vunpack.c.l.b16 %v263
        %v4284 = vunpack.c.h.b16 %v263
        %v4285 = vunpack.c.l.b16 %v264
        %v4286 = vunpack.c.h.b16 %v264
        %v4287 = vunpack.c.l.b16 %v265
        %v4288 = vunpack.c.h.b16 %v265
        %v4289 = vunpack.c.l.b16 %v266
        %v4290 = vunpack.c.h.b16 %v266
        %v4291 = vunpack.c.l.b16 %v267
        %v4292 = vunpack.c.h.b16 %v267
        %v4293 = vunpack.c.l.b16 %v268
        %v4294 = vunpack.c.h.b16 %v268
        %v4295 = vunpack.c.l.b16 %v269
        %v4296 = vunpack.c.h.b16 %v269
        %v4297 = vunpack.c.l.b16 %v270
        %v4298 = vunpack.c.h.b16 %v270
        %v4299 = vunpack.c.l.b16 %v271
        %v4300 = vunpack.c.h.b16 %v271
        %v4301 = vunpack.c.l.b16 %v272
        %v4302 = vunpack.c.h.b16 %v272
        %v4303 = vunpack.c.l.b16 %v273
        %v4304 = vunpack.c.h.b16 %v273
        %v4305 = vunpack.c.l.b16 %v274
        %v4306 = vunpack.c.h.b16 %v274
        %v4307 = vunpack.c.l.b16 %v275
        %v4308 = vunpack.c.h.b16 %v275
        %v4309 = vunpack.c.l.b16 %v276
        %v4310 = vunpack.c.h.b16 %v276
        %v4311 = vunpack.c.l.b16 %v277
        %v4312 = vunpack.c.h.b16 %v277
        %v4313 = vunpack.c.l.b16 %v278
        %v4314 = vunpack.c.h.b16 %v278
        %v4315 = vpack.c.b16 %v4217, %v4215
        %v4316 = vpack.c.b16 %v4218, %v4216
        %v4317 = vpack.c.b16 %v4221, %v4219
        %v4318 = vpack.c.b16 %v4222, %v4220
        %v4319 = vpack.c.b16 %v4225, %v4223
        %v4320 = vpack.c.b16 %v4226, %v4224
        %v4321 = vpack.c.b16 %v4229, %v4227
        %v4322 = vpack.c.b16 %v4230, %v4228
        %v4323 = vpack.c.b16 %v4233, %v4231
        %v4324 = vpack.c.b16 %v4234, %v4232
        %v4325 = vpack.c.b16 %v4237, %v4235
        %v4326 = vpack.c.b16 %v4238, %v4236
        %v4327 = vpack.c.b16 %v4241, %v4239
        %v4328 = vpack.c.b16 %v4242, %v4240
        %v4329 = vpack.c.b16 %v4245, %v4243
        %v4330 = vpack.c.b16 %v4246, %v4244
        %v4331 = vpack.c.b16 %v4249, %v4247
        %v4332 = vpack.c.b16 %v4250, %v4248
        %v4333 = vpack.c.b16 %v4253, %v4251
        %v4334 = vpack.c.b16 %v4254, %v4252
        %v4335 = vpack.c.b16 %v4257, %v4255
        %v4336 = vpack.c.b16 %v4258, %v4256
        %v4337 = vpack.c.b16 %v4261, %v4259
        %v4338 = vpack.c.b16 %v4262, %v4260
        %v4339 = vpack.c.b16 %v4265, %v4263
        %v4340 = vpack.c.b16 %v4266, %v4264
        %v4341 = vpack.c.b16 %v4269, %v4267
        %v4342 = vpack.c.b16 %v4270, %v4268
        %v4343 = vpack.c.b16 %v4273, %v4271
        %v4344 = vpack.c.b16 %v4274, %v4272
        %v4345 = vpack.c.b16 %v4277, %v4275
        %v4346 = vpack.c.b16 %v4278, %v4276
        %v4347 = vpack.c.b16 %v4281, %v4279
        %v4348 = vpack.c.b16 %v4282, %v4280
        %v4349 = vpack.c.b16 %v4285, %v4283
        %v4350 = vpack.c.b16 %v4286, %v4284
        %v4351 = vpack.c.b16 %v4289, %v4287
        %v4352 = vpack.c.b16 %v4290, %v4288
        %v4353 = vpack.c.b16 %v4293, %v4291
        %v4354 = vpack.c.b16 %v4294, %v4292
        %v4355 = vpack.c.b16 %v4297, %v4295
        %v4356 = vpack.c.b16 %v4298, %v4296
        %v4357 = vpack.c.b16 %v4301, %v4299
        %v4358 = vpack.c.b16 %v4302, %v4300
        %v4359 = vpack.c.b16 %v4305, %v4303
        %v4360 = vpack.c.b16 %v4306, %v4304
        %v4361 = vpack.c.b16 %v4309, %v4307
        %v4362 = vpack.c.b16 %v4310, %v4308
        %v4363 = vpack.c.b16 %v4313, %v4311
        %v4364 = vpack.c.b16 %v4314, %v4312
        %vm4415 = vcmask 130048
        %v4417 = vsel %vm4415, %v3866, 0
        %v4420 = vsel %vm4415, %v3870, 0
        %v4423 = vsel %vm4415, %v3874, 0
        %v4426 = vsel %vm4415, %v3878, 0
        %v4429 = vsel %vm4415, %v3882, 0
        %v4432 = vsel %vm4415, %v3886, 0
        %v4435 = vsel %vm4415, %v3890, 0
        %v4438 = vsel %vm4415, %v3894, 0
        %4440 = vmatprep.subr.bf16.mxu0 %v4316
        %4441 = vmatpush1.bf16.msra.mxu0 %v4315
        %4442 = vmatprep.subr.bf16.mxu0 %v4318
        %4443 = vmatpush1.bf16.msra.mxu0 %v4317
        %4444 = vmatprep.subr.bf16.mxu0 %v4320
        %4445 = vmatpush1.bf16.msra.mxu0 %v4319
        %4446 = vmatprep.subr.bf16.mxu0 %v4322
        %4447 = vmatpush1.bf16.msra.mxu0 %v4321
        %4448 = vmatprep.subr.bf16.mxu0 %v4324
        %4449 = vmatpush1.bf16.msra.mxu0 %v4323
        %4450 = vmatprep.subr.bf16.mxu0 %v4326
        %4451 = vmatpush1.bf16.msra.mxu0 %v4325
        %4452 = vmatprep.subr.bf16.mxu0 %v4328
        %4453 = vmatpush1.bf16.msra.mxu0 %v4327
        %4454 = vmatprep.subr.bf16.mxu0 %v4330
        %4455 = vmatpush1.bf16.msra.mxu0 %v4329
        %4456 = vmatprep.subr.bf16.mxu0 %v4332
        %4457 = vmatpush1.bf16.msra.mxu0 %v4331
        %4458 = vmatprep.subr.bf16.mxu0 %v4334
        %4459 = vmatpush1.bf16.msra.mxu0 %v4333
        %4460 = vmatprep.subr.bf16.mxu0 %v4336
        %4461 = vmatpush1.bf16.msra.mxu0 %v4335
        %4462 = vmatprep.subr.bf16.mxu0 %v4338
        %4463 = vmatpush1.bf16.msra.mxu0 %v4337
        %4464 = vmatprep.subr.bf16.mxu0 %v4340
        %4465 = vmatpush1.bf16.msra.mxu0 %v4339
        %4466 = vmatprep.subr.bf16.mxu0 %v4342
        %4467 = vmatpush1.bf16.msra.mxu0 %v4341
        %4468 = vmatprep.subr.bf16.mxu0 %v4344
        %4469 = vmatpush1.bf16.msra.mxu0 %v4343
        %4470 = vmatprep.subr.bf16.mxu0 %v4346
        %4471 = vmatpush1.bf16.msra.mxu0 %v4345
        %4472 = vmatprep.mubr.bf16.mxu0 %v3864
        %4473 = vmatmul.mubr.bf16.gmra.mrb[0].mxu0 %v3863
        %v4474 = vpop.f32.mrb[0].mxu0
        %v4475 = vadd.f32 0.0, %v4474
        %v4476 = vpop.f32.mrb[0].mxu0
        %v4477 = vadd.f32 0.0, %v4476
        %v4478 = vpop.f32.mrb[0].mxu0
        %v4479 = vadd.f32 0.0, %v4478
        %v4480 = vpop.f32.mrb[0].mxu0
        %v4481 = vadd.f32 0.0, %v4480
        %4482 = vmatprep.mubr.bf16.mxu0 %v3868
        %4483 = vmatmul.mubr.bf16.gmra.mrb[0].mxu0 %v3867
        %v4484 = vpop.f32.mrb[0].mxu0
        %v4485 = vadd.f32 0.0, %v4484
        %v4486 = vpop.f32.mrb[0].mxu0
        %v4487 = vadd.f32 0.0, %v4486
        %v4488 = vpop.f32.mrb[0].mxu0
        %v4489 = vadd.f32 0.0, %v4488
        %v4490 = vpop.f32.mrb[0].mxu0
        %v4491 = vadd.f32 0.0, %v4490
        %4492 = vmatprep.mubr.bf16.mxu0 %v3872
        %4493 = vmatmul.mubr.bf16.gmra.mrb[0].mxu0 %v3871
        %v4494 = vpop.f32.mrb[0].mxu0
        %v4495 = vadd.f32 0.0, %v4494
        %v4496 = vpop.f32.mrb[0].mxu0
        %v4497 = vadd.f32 0.0, %v4496
        %v4498 = vpop.f32.mrb[0].mxu0
        %v4499 = vadd.f32 0.0, %v4498
        %v4500 = vpop.f32.mrb[0].mxu0
        %v4501 = vadd.f32 0.0, %v4500
        %4502 = vmatprep.mubr.bf16.mxu0 %v3876
        %4503 = vmatmul.mubr.bf16.gmra.mrb[0].mxu0 %v3875
        %v4504 = vpop.f32.mrb[0].mxu0
        %v4505 = vadd.f32 0.0, %v4504
        %v4506 = vpop.f32.mrb[0].mxu0
        %v4507 = vadd.f32 0.0, %v4506
        %v4508 = vpop.f32.mrb[0].mxu0
        %v4509 = vadd.f32 0.0, %v4508
        %v4510 = vpop.f32.mrb[0].mxu0
        %v4511 = vadd.f32 0.0, %v4510
        %4512 = vmatprep.mubr.bf16.mxu0 %v3880
        %4513 = vmatmul.mubr.bf16.gmra.mrb[0].mxu0 %v3879
        %v4514 = vpop.f32.mrb[0].mxu0
        %v4515 = vadd.f32 0.0, %v4514
        %v4516 = vpop.f32.mrb[0].mxu0
        %v4517 = vadd.f32 0.0, %v4516
        %v4518 = vpop.f32.mrb[0].mxu0
        %v4519 = vadd.f32 0.0, %v4518
        %v4520 = vpop.f32.mrb[0].mxu0
        %v4521 = vadd.f32 0.0, %v4520
        %4522 = vmatprep.mubr.bf16.mxu0 %v3884
        %4523 = vmatmul.mubr.bf16.gmra.mrb[0].mxu0 %v3883
        %v4524 = vpop.f32.mrb[0].mxu0
        %v4525 = vadd.f32 0.0, %v4524
        %v4526 = vpop.f32.mrb[0].mxu0
        %v4527 = vadd.f32 0.0, %v4526
        %v4528 = vpop.f32.mrb[0].mxu0
        %v4529 = vadd.f32 0.0, %v4528
        %v4530 = vpop.f32.mrb[0].mxu0
        %v4531 = vadd.f32 0.0, %v4530
        %4532 = vmatprep.mubr.bf16.mxu0 %v3888
        %4533 = vmatmul.mubr.bf16.gmra.mrb[0].mxu0 %v3887
        %v4534 = vpop.f32.mrb[0].mxu0
        %v4535 = vadd.f32 0.0, %v4534
        %v4536 = vpop.f32.mrb[0].mxu0
        %v4537 = vadd.f32 0.0, %v4536
        %v4538 = vpop.f32.mrb[0].mxu0
        %v4539 = vadd.f32 0.0, %v4538
        %v4540 = vpop.f32.mrb[0].mxu0
        %v4541 = vadd.f32 0.0, %v4540
        %4542 = vmatprep.mubr.bf16.mxu0 %v3892
        %4543 = vmatmul.mubr.bf16.gmra.mrb[0].mxu0 %v3891
        %v4544 = vpop.f32.mrb[0].mxu0
        %v4545 = vadd.f32 0.0, %v4544
        %v4546 = vpop.f32.mrb[0].mxu0
        %v4547 = vadd.f32 0.0, %v4546
        %v4548 = vpop.f32.mrb[0].mxu0
        %v4549 = vadd.f32 0.0, %v4548
        %v4550 = vpop.f32.mrb[0].mxu0
        %v4551 = vadd.f32 0.0, %v4550
        %4552 = vdwg.mxu0
        %4553 = vmatprep.subr.bf16.mxu0 %v4348
        %4554 = vmatpush1.bf16.msra.mxu0 %v4347
        %4555 = vmatprep.subr.bf16.mxu0 %v4350
        %4556 = vmatpush1.bf16.msra.mxu0 %v4349
        %4557 = vmatprep.subr.bf16.mxu0 %v4352
        %4558 = vmatpush1.bf16.msra.mxu0 %v4351
        %4559 = vmatprep.subr.bf16.mxu0 %v4354
        %4560 = vmatpush1.bf16.msra.mxu0 %v4353
        %4561 = vmatprep.subr.bf16.mxu0 %v4356
        %4562 = vmatpush1.bf16.msra.mxu0 %v4355
        %4563 = vmatprep.subr.bf16.mxu0 %v4358
        %4564 = vmatpush1.bf16.msra.mxu0 %v4357
        %4565 = vmatprep.subr.bf16.mxu0 %v4360
        %4566 = vmatpush1.bf16.msra.mxu0 %v4359
        %4567 = vmatprep.subr.bf16.mxu0 %v4362
        %4568 = vmatpush1.bf16.msra.mxu0 %v4361
        %4569 = vmatprep.subr.bf16.mxu0 %v4364
        %4570 = vmatpush1.bf16.msra.mxu0 %v4363
        %4571 = vmatprep.subr.bf16.mxu0 0
        %4572 = vmatpush1.bf16.msra.mxu0 0
        %4573 = vmatprep.subr.bf16.mxu0 0
        %4574 = vmatpush1.bf16.msra.mxu0 0
        %4575 = vmatprep.subr.bf16.mxu0 0
        %4576 = vmatpush1.bf16.msra.mxu0 0
        %4577 = vmatprep.subr.bf16.mxu0 0
        %4578 = vmatpush1.bf16.msra.mxu0 0
        %4579 = vmatprep.subr.bf16.mxu0 0
        %4580 = vmatpush1.bf16.msra.mxu0 0
        %4581 = vmatprep.subr.bf16.mxu0 0
        %4582 = vmatpush1.bf16.msra.mxu0 0
        %4583 = vmatprep.subr.bf16.mxu0 0
        %4584 = vmatpush1.bf16.msra.mxu0 0
        %4585 = vmatprep.mubr.bf16.mxu0 %v4417
        %4586 = vmatmul.mubr.bf16.gmra.mrb[0].mxu0 %v3865
        %v4587 = vpop.f32.mrb[0].mxu0
        %v4588 = vadd.f32 %v4475, %v4587
        %v4589 = vpop.f32.mrb[0].mxu0
        %v4590 = vadd.f32 %v4477, %v4589
        %v4591 = vpop.f32.mrb[0].mxu0
        %v4592 = vadd.f32 %v4479, %v4591
        %v4593 = vpop.f32.mrb[0].mxu0
        %v4594 = vadd.f32 %v4481, %v4593
        %4595 = vmatprep.mubr.bf16.mxu0 %v4420
        %4596 = vmatmul.mubr.bf16.gmra.mrb[0].mxu0 %v3869
        %v4597 = vpop.f32.mrb[0].mxu0
        %v4598 = vadd.f32 %v4485, %v4597
        %v4599 = vpop.f32.mrb[0].mxu0
        %v4600 = vadd.f32 %v4487, %v4599
        %v4601 = vpop.f32.mrb[0].mxu0
        %v4602 = vadd.f32 %v4489, %v4601
        %v4603 = vpop.f32.mrb[0].mxu0
        %v4604 = vadd.f32 %v4491, %v4603
        %4605 = vmatprep.mubr.bf16.mxu0 %v4423
        %4606 = vmatmul.mubr.bf16.gmra.mrb[0].mxu0 %v3873
        %v4607 = vpop.f32.mrb[0].mxu0
        %v4608 = vadd.f32 %v4495, %v4607
        %v4609 = vpop.f32.mrb[0].mxu0
        %v4610 = vadd.f32 %v4497, %v4609
        %v4611 = vpop.f32.mrb[0].mxu0
        %v4612 = vadd.f32 %v4499, %v4611
        %v4613 = vpop.f32.mrb[0].mxu0
        %v4614 = vadd.f32 %v4501, %v4613
        %4615 = vmatprep.mubr.bf16.mxu0 %v4426
        %4616 = vmatmul.mubr.bf16.gmra.mrb[0].mxu0 %v3877
        %v4617 = vpop.f32.mrb[0].mxu0
        %v4618 = vadd.f32 %v4505, %v4617
        %v4619 = vpop.f32.mrb[0].mxu0
        %v4620 = vadd.f32 %v4507, %v4619
        %v4621 = vpop.f32.mrb[0].mxu0
        %v4622 = vadd.f32 %v4509, %v4621
        %v4623 = vpop.f32.mrb[0].mxu0
        %v4624 = vadd.f32 %v4511, %v4623
        %4625 = vmatprep.mubr.bf16.mxu0 %v4429
        %4626 = vmatmul.mubr.bf16.gmra.mrb[0].mxu0 %v3881
        %v4627 = vpop.f32.mrb[0].mxu0
        %v4628 = vadd.f32 %v4515, %v4627
        %v4629 = vpop.f32.mrb[0].mxu0
        %v4630 = vadd.f32 %v4517, %v4629
        %v4631 = vpop.f32.mrb[0].mxu0
        %v4632 = vadd.f32 %v4519, %v4631
        %v4633 = vpop.f32.mrb[0].mxu0
        %v4634 = vadd.f32 %v4521, %v4633
        %4635 = vmatprep.mubr.bf16.mxu0 %v4432
        %4636 = vmatmul.mubr.bf16.gmra.mrb[0].mxu0 %v3885
        %v4637 = vpop.f32.mrb[0].mxu0
        %v4638 = vadd.f32 %v4525, %v4637
        %v4639 = vpop.f32.mrb[0].mxu0
        %v4640 = vadd.f32 %v4527, %v4639
        %v4641 = vpop.f32.mrb[0].mxu0
        %v4642 = vadd.f32 %v4529, %v4641
        %v4643 = vpop.f32.mrb[0].mxu0
        %v4644 = vadd.f32 %v4531, %v4643
        %4645 = vmatprep.mubr.bf16.mxu0 %v4435
        %4646 = vmatmul.mubr.bf16.gmra.mrb[0].mxu0 %v3889
        %v4647 = vpop.f32.mrb[0].mxu0
        %v4648 = vadd.f32 %v4535, %v4647
        %v4649 = vpop.f32.mrb[0].mxu0
        %v4650 = vadd.f32 %v4537, %v4649
        %v4651 = vpop.f32.mrb[0].mxu0
        %v4652 = vadd.f32 %v4539, %v4651
        %v4653 = vpop.f32.mrb[0].mxu0
        %v4654 = vadd.f32 %v4541, %v4653
        %4655 = vmatprep.mubr.bf16.mxu0 %v4438
        %4656 = vmatmul.mubr.bf16.gmra.mrb[0].mxu0 %v3893
        %v4657 = vpop.f32.mrb[0].mxu0
        %v4658 = vadd.f32 %v4545, %v4657
        %v4659 = vpop.f32.mrb[0].mxu0
        %v4660 = vadd.f32 %v4547, %v4659
        %v4661 = vpop.f32.mrb[0].mxu0
        %v4662 = vadd.f32 %v4549, %v4661
        %v4663 = vpop.f32.mrb[0].mxu0
        %v4664 = vadd.f32 %v4551, %v4663
        %4665 = vdwg.mxu0
        %v4667 = vsel %vm4415, %v3240, 0
        %v4670 = vsel %vm4415, %v3244, 0
        %v4673 = vsel %vm4415, %v3248, 0
        %v4676 = vsel %vm4415, %v3252, 0
        %v4679 = vsel %vm4415, %v3256, 0
        %v4682 = vsel %vm4415, %v3260, 0
        %v4685 = vsel %vm4415, %v3264, 0
        %v4688 = vsel %vm4415, %v3268, 0
        %4690 = vmatprep.subr.bf16.mxu0 %v4316
        %4691 = vmatpush1.bf16.msra.mxu0 %v4315
        %4692 = vmatprep.subr.bf16.mxu0 %v4318
        %4693 = vmatpush1.bf16.msra.mxu0 %v4317
        %4694 = vmatprep.subr.bf16.mxu0 %v4320
        %4695 = vmatpush1.bf16.msra.mxu0 %v4319
        %4696 = vmatprep.subr.bf16.mxu0 %v4322
        %4697 = vmatpush1.bf16.msra.mxu0 %v4321
        %4698 = vmatprep.subr.bf16.mxu0 %v4324
        %4699 = vmatpush1.bf16.msra.mxu0 %v4323
        %4700 = vmatprep.subr.bf16.mxu0 %v4326
        %4701 = vmatpush1.bf16.msra.mxu0 %v4325
        %4702 = vmatprep.subr.bf16.mxu0 %v4328
        %4703 = vmatpush1.bf16.msra.mxu0 %v4327
        %4704 = vmatprep.subr.bf16.mxu0 %v4330
        %4705 = vmatpush1.bf16.msra.mxu0 %v4329
        %4706 = vmatprep.subr.bf16.mxu0 %v4332
        %4707 = vmatpush1.bf16.msra.mxu0 %v4331
        %4708 = vmatprep.subr.bf16.mxu0 %v4334
        %4709 = vmatpush1.bf16.msra.mxu0 %v4333
        %4710 = vmatprep.subr.bf16.mxu0 %v4336
        %4711 = vmatpush1.bf16.msra.mxu0 %v4335
        %4712 = vmatprep.subr.bf16.mxu0 %v4338
        %4713 = vmatpush1.bf16.msra.mxu0 %v4337
        %4714 = vmatprep.subr.bf16.mxu0 %v4340
        %4715 = vmatpush1.bf16.msra.mxu0 %v4339
        %4716 = vmatprep.subr.bf16.mxu0 %v4342
        %4717 = vmatpush1.bf16.msra.mxu0 %v4341
        %4718 = vmatprep.subr.bf16.mxu0 %v4344
        %4719 = vmatpush1.bf16.msra.mxu0 %v4343
        %4720 = vmatprep.subr.bf16.mxu0 %v4346
        %4721 = vmatpush1.bf16.msra.mxu0 %v4345
        %4722 = vmatprep.mubr.bf16.mxu0 %v3238
        %4723 = vmatmul.mubr.bf16.gmra.mrb[0].mxu0 %v3237
        %v4724 = vpop.f32.mrb[0].mxu0
        %v4725 = vadd.f32 %v4588, %v4724
        %v4726 = vpop.f32.mrb[0].mxu0
        %v4727 = vadd.f32 %v4590, %v4726
        %v4728 = vpop.f32.mrb[0].mxu0
        %v4729 = vadd.f32 %v4592, %v4728
        %v4730 = vpop.f32.mrb[0].mxu0
        %v4731 = vadd.f32 %v4594, %v4730
        %4732 = vmatprep.mubr.bf16.mxu0 %v3242
        %4733 = vmatmul.mubr.bf16.gmra.mrb[0].mxu0 %v3241
        %v4734 = vpop.f32.mrb[0].mxu0
        %v4735 = vadd.f32 %v4598, %v4734
        %v4736 = vpop.f32.mrb[0].mxu0
        %v4737 = vadd.f32 %v4600, %v4736
        %v4738 = vpop.f32.mrb[0].mxu0
        %v4739 = vadd.f32 %v4602, %v4738
        %v4740 = vpop.f32.mrb[0].mxu0
        %v4741 = vadd.f32 %v4604, %v4740
        %4742 = vmatprep.mubr.bf16.mxu0 %v3246
        %4743 = vmatmul.mubr.bf16.gmra.mrb[0].mxu0 %v3245
        %v4744 = vpop.f32.mrb[0].mxu0
        %v4745 = vadd.f32 %v4608, %v4744
        %v4746 = vpop.f32.mrb[0].mxu0
        %v4747 = vadd.f32 %v4610, %v4746
        %v4748 = vpop.f32.mrb[0].mxu0
        %v4749 = vadd.f32 %v4612, %v4748
        %v4750 = vpop.f32.mrb[0].mxu0
        %v4751 = vadd.f32 %v4614, %v4750
        %4752 = vmatprep.mubr.bf16.mxu0 %v3250
        %4753 = vmatmul.mubr.bf16.gmra.mrb[0].mxu0 %v3249
        %v4754 = vpop.f32.mrb[0].mxu0
        %v4755 = vadd.f32 %v4618, %v4754
        %v4756 = vpop.f32.mrb[0].mxu0
        %v4757 = vadd.f32 %v4620, %v4756
        %v4758 = vpop.f32.mrb[0].mxu0
        %v4759 = vadd.f32 %v4622, %v4758
        %v4760 = vpop.f32.mrb[0].mxu0
        %v4761 = vadd.f32 %v4624, %v4760
        %4762 = vmatprep.mubr.bf16.mxu0 %v3254
        %4763 = vmatmul.mubr.bf16.gmra.mrb[0].mxu0 %v3253
        %v4764 = vpop.f32.mrb[0].mxu0
        %v4765 = vadd.f32 %v4628, %v4764
        %v4766 = vpop.f32.mrb[0].mxu0
        %v4767 = vadd.f32 %v4630, %v4766
        %v4768 = vpop.f32.mrb[0].mxu0
        %v4769 = vadd.f32 %v4632, %v4768
        %v4770 = vpop.f32.mrb[0].mxu0
        %v4771 = vadd.f32 %v4634, %v4770
        %4772 = vmatprep.mubr.bf16.mxu0 %v3258
        %4773 = vmatmul.mubr.bf16.gmra.mrb[0].mxu0 %v3257
        %v4774 = vpop.f32.mrb[0].mxu0
        %v4775 = vadd.f32 %v4638, %v4774
        %v4776 = vpop.f32.mrb[0].mxu0
        %v4777 = vadd.f32 %v4640, %v4776
        %v4778 = vpop.f32.mrb[0].mxu0
        %v4779 = vadd.f32 %v4642, %v4778
        %v4780 = vpop.f32.mrb[0].mxu0
        %v4781 = vadd.f32 %v4644, %v4780
        %4782 = vmatprep.mubr.bf16.mxu0 %v3262
        %4783 = vmatmul.mubr.bf16.gmra.mrb[0].mxu0 %v3261
        %v4784 = vpop.f32.mrb[0].mxu0
        %v4785 = vadd.f32 %v4648, %v4784
        %v4786 = vpop.f32.mrb[0].mxu0
        %v4787 = vadd.f32 %v4650, %v4786
        %v4788 = vpop.f32.mrb[0].mxu0
        %v4789 = vadd.f32 %v4652, %v4788
        %v4790 = vpop.f32.mrb[0].mxu0
        %v4791 = vadd.f32 %v4654, %v4790
        %4792 = vmatprep.mubr.bf16.mxu0 %v3266
        %4793 = vmatmul.mubr.bf16.gmra.mrb[0].mxu0 %v3265
        %v4794 = vpop.f32.mrb[0].mxu0
        %v4795 = vadd.f32 %v4658, %v4794
        %v4796 = vpop.f32.mrb[0].mxu0
        %v4797 = vadd.f32 %v4660, %v4796
        %v4798 = vpop.f32.mrb[0].mxu0
        %v4799 = vadd.f32 %v4662, %v4798
        %v4800 = vpop.f32.mrb[0].mxu0
        %v4801 = vadd.f32 %v4664, %v4800
        %4802 = vdwg.mxu0
        %4803 = vmatprep.subr.bf16.mxu0 %v4348
        %4804 = vmatpush1.bf16.msra.mxu0 %v4347
        %4805 = vmatprep.subr.bf16.mxu0 %v4350
        %4806 = vmatpush1.bf16.msra.mxu0 %v4349
        %4807 = vmatprep.subr.bf16.mxu0 %v4352
        %4808 = vmatpush1.bf16.msra.mxu0 %v4351
        %4809 = vmatprep.subr.bf16.mxu0 %v4354
        %4810 = vmatpush1.bf16.msra.mxu0 %v4353
        %4811 = vmatprep.subr.bf16.mxu0 %v4356
        %4812 = vmatpush1.bf16.msra.mxu0 %v4355
        %4813 = vmatprep.subr.bf16.mxu0 %v4358
        %4814 = vmatpush1.bf16.msra.mxu0 %v4357
        %4815 = vmatprep.subr.bf16.mxu0 %v4360
        %4816 = vmatpush1.bf16.msra.mxu0 %v4359
        %4817 = vmatprep.subr.bf16.mxu0 %v4362
        %4818 = vmatpush1.bf16.msra.mxu0 %v4361
        %4819 = vmatprep.subr.bf16.mxu0 %v4364
        %4820 = vmatpush1.bf16.msra.mxu0 %v4363
        %4821 = vmatprep.subr.bf16.mxu0 0
        %4822 = vmatpush1.bf16.msra.mxu0 0
        %4823 = vmatprep.subr.bf16.mxu0 0
        %4824 = vmatpush1.bf16.msra.mxu0 0
        %4825 = vmatprep.subr.bf16.mxu0 0
        %4826 = vmatpush1.bf16.msra.mxu0 0
        %4827 = vmatprep.subr.bf16.mxu0 0
        %4828 = vmatpush1.bf16.msra.mxu0 0
        %4829 = vmatprep.subr.bf16.mxu0 0
        %4830 = vmatpush1.bf16.msra.mxu0 0
        %4831 = vmatprep.subr.bf16.mxu0 0
        %4832 = vmatpush1.bf16.msra.mxu0 0
        %4833 = vmatprep.subr.bf16.mxu0 0
        %4834 = vmatpush1.bf16.msra.mxu0 0
        %4835 = vmatprep.mubr.bf16.mxu0 %v4667
        %4836 = vmatmul.mubr.bf16.gmra.mrb[0].mxu0 %v3239
        %v4837 = vpop.f32.mrb[0].mxu0
        %v4838 = vadd.f32 %v4725, %v4837
        %v4839 = vpop.f32.mrb[0].mxu0
        %v4840 = vadd.f32 %v4727, %v4839
        %v4841 = vpop.f32.mrb[0].mxu0
        %v4842 = vadd.f32 %v4729, %v4841
        %v4843 = vpop.f32.mrb[0].mxu0
        %v4844 = vadd.f32 %v4731, %v4843
        %4845 = vmatprep.mubr.bf16.mxu0 %v4670
        %4846 = vmatmul.mubr.bf16.gmra.mrb[0].mxu0 %v3243
        %v4847 = vpop.f32.mrb[0].mxu0
        %v4848 = vadd.f32 %v4735, %v4847
        %v4849 = vpop.f32.mrb[0].mxu0
        %v4850 = vadd.f32 %v4737, %v4849
        %v4851 = vpop.f32.mrb[0].mxu0
        %v4852 = vadd.f32 %v4739, %v4851
        %v4853 = vpop.f32.mrb[0].mxu0
        %v4854 = vadd.f32 %v4741, %v4853
        %4855 = vmatprep.mubr.bf16.mxu0 %v4673
        %4856 = vmatmul.mubr.bf16.gmra.mrb[0].mxu0 %v3247
        %v4857 = vpop.f32.mrb[0].mxu0
        %v4858 = vadd.f32 %v4745, %v4857
        %v4859 = vpop.f32.mrb[0].mxu0
        %v4860 = vadd.f32 %v4747, %v4859
        %v4861 = vpop.f32.mrb[0].mxu0
        %v4862 = vadd.f32 %v4749, %v4861
        %v4863 = vpop.f32.mrb[0].mxu0
        %v4864 = vadd.f32 %v4751, %v4863
        %4865 = vmatprep.mubr.bf16.mxu0 %v4676
        %4866 = vmatmul.mubr.bf16.gmra.mrb[0].mxu0 %v3251
        %v4867 = vpop.f32.mrb[0].mxu0
        %v4868 = vadd.f32 %v4755, %v4867
        %v4869 = vpop.f32.mrb[0].mxu0
        %v4870 = vadd.f32 %v4757, %v4869
        %v4871 = vpop.f32.mrb[0].mxu0
        %v4872 = vadd.f32 %v4759, %v4871
        %v4873 = vpop.f32.mrb[0].mxu0
        %v4874 = vadd.f32 %v4761, %v4873
        %4875 = vmatprep.mubr.bf16.mxu0 %v4679
        %4876 = vmatmul.mubr.bf16.gmra.mrb[0].mxu0 %v3255
        %v4877 = vpop.f32.mrb[0].mxu0
        %v4878 = vadd.f32 %v4765, %v4877
        %v4879 = vpop.f32.mrb[0].mxu0
        %v4880 = vadd.f32 %v4767, %v4879
        %v4881 = vpop.f32.mrb[0].mxu0
        %v4882 = vadd.f32 %v4769, %v4881
        %v4883 = vpop.f32.mrb[0].mxu0
        %v4884 = vadd.f32 %v4771, %v4883
        %4885 = vmatprep.mubr.bf16.mxu0 %v4682
        %4886 = vmatmul.mubr.bf16.gmra.mrb[0].mxu0 %v3259
        %v4887 = vpop.f32.mrb[0].mxu0
        %v4888 = vadd.f32 %v4775, %v4887
        %v4889 = vpop.f32.mrb[0].mxu0
        %v4890 = vadd.f32 %v4777, %v4889
        %v4891 = vpop.f32.mrb[0].mxu0
        %v4892 = vadd.f32 %v4779, %v4891
        %v4893 = vpop.f32.mrb[0].mxu0
        %v4894 = vadd.f32 %v4781, %v4893
        %4895 = vmatprep.mubr.bf16.mxu0 %v4685
        %4896 = vmatmul.mubr.bf16.gmra.mrb[0].mxu0 %v3263
        %v4897 = vpop.f32.mrb[0].mxu0
        %v4898 = vadd.f32 %v4785, %v4897
        %v4899 = vpop.f32.mrb[0].mxu0
        %v4900 = vadd.f32 %v4787, %v4899
        %v4901 = vpop.f32.mrb[0].mxu0
        %v4902 = vadd.f32 %v4789, %v4901
        %v4903 = vpop.f32.mrb[0].mxu0
        %v4904 = vadd.f32 %v4791, %v4903
        %4905 = vmatprep.mubr.bf16.mxu0 %v4688
        %4906 = vmatmul.mubr.bf16.gmra.mrb[0].mxu0 %v3267
        %v4907 = vpop.f32.mrb[0].mxu0
        %v4908 = vadd.f32 %v4795, %v4907
        %v4909 = vpop.f32.mrb[0].mxu0
        %v4910 = vadd.f32 %v4797, %v4909
        %v4911 = vpop.f32.mrb[0].mxu0
        %v4912 = vadd.f32 %v4799, %v4911
        %v4913 = vpop.f32.mrb[0].mxu0
        %v4914 = vadd.f32 %v4801, %v4913
        %4915 = vdwg.mxu0
        %v4917 = vsel %vm4415, %v4136, 0
        %v4920 = vsel %vm4415, %v4140, 0
        %v4923 = vsel %vm4415, %v4144, 0
        %v4926 = vsel %vm4415, %v4148, 0
        %v4929 = vsel %vm4415, %v4152, 0
        %v4932 = vsel %vm4415, %v4156, 0
        %v4935 = vsel %vm4415, %v4160, 0
        %v4938 = vsel %vm4415, %v4164, 0
        %4940 = vmatprep.subr.bf16.mxu0 %v4316
        %4941 = vmatpush1.bf16.msra.mxu0 %v4315
        %4942 = vmatprep.subr.bf16.mxu0 %v4318
        %4943 = vmatpush1.bf16.msra.mxu0 %v4317
        %4944 = vmatprep.subr.bf16.mxu0 %v4320
        %4945 = vmatpush1.bf16.msra.mxu0 %v4319
        %4946 = vmatprep.subr.bf16.mxu0 %v4322
        %4947 = vmatpush1.bf16.msra.mxu0 %v4321
        %4948 = vmatprep.subr.bf16.mxu0 %v4324
        %4949 = vmatpush1.bf16.msra.mxu0 %v4323
        %4950 = vmatprep.subr.bf16.mxu0 %v4326
        %4951 = vmatpush1.bf16.msra.mxu0 %v4325
        %4952 = vmatprep.subr.bf16.mxu0 %v4328
        %4953 = vmatpush1.bf16.msra.mxu0 %v4327
        %4954 = vmatprep.subr.bf16.mxu0 %v4330
        %4955 = vmatpush1.bf16.msra.mxu0 %v4329
        %4956 = vmatprep.subr.bf16.mxu0 %v4332
        %4957 = vmatpush1.bf16.msra.mxu0 %v4331
        %4958 = vmatprep.subr.bf16.mxu0 %v4334
        %4959 = vmatpush1.bf16.msra.mxu0 %v4333
        %4960 = vmatprep.subr.bf16.mxu0 %v4336
        %4961 = vmatpush1.bf16.msra.mxu0 %v4335
        %4962 = vmatprep.subr.bf16.mxu0 %v4338
        %4963 = vmatpush1.bf16.msra.mxu0 %v4337
        %4964 = vmatprep.subr.bf16.mxu0 %v4340
        %4965 = vmatpush1.bf16.msra.mxu0 %v4339
        %4966 = vmatprep.subr.bf16.mxu0 %v4342
        %4967 = vmatpush1.bf16.msra.mxu0 %v4341
        %4968 = vmatprep.subr.bf16.mxu0 %v4344
        %4969 = vmatpush1.bf16.msra.mxu0 %v4343
        %4970 = vmatprep.subr.bf16.mxu0 %v4346
        %4971 = vmatpush1.bf16.msra.mxu0 %v4345
        %4972 = vmatprep.mubr.bf16.mxu0 %v4134
        %4973 = vmatmul.mubr.bf16.gmra.mrb[0].mxu0 %v4133
        %v4974 = vpop.f32.mrb[0].mxu0
        %v4975 = vadd.f32 0.0, %v4974
        %v4976 = vpop.f32.mrb[0].mxu0
        %v4977 = vadd.f32 0.0, %v4976
        %v4978 = vpop.f32.mrb[0].mxu0
        %v4979 = vadd.f32 0.0, %v4978
        %v4980 = vpop.f32.mrb[0].mxu0
        %v4981 = vadd.f32 0.0, %v4980
        %4982 = vmatprep.mubr.bf16.mxu0 %v4138
        %4983 = vmatmul.mubr.bf16.gmra.mrb[0].mxu0 %v4137
        %v4984 = vpop.f32.mrb[0].mxu0
        %v4985 = vadd.f32 0.0, %v4984
        %v4986 = vpop.f32.mrb[0].mxu0
        %v4987 = vadd.f32 0.0, %v4986
        %v4988 = vpop.f32.mrb[0].mxu0
        %v4989 = vadd.f32 0.0, %v4988
        %v4990 = vpop.f32.mrb[0].mxu0
        %v4991 = vadd.f32 0.0, %v4990
        %4992 = vmatprep.mubr.bf16.mxu0 %v4142
        %4993 = vmatmul.mubr.bf16.gmra.mrb[0].mxu0 %v4141
        %v4994 = vpop.f32.mrb[0].mxu0
        %v4995 = vadd.f32 0.0, %v4994
        %v4996 = vpop.f32.mrb[0].mxu0
        %v4997 = vadd.f32 0.0, %v4996
        %v4998 = vpop.f32.mrb[0].mxu0
        %v4999 = vadd.f32 0.0, %v4998
        %v5000 = vpop.f32.mrb[0].mxu0
        %v5001 = vadd.f32 0.0, %v5000
        %5002 = vmatprep.mubr.bf16.mxu0 %v4146
        %5003 = vmatmul.mubr.bf16.gmra.mrb[0].mxu0 %v4145
        %v5004 = vpop.f32.mrb[0].mxu0
        %v5005 = vadd.f32 0.0, %v5004
        %v5006 = vpop.f32.mrb[0].mxu0
        %v5007 = vadd.f32 0.0, %v5006
        %v5008 = vpop.f32.mrb[0].mxu0
        %v5009 = vadd.f32 0.0, %v5008
        %v5010 = vpop.f32.mrb[0].mxu0
        %v5011 = vadd.f32 0.0, %v5010
        %5012 = vmatprep.mubr.bf16.mxu0 %v4150
        %5013 = vmatmul.mubr.bf16.gmra.mrb[0].mxu0 %v4149
        %v5014 = vpop.f32.mrb[0].mxu0
        %v5015 = vadd.f32 0.0, %v5014
        %v5016 = vpop.f32.mrb[0].mxu0
        %v5017 = vadd.f32 0.0, %v5016
        %v5018 = vpop.f32.mrb[0].mxu0
        %v5019 = vadd.f32 0.0, %v5018
        %v5020 = vpop.f32.mrb[0].mxu0
        %v5021 = vadd.f32 0.0, %v5020
        %5022 = vmatprep.mubr.bf16.mxu0 %v4154
        %5023 = vmatmul.mubr.bf16.gmra.mrb[0].mxu0 %v4153
        %v5024 = vpop.f32.mrb[0].mxu0
        %v5025 = vadd.f32 0.0, %v5024
        %v5026 = vpop.f32.mrb[0].mxu0
        %v5027 = vadd.f32 0.0, %v5026
        %v5028 = vpop.f32.mrb[0].mxu0
        %v5029 = vadd.f32 0.0, %v5028
        %v5030 = vpop.f32.mrb[0].mxu0
        %v5031 = vadd.f32 0.0, %v5030
        %5032 = vmatprep.mubr.bf16.mxu0 %v4158
        %5033 = vmatmul.mubr.bf16.gmra.mrb[0].mxu0 %v4157
        %v5034 = vpop.f32.mrb[0].mxu0
        %v5035 = vadd.f32 0.0, %v5034
        %v5036 = vpop.f32.mrb[0].mxu0
        %v5037 = vadd.f32 0.0, %v5036
        %v5038 = vpop.f32.mrb[0].mxu0
        %v5039 = vadd.f32 0.0, %v5038
        %v5040 = vpop.f32.mrb[0].mxu0
        %v5041 = vadd.f32 0.0, %v5040
        %5042 = vmatprep.mubr.bf16.mxu0 %v4162
        %5043 = vmatmul.mubr.bf16.gmra.mrb[0].mxu0 %v4161
        %v5044 = vpop.f32.mrb[0].mxu0
        %v5045 = vadd.f32 0.0, %v5044
        %v5046 = vpop.f32.mrb[0].mxu0
        %v5047 = vadd.f32 0.0, %v5046
        %v5048 = vpop.f32.mrb[0].mxu0
        %v5049 = vadd.f32 0.0, %v5048
        %v5050 = vpop.f32.mrb[0].mxu0
        %v5051 = vadd.f32 0.0, %v5050
        %5052 = vdwg.mxu0
        %5053 = vmatprep.subr.bf16.mxu0 %v4348
        %5054 = vmatpush1.bf16.msra.mxu0 %v4347
        %5055 = vmatprep.subr.bf16.mxu0 %v4350
        %5056 = vmatpush1.bf16.msra.mxu0 %v4349
        %5057 = vmatprep.subr.bf16.mxu0 %v4352
        %5058 = vmatpush1.bf16.msra.mxu0 %v4351
        %5059 = vmatprep.subr.bf16.mxu0 %v4354
        %5060 = vmatpush1.bf16.msra.mxu0 %v4353
        %5061 = vmatprep.subr.bf16.mxu0 %v4356
        %5062 = vmatpush1.bf16.msra.mxu0 %v4355
        %5063 = vmatprep.subr.bf16.mxu0 %v4358
        %5064 = vmatpush1.bf16.msra.mxu0 %v4357
        %5065 = vmatprep.subr.bf16.mxu0 %v4360
        %5066 = vmatpush1.bf16.msra.mxu0 %v4359
        %5067 = vmatprep.subr.bf16.mxu0 %v4362
        %5068 = vmatpush1.bf16.msra.mxu0 %v4361
        %5069 = vmatprep.subr.bf16.mxu0 %v4364
        %5070 = vmatpush1.bf16.msra.mxu0 %v4363
        %5071 = vmatprep.subr.bf16.mxu0 0
        %5072 = vmatpush1.bf16.msra.mxu0 0
        %5073 = vmatprep.subr.bf16.mxu0 0
        %5074 = vmatpush1.bf16.msra.mxu0 0
        %5075 = vmatprep.subr.bf16.mxu0 0
        %5076 = vmatpush1.bf16.msra.mxu0 0
        %5077 = vmatprep.subr.bf16.mxu0 0
        %5078 = vmatpush1.bf16.msra.mxu0 0
        %5079 = vmatprep.subr.bf16.mxu0 0
        %5080 = vmatpush1.bf16.msra.mxu0 0
        %5081 = vmatprep.subr.bf16.mxu0 0
        %5082 = vmatpush1.bf16.msra.mxu0 0
        %5083 = vmatprep.subr.bf16.mxu0 0
        %5084 = vmatpush1.bf16.msra.mxu0 0
        %5085 = vmatprep.mubr.bf16.mxu0 %v4917
        %5086 = vmatmul.mubr.bf16.gmra.mrb[0].mxu0 %v4135
        %v5087 = vpop.f32.mrb[0].mxu0
        %v5088 = vadd.f32 %v4975, %v5087
        %v5089 = vpop.f32.mrb[0].mxu0
        %v5090 = vadd.f32 %v4977, %v5089
        %v5091 = vpop.f32.mrb[0].mxu0
        %v5092 = vadd.f32 %v4979, %v5091
        %v5093 = vpop.f32.mrb[0].mxu0
        %v5094 = vadd.f32 %v4981, %v5093
        %5095 = vmatprep.mubr.bf16.mxu0 %v4920
        %5096 = vmatmul.mubr.bf16.gmra.mrb[0].mxu0 %v4139
        %v5097 = vpop.f32.mrb[0].mxu0
        %v5098 = vadd.f32 %v4985, %v5097
        %v5099 = vpop.f32.mrb[0].mxu0
        %v5100 = vadd.f32 %v4987, %v5099
        %v5101 = vpop.f32.mrb[0].mxu0
        %v5102 = vadd.f32 %v4989, %v5101
        %v5103 = vpop.f32.mrb[0].mxu0
        %v5104 = vadd.f32 %v4991, %v5103
        %5105 = vmatprep.mubr.bf16.mxu0 %v4923
        %5106 = vmatmul.mubr.bf16.gmra.mrb[0].mxu0 %v4143
        %v5107 = vpop.f32.mrb[0].mxu0
        %v5108 = vadd.f32 %v4995, %v5107
        %v5109 = vpop.f32.mrb[0].mxu0
        %v5110 = vadd.f32 %v4997, %v5109
        %v5111 = vpop.f32.mrb[0].mxu0
        %v5112 = vadd.f32 %v4999, %v5111
        %v5113 = vpop.f32.mrb[0].mxu0
        %v5114 = vadd.f32 %v5001, %v5113
        %5115 = vmatprep.mubr.bf16.mxu0 %v4926
        %5116 = vmatmul.mubr.bf16.gmra.mrb[0].mxu0 %v4147
        %v5117 = vpop.f32.mrb[0].mxu0
        %v5118 = vadd.f32 %v5005, %v5117
        %v5119 = vpop.f32.mrb[0].mxu0
        %v5120 = vadd.f32 %v5007, %v5119
        %v5121 = vpop.f32.mrb[0].mxu0
        %v5122 = vadd.f32 %v5009, %v5121
        %v5123 = vpop.f32.mrb[0].mxu0
        %v5124 = vadd.f32 %v5011, %v5123
        %5125 = vmatprep.mubr.bf16.mxu0 %v4929
        %5126 = vmatmul.mubr.bf16.gmra.mrb[0].mxu0 %v4151
        %v5127 = vpop.f32.mrb[0].mxu0
        %v5128 = vadd.f32 %v5015, %v5127
        %v5129 = vpop.f32.mrb[0].mxu0
        %v5130 = vadd.f32 %v5017, %v5129
        %v5131 = vpop.f32.mrb[0].mxu0
        %v5132 = vadd.f32 %v5019, %v5131
        %v5133 = vpop.f32.mrb[0].mxu0
        %v5134 = vadd.f32 %v5021, %v5133
        %5135 = vmatprep.mubr.bf16.mxu0 %v4932
        %5136 = vmatmul.mubr.bf16.gmra.mrb[0].mxu0 %v4155
        %v5137 = vpop.f32.mrb[0].mxu0
        %v5138 = vadd.f32 %v5025, %v5137
        %v5139 = vpop.f32.mrb[0].mxu0
        %v5140 = vadd.f32 %v5027, %v5139
        %v5141 = vpop.f32.mrb[0].mxu0
        %v5142 = vadd.f32 %v5029, %v5141
        %v5143 = vpop.f32.mrb[0].mxu0
        %v5144 = vadd.f32 %v5031, %v5143
        %5145 = vmatprep.mubr.bf16.mxu0 %v4935
        %5146 = vmatmul.mubr.bf16.gmra.mrb[0].mxu0 %v4159
        %v5147 = vpop.f32.mrb[0].mxu0
        %v5148 = vadd.f32 %v5035, %v5147
        %v5149 = vpop.f32.mrb[0].mxu0
        %v5150 = vadd.f32 %v5037, %v5149
        %v5151 = vpop.f32.mrb[0].mxu0
        %v5152 = vadd.f32 %v5039, %v5151
        %v5153 = vpop.f32.mrb[0].mxu0
        %v5154 = vadd.f32 %v5041, %v5153
        %5155 = vmatprep.mubr.bf16.mxu0 %v4938
        %5156 = vmatmul.mubr.bf16.gmra.mrb[0].mxu0 %v4163
        %v5157 = vpop.f32.mrb[0].mxu0
        %v5158 = vadd.f32 %v5045, %v5157
        %v5159 = vpop.f32.mrb[0].mxu0
        %v5160 = vadd.f32 %v5047, %v5159
        %v5161 = vpop.f32.mrb[0].mxu0
        %v5162 = vadd.f32 %v5049, %v5161
        %v5163 = vpop.f32.mrb[0].mxu0
        %v5164 = vadd.f32 %v5051, %v5163
        %5165 = vdwg.mxu0
        %v5167 = vsel %vm4415, %v3608, 0
        %v5170 = vsel %vm4415, %v3612, 0
        %v5173 = vsel %vm4415, %v3616, 0
        %v5176 = vsel %vm4415, %v3620, 0
        %v5179 = vsel %vm4415, %v3624, 0
        %v5182 = vsel %vm4415, %v3628, 0
        %v5185 = vsel %vm4415, %v3632, 0
        %v5188 = vsel %vm4415, %v3636, 0
        %5190 = vmatprep.subr.bf16.mxu0 %v4316
        %5191 = vmatpush1.bf16.msra.mxu0 %v4315
        %5192 = vmatprep.subr.bf16.mxu0 %v4318
        %5193 = vmatpush1.bf16.msra.mxu0 %v4317
        %5194 = vmatprep.subr.bf16.mxu0 %v4320
        %5195 = vmatpush1.bf16.msra.mxu0 %v4319
        %5196 = vmatprep.subr.bf16.mxu0 %v4322
        %5197 = vmatpush1.bf16.msra.mxu0 %v4321
        %5198 = vmatprep.subr.bf16.mxu0 %v4324
        %5199 = vmatpush1.bf16.msra.mxu0 %v4323
        %5200 = vmatprep.subr.bf16.mxu0 %v4326
        %5201 = vmatpush1.bf16.msra.mxu0 %v4325
        %5202 = vmatprep.subr.bf16.mxu0 %v4328
        %5203 = vmatpush1.bf16.msra.mxu0 %v4327
        %5204 = vmatprep.subr.bf16.mxu0 %v4330
        %5205 = vmatpush1.bf16.msra.mxu0 %v4329
        %5206 = vmatprep.subr.bf16.mxu0 %v4332
        %5207 = vmatpush1.bf16.msra.mxu0 %v4331
        %5208 = vmatprep.subr.bf16.mxu0 %v4334
        %5209 = vmatpush1.bf16.msra.mxu0 %v4333
        %5210 = vmatprep.subr.bf16.mxu0 %v4336
        %5211 = vmatpush1.bf16.msra.mxu0 %v4335
        %5212 = vmatprep.subr.bf16.mxu0 %v4338
        %5213 = vmatpush1.bf16.msra.mxu0 %v4337
        %5214 = vmatprep.subr.bf16.mxu0 %v4340
        %5215 = vmatpush1.bf16.msra.mxu0 %v4339
        %5216 = vmatprep.subr.bf16.mxu0 %v4342
        %5217 = vmatpush1.bf16.msra.mxu0 %v4341
        %5218 = vmatprep.subr.bf16.mxu0 %v4344
        %5219 = vmatpush1.bf16.msra.mxu0 %v4343
        %5220 = vmatprep.subr.bf16.mxu0 %v4346
        %5221 = vmatpush1.bf16.msra.mxu0 %v4345
        %5222 = vmatprep.mubr.bf16.mxu0 %v3606
        %5223 = vmatmul.mubr.bf16.gmra.mrb[0].mxu0 %v3605
        %v5224 = vpop.f32.mrb[0].mxu0
        %v5225 = vadd.f32 %v5088, %v5224
        %v5226 = vpop.f32.mrb[0].mxu0
        %v5227 = vadd.f32 %v5090, %v5226
        %v5228 = vpop.f32.mrb[0].mxu0
        %v5229 = vadd.f32 %v5092, %v5228
        %v5230 = vpop.f32.mrb[0].mxu0
        %v5231 = vadd.f32 %v5094, %v5230
        %5232 = vmatprep.mubr.bf16.mxu0 %v3610
        %5233 = vmatmul.mubr.bf16.gmra.mrb[0].mxu0 %v3609
        %v5234 = vpop.f32.mrb[0].mxu0
        %v5235 = vadd.f32 %v5098, %v5234
        %v5236 = vpop.f32.mrb[0].mxu0
        %v5237 = vadd.f32 %v5100, %v5236
        %v5238 = vpop.f32.mrb[0].mxu0
        %v5239 = vadd.f32 %v5102, %v5238
        %v5240 = vpop.f32.mrb[0].mxu0
        %v5241 = vadd.f32 %v5104, %v5240
        %5242 = vmatprep.mubr.bf16.mxu0 %v3614
        %5243 = vmatmul.mubr.bf16.gmra.mrb[0].mxu0 %v3613
        %v5244 = vpop.f32.mrb[0].mxu0
        %v5245 = vadd.f32 %v5108, %v5244
        %v5246 = vpop.f32.mrb[0].mxu0
        %v5247 = vadd.f32 %v5110, %v5246
        %v5248 = vpop.f32.mrb[0].mxu0
        %v5249 = vadd.f32 %v5112, %v5248
        %v5250 = vpop.f32.mrb[0].mxu0
        %v5251 = vadd.f32 %v5114, %v5250
        %5252 = vmatprep.mubr.bf16.mxu0 %v3618
        %5253 = vmatmul.mubr.bf16.gmra.mrb[0].mxu0 %v3617
        %v5254 = vpop.f32.mrb[0].mxu0
        %v5255 = vadd.f32 %v5118, %v5254
        %v5256 = vpop.f32.mrb[0].mxu0
        %v5257 = vadd.f32 %v5120, %v5256
        %v5258 = vpop.f32.mrb[0].mxu0
        %v5259 = vadd.f32 %v5122, %v5258
        %v5260 = vpop.f32.mrb[0].mxu0
        %v5261 = vadd.f32 %v5124, %v5260
        %5262 = vmatprep.mubr.bf16.mxu0 %v3622
        %5263 = vmatmul.mubr.bf16.gmra.mrb[0].mxu0 %v3621
        %v5264 = vpop.f32.mrb[0].mxu0
        %v5265 = vadd.f32 %v5128, %v5264
        %v5266 = vpop.f32.mrb[0].mxu0
        %v5267 = vadd.f32 %v5130, %v5266
        %v5268 = vpop.f32.mrb[0].mxu0
        %v5269 = vadd.f32 %v5132, %v5268
        %v5270 = vpop.f32.mrb[0].mxu0
        %v5271 = vadd.f32 %v5134, %v5270
        %5272 = vmatprep.mubr.bf16.mxu0 %v3626
        %5273 = vmatmul.mubr.bf16.gmra.mrb[0].mxu0 %v3625
        %v5274 = vpop.f32.mrb[0].mxu0
        %v5275 = vadd.f32 %v5138, %v5274
        %v5276 = vpop.f32.mrb[0].mxu0
        %v5277 = vadd.f32 %v5140, %v5276
        %v5278 = vpop.f32.mrb[0].mxu0
        %v5279 = vadd.f32 %v5142, %v5278
        %v5280 = vpop.f32.mrb[0].mxu0
        %v5281 = vadd.f32 %v5144, %v5280
        %5282 = vmatprep.mubr.bf16.mxu0 %v3630
        %5283 = vmatmul.mubr.bf16.gmra.mrb[0].mxu0 %v3629
        %v5284 = vpop.f32.mrb[0].mxu0
        %v5285 = vadd.f32 %v5148, %v5284
        %v5286 = vpop.f32.mrb[0].mxu0
        %v5287 = vadd.f32 %v5150, %v5286
        %v5288 = vpop.f32.mrb[0].mxu0
        %v5289 = vadd.f32 %v5152, %v5288
        %v5290 = vpop.f32.mrb[0].mxu0
        %v5291 = vadd.f32 %v5154, %v5290
        %5292 = vmatprep.mubr.bf16.mxu0 %v3634
        %5293 = vmatmul.mubr.bf16.gmra.mrb[0].mxu0 %v3633
        %v5294 = vpop.f32.mrb[0].mxu0
        %v5295 = vadd.f32 %v5158, %v5294
        %v5296 = vpop.f32.mrb[0].mxu0
        %v5297 = vadd.f32 %v5160, %v5296
        %v5298 = vpop.f32.mrb[0].mxu0
        %v5299 = vadd.f32 %v5162, %v5298
        %v5300 = vpop.f32.mrb[0].mxu0
        %v5301 = vadd.f32 %v5164, %v5300
        %5302 = vdwg.mxu0
        %5303 = vmatprep.subr.bf16.mxu0 %v4348
        %5304 = vmatpush1.bf16.msra.mxu0 %v4347
        %5305 = vmatprep.subr.bf16.mxu0 %v4350
        %5306 = vmatpush1.bf16.msra.mxu0 %v4349
        %5307 = vmatprep.subr.bf16.mxu0 %v4352
        %5308 = vmatpush1.bf16.msra.mxu0 %v4351
        %5309 = vmatprep.subr.bf16.mxu0 %v4354
        %5310 = vmatpush1.bf16.msra.mxu0 %v4353
        %5311 = vmatprep.subr.bf16.mxu0 %v4356
        %5312 = vmatpush1.bf16.msra.mxu0 %v4355
        %5313 = vmatprep.subr.bf16.mxu0 %v4358
        %5314 = vmatpush1.bf16.msra.mxu0 %v4357
        %5315 = vmatprep.subr.bf16.mxu0 %v4360
        %5316 = vmatpush1.bf16.msra.mxu0 %v4359
        %5317 = vmatprep.subr.bf16.mxu0 %v4362
        %5318 = vmatpush1.bf16.msra.mxu0 %v4361
        %5319 = vmatprep.subr.bf16.mxu0 %v4364
        %5320 = vmatpush1.bf16.msra.mxu0 %v4363
        %5321 = vmatprep.subr.bf16.mxu0 0
        %5322 = vmatpush1.bf16.msra.mxu0 0
        %5323 = vmatprep.subr.bf16.mxu0 0
        %5324 = vmatpush1.bf16.msra.mxu0 0
        %5325 = vmatprep.subr.bf16.mxu0 0
        %5326 = vmatpush1.bf16.msra.mxu0 0
        %5327 = vmatprep.subr.bf16.mxu0 0
        %5328 = vmatpush1.bf16.msra.mxu0 0
        %5329 = vmatprep.subr.bf16.mxu0 0
        %5330 = vmatpush1.bf16.msra.mxu0 0
        %5331 = vmatprep.subr.bf16.mxu0 0
        %5332 = vmatpush1.bf16.msra.mxu0 0
        %5333 = vmatprep.subr.bf16.mxu0 0
        %5334 = vmatpush1.bf16.msra.mxu0 0
        %5335 = vmatprep.mubr.bf16.mxu0 %v5167
        %5336 = vmatmul.mubr.bf16.gmra.mrb[0].mxu0 %v3607
        %v5337 = vpop.f32.mrb[0].mxu0
        %v5338 = vadd.f32 %v5225, %v5337
        %v5339 = vpop.f32.mrb[0].mxu0
        %v5340 = vadd.f32 %v5227, %v5339
        %v5341 = vpop.f32.mrb[0].mxu0
        %v5342 = vadd.f32 %v5229, %v5341
        %v5343 = vpop.f32.mrb[0].mxu0
        %v5344 = vadd.f32 %v5231, %v5343
        %5345 = vmatprep.mubr.bf16.mxu0 %v5170
        %5346 = vmatmul.mubr.bf16.gmra.mrb[0].mxu0 %v3611
        %v5347 = vpop.f32.mrb[0].mxu0
        %v5348 = vadd.f32 %v5235, %v5347
        %v5349 = vpop.f32.mrb[0].mxu0
        %v5350 = vadd.f32 %v5237, %v5349
        %v5351 = vpop.f32.mrb[0].mxu0
        %v5352 = vadd.f32 %v5239, %v5351
        %v5353 = vpop.f32.mrb[0].mxu0
        %v5354 = vadd.f32 %v5241, %v5353
        %5355 = vmatprep.mubr.bf16.mxu0 %v5173
        %5356 = vmatmul.mubr.bf16.gmra.mrb[0].mxu0 %v3615
        %v5357 = vpop.f32.mrb[0].mxu0
        %v5358 = vadd.f32 %v5245, %v5357
        %v5359 = vpop.f32.mrb[0].mxu0
        %v5360 = vadd.f32 %v5247, %v5359
        %v5361 = vpop.f32.mrb[0].mxu0
        %v5362 = vadd.f32 %v5249, %v5361
        %v5363 = vpop.f32.mrb[0].mxu0
        %v5364 = vadd.f32 %v5251, %v5363
        %5365 = vmatprep.mubr.bf16.mxu0 %v5176
        %5366 = vmatmul.mubr.bf16.gmra.mrb[0].mxu0 %v3619
        %v5367 = vpop.f32.mrb[0].mxu0
        %v5368 = vadd.f32 %v5255, %v5367
        %v5369 = vpop.f32.mrb[0].mxu0
        %v5370 = vadd.f32 %v5257, %v5369
        %v5371 = vpop.f32.mrb[0].mxu0
        %v5372 = vadd.f32 %v5259, %v5371
        %v5373 = vpop.f32.mrb[0].mxu0
        %v5374 = vadd.f32 %v5261, %v5373
        %5375 = vmatprep.mubr.bf16.mxu0 %v5179
        %5376 = vmatmul.mubr.bf16.gmra.mrb[0].mxu0 %v3623
        %v5377 = vpop.f32.mrb[0].mxu0
        %v5378 = vadd.f32 %v5265, %v5377
        %v5379 = vpop.f32.mrb[0].mxu0
        %v5380 = vadd.f32 %v5267, %v5379
        %v5381 = vpop.f32.mrb[0].mxu0
        %v5382 = vadd.f32 %v5269, %v5381
        %v5383 = vpop.f32.mrb[0].mxu0
        %v5384 = vadd.f32 %v5271, %v5383
        %5385 = vmatprep.mubr.bf16.mxu0 %v5182
        %5386 = vmatmul.mubr.bf16.gmra.mrb[0].mxu0 %v3627
        %v5387 = vpop.f32.mrb[0].mxu0
        %v5388 = vadd.f32 %v5275, %v5387
        %v5389 = vpop.f32.mrb[0].mxu0
        %v5390 = vadd.f32 %v5277, %v5389
        %v5391 = vpop.f32.mrb[0].mxu0
        %v5392 = vadd.f32 %v5279, %v5391
        %v5393 = vpop.f32.mrb[0].mxu0
        %v5394 = vadd.f32 %v5281, %v5393
        %5395 = vmatprep.mubr.bf16.mxu0 %v5185
        %5396 = vmatmul.mubr.bf16.gmra.mrb[0].mxu0 %v3631
        %v5397 = vpop.f32.mrb[0].mxu0
        %v5398 = vadd.f32 %v5285, %v5397
        %v5399 = vpop.f32.mrb[0].mxu0
        %v5400 = vadd.f32 %v5287, %v5399
        %v5401 = vpop.f32.mrb[0].mxu0
        %v5402 = vadd.f32 %v5289, %v5401
        %v5403 = vpop.f32.mrb[0].mxu0
        %v5404 = vadd.f32 %v5291, %v5403
        %5405 = vmatprep.mubr.bf16.mxu0 %v5188
        %5406 = vmatmul.mubr.bf16.gmra.mrb[0].mxu0 %v3635
        %v5407 = vpop.f32.mrb[0].mxu0
        %v5408 = vadd.f32 %v5295, %v5407
        %v5409 = vpop.f32.mrb[0].mxu0
        %v5410 = vadd.f32 %v5297, %v5409
        %v5411 = vpop.f32.mrb[0].mxu0
        %v5412 = vadd.f32 %v5299, %v5411
        %v5413 = vpop.f32.mrb[0].mxu0
        %v5414 = vadd.f32 %v5301, %v5413
        %5415 = vdwg.mxu0
        %5416 = vmatprep.subr.bf16.mxu0 %v1556
        %5417 = vmatpush1.bf16.msra.mxu0 %v1555
        %5418 = vmatprep.subr.bf16.mxu0 %v1560
        %5419 = vmatpush1.bf16.msra.mxu0 %v1559
        %5420 = vmatprep.subr.bf16.mxu0 %v1564
        %5421 = vmatpush1.bf16.msra.mxu0 %v1563
        %5422 = vmatprep.subr.bf16.mxu0 %v1568
        %5423 = vmatpush1.bf16.msra.mxu0 %v1567
        %5424 = vmatprep.subr.bf16.mxu0 %v1572
        %5425 = vmatpush1.bf16.msra.mxu0 %v1571
        %5426 = vmatprep.subr.bf16.mxu0 %v1576
        %5427 = vmatpush1.bf16.msra.mxu0 %v1575
        %5428 = vmatprep.subr.bf16.mxu0 %v1580
        %5429 = vmatpush1.bf16.msra.mxu0 %v1579
        %5430 = vmatprep.subr.bf16.mxu0 %v1584
        %5431 = vmatpush1.bf16.msra.mxu0 %v1583
        %5432 = vmatprep.subr.bf16.mxu0 %v1588
        %5433 = vmatpush1.bf16.msra.mxu0 %v1587
        %5434 = vmatprep.subr.bf16.mxu0 %v1592
        %5435 = vmatpush1.bf16.msra.mxu0 %v1591
        %5436 = vmatprep.subr.bf16.mxu0 %v1596
        %5437 = vmatpush1.bf16.msra.mxu0 %v1595
        %5438 = vmatprep.subr.bf16.mxu0 %v1600
        %5439 = vmatpush1.bf16.msra.mxu0 %v1599
        %5440 = vmatprep.subr.bf16.mxu0 %v1604
        %5441 = vmatpush1.bf16.msra.mxu0 %v1603
        %5442 = vmatprep.subr.bf16.mxu0 %v1608
        %5443 = vmatpush1.bf16.msra.mxu0 %v1607
        %5444 = vmatprep.subr.bf16.mxu0 %v1612
        %5445 = vmatpush1.bf16.msra.mxu0 %v1611
        %5446 = vmatprep.subr.bf16.mxu0 %v1616
        %5447 = vmatpush1.bf16.msra.mxu0 %v1615
        %5448 = vmatprep.mubr.bf16.mxu0 %v2980
        %5449 = vmatmul.mubr.bf16.gmra.mrb[0].mxu0 %v2979
        %v5450 = vpop.f32.mrb[0].mxu0
        %v5451 = vadd.f32 0.0, %v5450
        %v5452 = vpop.f32.mrb[0].mxu0
        %v5453 = vadd.f32 0.0, %v5452
        %v5454 = vpop.f32.mrb[0].mxu0
        %v5455 = vadd.f32 0.0, %v5454
        %v5456 = vpop.f32.mrb[0].mxu0
        %v5457 = vadd.f32 0.0, %v5456
        %5458 = vmatprep.mubr.bf16.mxu0 %v2982
        %5459 = vmatmul.mubr.bf16.gmra.mrb[0].mxu0 %v2981
        %v5460 = vpop.f32.mrb[0].mxu0
        %v5461 = vadd.f32 0.0, %v5460
        %v5462 = vpop.f32.mrb[0].mxu0
        %v5463 = vadd.f32 0.0, %v5462
        %v5464 = vpop.f32.mrb[0].mxu0
        %v5465 = vadd.f32 0.0, %v5464
        %v5466 = vpop.f32.mrb[0].mxu0
        %v5467 = vadd.f32 0.0, %v5466
        %5468 = vmatprep.mubr.bf16.mxu0 %v2984
        %5469 = vmatmul.mubr.bf16.gmra.mrb[0].mxu0 %v2983
        %v5470 = vpop.f32.mrb[0].mxu0
        %v5471 = vadd.f32 0.0, %v5470
        %v5472 = vpop.f32.mrb[0].mxu0
        %v5473 = vadd.f32 0.0, %v5472
        %v5474 = vpop.f32.mrb[0].mxu0
        %v5475 = vadd.f32 0.0, %v5474
        %v5476 = vpop.f32.mrb[0].mxu0
        %v5477 = vadd.f32 0.0, %v5476
        %5478 = vmatprep.mubr.bf16.mxu0 %v2986
        %5479 = vmatmul.mubr.bf16.gmra.mrb[0].mxu0 %v2985
        %v5480 = vpop.f32.mrb[0].mxu0
        %v5481 = vadd.f32 0.0, %v5480
        %v5482 = vpop.f32.mrb[0].mxu0
        %v5483 = vadd.f32 0.0, %v5482
        %v5484 = vpop.f32.mrb[0].mxu0
        %v5485 = vadd.f32 0.0, %v5484
        %v5486 = vpop.f32.mrb[0].mxu0
        %v5487 = vadd.f32 0.0, %v5486
        %5488 = vmatprep.mubr.bf16.mxu0 %v2988
        %5489 = vmatmul.mubr.bf16.gmra.mrb[0].mxu0 %v2987
        %v5490 = vpop.f32.mrb[0].mxu0
        %v5491 = vadd.f32 0.0, %v5490
        %v5492 = vpop.f32.mrb[0].mxu0
        %v5493 = vadd.f32 0.0, %v5492
        %v5494 = vpop.f32.mrb[0].mxu0
        %v5495 = vadd.f32 0.0, %v5494
        %v5496 = vpop.f32.mrb[0].mxu0
        %v5497 = vadd.f32 0.0, %v5496
        %5498 = vmatprep.mubr.bf16.mxu0 %v2990
        %5499 = vmatmul.mubr.bf16.gmra.mrb[0].mxu0 %v2989
        %v5500 = vpop.f32.mrb[0].mxu0
        %v5501 = vadd.f32 0.0, %v5500
        %v5502 = vpop.f32.mrb[0].mxu0
        %v5503 = vadd.f32 0.0, %v5502
        %v5504 = vpop.f32.mrb[0].mxu0
        %v5505 = vadd.f32 0.0, %v5504
        %v5506 = vpop.f32.mrb[0].mxu0
        %v5507 = vadd.f32 0.0, %v5506
        %5508 = vmatprep.mubr.bf16.mxu0 %v2992
        %5509 = vmatmul.mubr.bf16.gmra.mrb[0].mxu0 %v2991
        %v5510 = vpop.f32.mrb[0].mxu0
        %v5511 = vadd.f32 0.0, %v5510
        %v5512 = vpop.f32.mrb[0].mxu0
        %v5513 = vadd.f32 0.0, %v5512
        %v5514 = vpop.f32.mrb[0].mxu0
        %v5515 = vadd.f32 0.0, %v5514
        %v5516 = vpop.f32.mrb[0].mxu0
        %v5517 = vadd.f32 0.0, %v5516
        %5518 = vmatprep.mubr.bf16.mxu0 %v2994
        %5519 = vmatmul.mubr.bf16.gmra.mrb[0].mxu0 %v2993
        %v5520 = vpop.f32.mrb[0].mxu0
        %v5521 = vadd.f32 0.0, %v5520
        %v5522 = vpop.f32.mrb[0].mxu0
        %v5523 = vadd.f32 0.0, %v5522
        %v5524 = vpop.f32.mrb[0].mxu0
        %v5525 = vadd.f32 0.0, %v5524
        %v5526 = vpop.f32.mrb[0].mxu0
        %v5527 = vadd.f32 0.0, %v5526
        %5528 = vdwg.mxu0
        %5529 = vmatprep.subr.bf16.mxu0 %v1558
        %5530 = vmatpush1.bf16.msra.mxu0 %v1557
        %5531 = vmatprep.subr.bf16.mxu0 %v1562
        %5532 = vmatpush1.bf16.msra.mxu0 %v1561
        %5533 = vmatprep.subr.bf16.mxu0 %v1566
        %5534 = vmatpush1.bf16.msra.mxu0 %v1565
        %5535 = vmatprep.subr.bf16.mxu0 %v1570
        %5536 = vmatpush1.bf16.msra.mxu0 %v1569
        %5537 = vmatprep.subr.bf16.mxu0 %v1574
        %5538 = vmatpush1.bf16.msra.mxu0 %v1573
        %5539 = vmatprep.subr.bf16.mxu0 %v1578
        %5540 = vmatpush1.bf16.msra.mxu0 %v1577
        %5541 = vmatprep.subr.bf16.mxu0 %v1582
        %5542 = vmatpush1.bf16.msra.mxu0 %v1581
        %5543 = vmatprep.subr.bf16.mxu0 %v1586
        %5544 = vmatpush1.bf16.msra.mxu0 %v1585
        %5545 = vmatprep.subr.bf16.mxu0 %v1590
        %5546 = vmatpush1.bf16.msra.mxu0 %v1589
        %5547 = vmatprep.subr.bf16.mxu0 %v1594
        %5548 = vmatpush1.bf16.msra.mxu0 %v1593
        %5549 = vmatprep.subr.bf16.mxu0 %v1598
        %5550 = vmatpush1.bf16.msra.mxu0 %v1597
        %5551 = vmatprep.subr.bf16.mxu0 %v1602
        %5552 = vmatpush1.bf16.msra.mxu0 %v1601
        %5553 = vmatprep.subr.bf16.mxu0 %v1606
        %5554 = vmatpush1.bf16.msra.mxu0 %v1605
        %5555 = vmatprep.subr.bf16.mxu0 %v1610
        %5556 = vmatpush1.bf16.msra.mxu0 %v1609
        %5557 = vmatprep.subr.bf16.mxu0 %v1614
        %5558 = vmatpush1.bf16.msra.mxu0 %v1613
        %5559 = vmatprep.subr.bf16.mxu0 %v1618
        %5560 = vmatpush1.bf16.msra.mxu0 %v1617
        %5561 = vmatprep.mubr.bf16.mxu0 %v2980
        %5562 = vmatmul.mubr.bf16.gmra.mrb[0].mxu0 %v2979
        %v5563 = vpop.f32.mrb[0].mxu0
        %v5564 = vadd.f32 0.0, %v5563
        %v5565 = vpop.f32.mrb[0].mxu0
        %v5566 = vadd.f32 0.0, %v5565
        %v5567 = vpop.f32.mrb[0].mxu0
        %v5568 = vadd.f32 0.0, %v5567
        %v5569 = vpop.f32.mrb[0].mxu0
        %v5570 = vadd.f32 0.0, %v5569
        %5571 = vmatprep.mubr.bf16.mxu0 %v2982
        %5572 = vmatmul.mubr.bf16.gmra.mrb[0].mxu0 %v2981
        %v5573 = vpop.f32.mrb[0].mxu0
        %v5574 = vadd.f32 0.0, %v5573
        %v5575 = vpop.f32.mrb[0].mxu0
        %v5576 = vadd.f32 0.0, %v5575
        %v5577 = vpop.f32.mrb[0].mxu0
        %v5578 = vadd.f32 0.0, %v5577
        %v5579 = vpop.f32.mrb[0].mxu0
        %v5580 = vadd.f32 0.0, %v5579
        %5581 = vmatprep.mubr.bf16.mxu0 %v2984
        %5582 = vmatmul.mubr.bf16.gmra.mrb[0].mxu0 %v2983
        %v5583 = vpop.f32.mrb[0].mxu0
        %v5584 = vadd.f32 0.0, %v5583
        %v5585 = vpop.f32.mrb[0].mxu0
        %v5586 = vadd.f32 0.0, %v5585
        %v5587 = vpop.f32.mrb[0].mxu0
        %v5588 = vadd.f32 0.0, %v5587
        %v5589 = vpop.f32.mrb[0].mxu0
        %v5590 = vadd.f32 0.0, %v5589
        %5591 = vmatprep.mubr.bf16.mxu0 %v2986
        %5592 = vmatmul.mubr.bf16.gmra.mrb[0].mxu0 %v2985
        %v5593 = vpop.f32.mrb[0].mxu0
        %v5594 = vadd.f32 0.0, %v5593
        %v5595 = vpop.f32.mrb[0].mxu0
        %v5596 = vadd.f32 0.0, %v5595
        %v5597 = vpop.f32.mrb[0].mxu0
        %v5598 = vadd.f32 0.0, %v5597
        %v5599 = vpop.f32.mrb[0].mxu0
        %v5600 = vadd.f32 0.0, %v5599
        %5601 = vmatprep.mubr.bf16.mxu0 %v2988
        %5602 = vmatmul.mubr.bf16.gmra.mrb[0].mxu0 %v2987
        %v5603 = vpop.f32.mrb[0].mxu0
        %v5604 = vadd.f32 0.0, %v5603
        %v5605 = vpop.f32.mrb[0].mxu0
        %v5606 = vadd.f32 0.0, %v5605
        %v5607 = vpop.f32.mrb[0].mxu0
        %v5608 = vadd.f32 0.0, %v5607
        %v5609 = vpop.f32.mrb[0].mxu0
        %v5610 = vadd.f32 0.0, %v5609
        %5611 = vmatprep.mubr.bf16.mxu0 %v2990
        %5612 = vmatmul.mubr.bf16.gmra.mrb[0].mxu0 %v2989
        %v5613 = vpop.f32.mrb[0].mxu0
        %v5614 = vadd.f32 0.0, %v5613
        %v5615 = vpop.f32.mrb[0].mxu0
        %v5616 = vadd.f32 0.0, %v5615
        %v5617 = vpop.f32.mrb[0].mxu0
        %v5618 = vadd.f32 0.0, %v5617
        %v5619 = vpop.f32.mrb[0].mxu0
        %v5620 = vadd.f32 0.0, %v5619
        %5621 = vmatprep.mubr.bf16.mxu0 %v2992
        %5622 = vmatmul.mubr.bf16.gmra.mrb[0].mxu0 %v2991
        %v5623 = vpop.f32.mrb[0].mxu0
        %v5624 = vadd.f32 0.0, %v5623
        %v5625 = vpop.f32.mrb[0].mxu0
        %v5626 = vadd.f32 0.0, %v5625
        %v5627 = vpop.f32.mrb[0].mxu0
        %v5628 = vadd.f32 0.0, %v5627
        %v5629 = vpop.f32.mrb[0].mxu0
        %v5630 = vadd.f32 0.0, %v5629
        %5631 = vmatprep.mubr.bf16.mxu0 %v2994
        %5632 = vmatmul.mubr.bf16.gmra.mrb[0].mxu0 %v2993
        %v5633 = vpop.f32.mrb[0].mxu0
        %v5634 = vadd.f32 0.0, %v5633
        %v5635 = vpop.f32.mrb[0].mxu0
        %v5636 = vadd.f32 0.0, %v5635
        %v5637 = vpop.f32.mrb[0].mxu0
        %v5638 = vadd.f32 0.0, %v5637
        %v5639 = vpop.f32.mrb[0].mxu0
        %v5640 = vadd.f32 0.0, %v5639
        %5641 = vdwg.mxu0
        %v5642 = vpack.c.bf16 %v5455, %v5451
        %v5643 = vpack.c.bf16 %v5457, %v5453
        %v5644 = vpack.c.bf16 %v5568, %v5564
        %v5645 = vpack.c.bf16 %v5570, %v5566
        %v5646 = vpack.c.bf16 %v5465, %v5461
        %v5647 = vpack.c.bf16 %v5467, %v5463
        %v5648 = vpack.c.bf16 %v5578, %v5574
        %v5649 = vpack.c.bf16 %v5580, %v5576
        %v5650 = vpack.c.bf16 %v5475, %v5471
        %v5651 = vpack.c.bf16 %v5477, %v5473
        %v5652 = vpack.c.bf16 %v5588, %v5584
        %v5653 = vpack.c.bf16 %v5590, %v5586
        %v5654 = vpack.c.bf16 %v5485, %v5481
        %v5655 = vpack.c.bf16 %v5487, %v5483
        %v5656 = vpack.c.bf16 %v5598, %v5594
        %v5657 = vpack.c.bf16 %v5600, %v5596
        %v5658 = vpack.c.bf16 %v5495, %v5491
        %v5659 = vpack.c.bf16 %v5497, %v5493
        %v5660 = vpack.c.bf16 %v5608, %v5604
        %v5661 = vpack.c.bf16 %v5610, %v5606
        %v5662 = vpack.c.bf16 %v5505, %v5501
        %v5663 = vpack.c.bf16 %v5507, %v5503
        %v5664 = vpack.c.bf16 %v5618, %v5614
        %v5665 = vpack.c.bf16 %v5620, %v5616
        %v5666 = vpack.c.bf16 %v5515, %v5511
        %v5667 = vpack.c.bf16 %v5517, %v5513
        %v5668 = vpack.c.bf16 %v5628, %v5624
        %v5669 = vpack.c.bf16 %v5630, %v5626
        %v5670 = vpack.c.bf16 %v5525, %v5521
        %v5671 = vpack.c.bf16 %v5527, %v5523
        %v5672 = vpack.c.bf16 %v5638, %v5634
        %v5673 = vpack.c.bf16 %v5640, %v5636
        %v5675 = vsel %vm3366, %v2799, 0
        %v5678 = vsel %vm3366, %v2800, 0
        %v5681 = vsel %vm3366, %v2801, 0
        %v5684 = vsel %vm3366, %v2802, 0
        %5686 = vmatprep.subr.bf16.mxu0 %v2740
        %5687 = vmatpush1.bf16.msra.mxu0 %v2739
        %5688 = vmatprep.subr.bf16.mxu0 %v2744
        %5689 = vmatpush1.bf16.msra.mxu0 %v2743
        %5690 = vmatprep.subr.bf16.mxu0 %v2748
        %5691 = vmatpush1.bf16.msra.mxu0 %v2747
        %5692 = vmatprep.subr.bf16.mxu0 %v2752
        %5693 = vmatpush1.bf16.msra.mxu0 %v2751
        %5694 = vmatprep.subr.bf16.mxu0 %v2756
        %5695 = vmatpush1.bf16.msra.mxu0 %v2755
        %5696 = vmatprep.subr.bf16.mxu0 %v2760
        %5697 = vmatpush1.bf16.msra.mxu0 %v2759
        %5698 = vmatprep.subr.bf16.mxu0 %v2764
        %5699 = vmatpush1.bf16.msra.mxu0 %v2763
        %5700 = vmatprep.subr.bf16.mxu0 %v2768
        %5701 = vmatpush1.bf16.msra.mxu0 %v2767
        %5702 = vmatprep.subr.bf16.mxu0 %v2772
        %5703 = vmatpush1.bf16.msra.mxu0 %v2771
        %5704 = vmatprep.subr.bf16.mxu0 %v2776
        %5705 = vmatpush1.bf16.msra.mxu0 %v2775
        %5706 = vmatprep.subr.bf16.mxu0 %v2780
        %5707 = vmatpush1.bf16.msra.mxu0 %v2779
        %5708 = vmatprep.subr.bf16.mxu0 %v2784
        %5709 = vmatpush1.bf16.msra.mxu0 %v2783
        %5710 = vmatprep.subr.bf16.mxu0 %v2788
        %5711 = vmatpush1.bf16.msra.mxu0 %v2787
        %5712 = vmatprep.subr.bf16.mxu0 %v2792
        %5713 = vmatpush1.bf16.msra.mxu0 %v2791
        %5714 = vmatprep.subr.bf16.mxu0 %v2796
        %5715 = vmatpush1.bf16.msra.mxu0 %v2795
        %5716 = vmatprep.subr.bf16.mxu0 %v5678
        %5717 = vmatpush1.bf16.msra.mxu0 %v5675
        %5718 = vmatprep.mubr.bf16.mxu0 %v3343
        %5719 = vmatmul.mubr.bf16.gmra.mrb[0].mxu0 %v3317
        %v5720 = vpop.f32.mrb[0].mxu0
        %v5721 = vadd.f32 0.0, %v5720
        %v5722 = vpop.f32.mrb[0].mxu0
        %v5723 = vadd.f32 0.0, %v5722
        %v5724 = vpop.f32.mrb[0].mxu0
        %v5725 = vadd.f32 0.0, %v5724
        %v5726 = vpop.f32.mrb[0].mxu0
        %v5727 = vadd.f32 0.0, %v5726
        %5728 = vmatprep.mubr.bf16.mxu0 %v3346
        %5729 = vmatmul.mubr.bf16.gmra.mrb[0].mxu0 %v3319
        %v5730 = vpop.f32.mrb[0].mxu0
        %v5731 = vadd.f32 0.0, %v5730
        %v5732 = vpop.f32.mrb[0].mxu0
        %v5733 = vadd.f32 0.0, %v5732
        %v5734 = vpop.f32.mrb[0].mxu0
        %v5735 = vadd.f32 0.0, %v5734
        %v5736 = vpop.f32.mrb[0].mxu0
        %v5737 = vadd.f32 0.0, %v5736
        %5738 = vmatprep.mubr.bf16.mxu0 %v3349
        %5739 = vmatmul.mubr.bf16.gmra.mrb[0].mxu0 %v3321
        %v5740 = vpop.f32.mrb[0].mxu0
        %v5741 = vadd.f32 0.0, %v5740
        %v5742 = vpop.f32.mrb[0].mxu0
        %v5743 = vadd.f32 0.0, %v5742
        %v5744 = vpop.f32.mrb[0].mxu0
        %v5745 = vadd.f32 0.0, %v5744
        %v5746 = vpop.f32.mrb[0].mxu0
        %v5747 = vadd.f32 0.0, %v5746
        %5748 = vmatprep.mubr.bf16.mxu0 %v3352
        %5749 = vmatmul.mubr.bf16.gmra.mrb[0].mxu0 %v3323
        %v5750 = vpop.f32.mrb[0].mxu0
        %v5751 = vadd.f32 0.0, %v5750
        %v5752 = vpop.f32.mrb[0].mxu0
        %v5753 = vadd.f32 0.0, %v5752
        %v5754 = vpop.f32.mrb[0].mxu0
        %v5755 = vadd.f32 0.0, %v5754
        %v5756 = vpop.f32.mrb[0].mxu0
        %v5757 = vadd.f32 0.0, %v5756
        %5758 = vmatprep.mubr.bf16.mxu0 %v3355
        %5759 = vmatmul.mubr.bf16.gmra.mrb[0].mxu0 %v3325
        %v5760 = vpop.f32.mrb[0].mxu0
        %v5761 = vadd.f32 0.0, %v5760
        %v5762 = vpop.f32.mrb[0].mxu0
        %v5763 = vadd.f32 0.0, %v5762
        %v5764 = vpop.f32.mrb[0].mxu0
        %v5765 = vadd.f32 0.0, %v5764
        %v5766 = vpop.f32.mrb[0].mxu0
        %v5767 = vadd.f32 0.0, %v5766
        %5768 = vmatprep.mubr.bf16.mxu0 %v3358
        %5769 = vmatmul.mubr.bf16.gmra.mrb[0].mxu0 %v3327
        %v5770 = vpop.f32.mrb[0].mxu0
        %v5771 = vadd.f32 0.0, %v5770
        %v5772 = vpop.f32.mrb[0].mxu0
        %v5773 = vadd.f32 0.0, %v5772
        %v5774 = vpop.f32.mrb[0].mxu0
        %v5775 = vadd.f32 0.0, %v5774
        %v5776 = vpop.f32.mrb[0].mxu0
        %v5777 = vadd.f32 0.0, %v5776
        %5778 = vmatprep.mubr.bf16.mxu0 %v3361
        %5779 = vmatmul.mubr.bf16.gmra.mrb[0].mxu0 %v3329
        %v5780 = vpop.f32.mrb[0].mxu0
        %v5781 = vadd.f32 0.0, %v5780
        %v5782 = vpop.f32.mrb[0].mxu0
        %v5783 = vadd.f32 0.0, %v5782
        %v5784 = vpop.f32.mrb[0].mxu0
        %v5785 = vadd.f32 0.0, %v5784
        %v5786 = vpop.f32.mrb[0].mxu0
        %v5787 = vadd.f32 0.0, %v5786
        %5788 = vmatprep.mubr.bf16.mxu0 %v3364
        %5789 = vmatmul.mubr.bf16.gmra.mrb[0].mxu0 %v3331
        %v5790 = vpop.f32.mrb[0].mxu0
        %v5791 = vadd.f32 0.0, %v5790
        %v5792 = vpop.f32.mrb[0].mxu0
        %v5793 = vadd.f32 0.0, %v5792
        %v5794 = vpop.f32.mrb[0].mxu0
        %v5795 = vadd.f32 0.0, %v5794
        %v5796 = vpop.f32.mrb[0].mxu0
        %v5797 = vadd.f32 0.0, %v5796
        %5798 = vdwg.mxu0
        %5799 = vmatprep.subr.bf16.mxu0 %v2742
        %5800 = vmatpush1.bf16.msra.mxu0 %v2741
        %5801 = vmatprep.subr.bf16.mxu0 %v2746
        %5802 = vmatpush1.bf16.msra.mxu0 %v2745
        %5803 = vmatprep.subr.bf16.mxu0 %v2750
        %5804 = vmatpush1.bf16.msra.mxu0 %v2749
        %5805 = vmatprep.subr.bf16.mxu0 %v2754
        %5806 = vmatpush1.bf16.msra.mxu0 %v2753
        %5807 = vmatprep.subr.bf16.mxu0 %v2758
        %5808 = vmatpush1.bf16.msra.mxu0 %v2757
        %5809 = vmatprep.subr.bf16.mxu0 %v2762
        %5810 = vmatpush1.bf16.msra.mxu0 %v2761
        %5811 = vmatprep.subr.bf16.mxu0 %v2766
        %5812 = vmatpush1.bf16.msra.mxu0 %v2765
        %5813 = vmatprep.subr.bf16.mxu0 %v2770
        %5814 = vmatpush1.bf16.msra.mxu0 %v2769
        %5815 = vmatprep.subr.bf16.mxu0 %v2774
        %5816 = vmatpush1.bf16.msra.mxu0 %v2773
        %5817 = vmatprep.subr.bf16.mxu0 %v2778
        %5818 = vmatpush1.bf16.msra.mxu0 %v2777
        %5819 = vmatprep.subr.bf16.mxu0 %v2782
        %5820 = vmatpush1.bf16.msra.mxu0 %v2781
        %5821 = vmatprep.subr.bf16.mxu0 %v2786
        %5822 = vmatpush1.bf16.msra.mxu0 %v2785
        %5823 = vmatprep.subr.bf16.mxu0 %v2790
        %5824 = vmatpush1.bf16.msra.mxu0 %v2789
        %5825 = vmatprep.subr.bf16.mxu0 %v2794
        %5826 = vmatpush1.bf16.msra.mxu0 %v2793
        %5827 = vmatprep.subr.bf16.mxu0 %v2798
        %5828 = vmatpush1.bf16.msra.mxu0 %v2797
        %5829 = vmatprep.subr.bf16.mxu0 %v5684
        %5830 = vmatpush1.bf16.msra.mxu0 %v5681
        %5831 = vmatprep.mubr.bf16.mxu0 %v3343
        %5832 = vmatmul.mubr.bf16.gmra.mrb[0].mxu0 %v3317
        %v5833 = vpop.f32.mrb[0].mxu0
        %v5834 = vadd.f32 0.0, %v5833
        %v5835 = vpop.f32.mrb[0].mxu0
        %v5836 = vadd.f32 0.0, %v5835
        %v5837 = vpop.f32.mrb[0].mxu0
        %v5838 = vadd.f32 0.0, %v5837
        %v5839 = vpop.f32.mrb[0].mxu0
        %v5840 = vadd.f32 0.0, %v5839
        %5841 = vmatprep.mubr.bf16.mxu0 %v3346
        %5842 = vmatmul.mubr.bf16.gmra.mrb[0].mxu0 %v3319
        %v5843 = vpop.f32.mrb[0].mxu0
        %v5844 = vadd.f32 0.0, %v5843
        %v5845 = vpop.f32.mrb[0].mxu0
        %v5846 = vadd.f32 0.0, %v5845
        %v5847 = vpop.f32.mrb[0].mxu0
        %v5848 = vadd.f32 0.0, %v5847
        %v5849 = vpop.f32.mrb[0].mxu0
        %v5850 = vadd.f32 0.0, %v5849
        %5851 = vmatprep.mubr.bf16.mxu0 %v3349
        %5852 = vmatmul.mubr.bf16.gmra.mrb[0].mxu0 %v3321
        %v5853 = vpop.f32.mrb[0].mxu0
        %v5854 = vadd.f32 0.0, %v5853
        %v5855 = vpop.f32.mrb[0].mxu0
        %v5856 = vadd.f32 0.0, %v5855
        %v5857 = vpop.f32.mrb[0].mxu0
        %v5858 = vadd.f32 0.0, %v5857
        %v5859 = vpop.f32.mrb[0].mxu0
        %v5860 = vadd.f32 0.0, %v5859
        %5861 = vmatprep.mubr.bf16.mxu0 %v3352
        %5862 = vmatmul.mubr.bf16.gmra.mrb[0].mxu0 %v3323
        %v5863 = vpop.f32.mrb[0].mxu0
        %v5864 = vadd.f32 0.0, %v5863
        %v5865 = vpop.f32.mrb[0].mxu0
        %v5866 = vadd.f32 0.0, %v5865
        %v5867 = vpop.f32.mrb[0].mxu0
        %v5868 = vadd.f32 0.0, %v5867
        %v5869 = vpop.f32.mrb[0].mxu0
        %v5870 = vadd.f32 0.0, %v5869
        %5871 = vmatprep.mubr.bf16.mxu0 %v3355
        %5872 = vmatmul.mubr.bf16.gmra.mrb[0].mxu0 %v3325
        %v5873 = vpop.f32.mrb[0].mxu0
        %v5874 = vadd.f32 0.0, %v5873
        %v5875 = vpop.f32.mrb[0].mxu0
        %v5876 = vadd.f32 0.0, %v5875
        %v5877 = vpop.f32.mrb[0].mxu0
        %v5878 = vadd.f32 0.0, %v5877
        %v5879 = vpop.f32.mrb[0].mxu0
        %v5880 = vadd.f32 0.0, %v5879
        %5881 = vmatprep.mubr.bf16.mxu0 %v3358
        %5882 = vmatmul.mubr.bf16.gmra.mrb[0].mxu0 %v3327
        %v5883 = vpop.f32.mrb[0].mxu0
        %v5884 = vadd.f32 0.0, %v5883
        %v5885 = vpop.f32.mrb[0].mxu0
        %v5886 = vadd.f32 0.0, %v5885
        %v5887 = vpop.f32.mrb[0].mxu0
        %v5888 = vadd.f32 0.0, %v5887
        %v5889 = vpop.f32.mrb[0].mxu0
        %v5890 = vadd.f32 0.0, %v5889
        %5891 = vmatprep.mubr.bf16.mxu0 %v3361
        %5892 = vmatmul.mubr.bf16.gmra.mrb[0].mxu0 %v3329
        %v5893 = vpop.f32.mrb[0].mxu0
        %v5894 = vadd.f32 0.0, %v5893
        %v5895 = vpop.f32.mrb[0].mxu0
        %v5896 = vadd.f32 0.0, %v5895
        %v5897 = vpop.f32.mrb[0].mxu0
        %v5898 = vadd.f32 0.0, %v5897
        %v5899 = vpop.f32.mrb[0].mxu0
        %v5900 = vadd.f32 0.0, %v5899
        %5901 = vmatprep.mubr.bf16.mxu0 %v3364
        %5902 = vmatmul.mubr.bf16.gmra.mrb[0].mxu0 %v3331
        %v5903 = vpop.f32.mrb[0].mxu0
        %v5904 = vadd.f32 0.0, %v5903
        %v5905 = vpop.f32.mrb[0].mxu0
        %v5906 = vadd.f32 0.0, %v5905
        %v5907 = vpop.f32.mrb[0].mxu0
        %v5908 = vadd.f32 0.0, %v5907
        %v5909 = vpop.f32.mrb[0].mxu0
        %v5910 = vadd.f32 0.0, %v5909
        %5911 = vdwg.mxu0
        %v5912 = vpack.c.bf16 %v5725, %v5721
        %v5913 = vpack.c.bf16 %v5727, %v5723
        %v5914 = vpack.c.bf16 %v5838, %v5834
        %v5915 = vpack.c.bf16 %v5840, %v5836
        %v5916 = vpack.c.bf16 %v5735, %v5731
        %v5917 = vpack.c.bf16 %v5737, %v5733
        %v5918 = vpack.c.bf16 %v5848, %v5844
        %v5919 = vpack.c.bf16 %v5850, %v5846
        %v5920 = vpack.c.bf16 %v5745, %v5741
        %v5921 = vpack.c.bf16 %v5747, %v5743
        %v5922 = vpack.c.bf16 %v5858, %v5854
        %v5923 = vpack.c.bf16 %v5860, %v5856
        %v5924 = vpack.c.bf16 %v5755, %v5751
        %v5925 = vpack.c.bf16 %v5757, %v5753
        %v5926 = vpack.c.bf16 %v5868, %v5864
        %v5927 = vpack.c.bf16 %v5870, %v5866
        %v5928 = vpack.c.bf16 %v5765, %v5761
        %v5929 = vpack.c.bf16 %v5767, %v5763
        %v5930 = vpack.c.bf16 %v5878, %v5874
        %v5931 = vpack.c.bf16 %v5880, %v5876
        %v5932 = vpack.c.bf16 %v5775, %v5771
        %v5933 = vpack.c.bf16 %v5777, %v5773
        %v5934 = vpack.c.bf16 %v5888, %v5884
        %v5935 = vpack.c.bf16 %v5890, %v5886
        %v5936 = vpack.c.bf16 %v5785, %v5781
        %v5937 = vpack.c.bf16 %v5787, %v5783
        %v5938 = vpack.c.bf16 %v5898, %v5894
        %v5939 = vpack.c.bf16 %v5900, %v5896
        %v5940 = vpack.c.bf16 %v5795, %v5791
        %v5941 = vpack.c.bf16 %v5797, %v5793
        %v5942 = vpack.c.bf16 %v5908, %v5904
        %v5943 = vpack.c.bf16 %v5910, %v5906
        %v5945 = vsel %vm4415, %v5645, 0
        %v5948 = vsel %vm4415, %v5649, 0
        %v5951 = vsel %vm4415, %v5653, 0
        %v5954 = vsel %vm4415, %v5657, 0
        %v5957 = vsel %vm4415, %v5661, 0
        %v5960 = vsel %vm4415, %v5665, 0
        %v5963 = vsel %vm4415, %v5669, 0
        %v5966 = vsel %vm4415, %v5673, 0
        %5968 = vmatprep.subr.bf16.mxu0 %v4316
        %5969 = vmatpush1.bf16.msra.mxu0 %v4315
        %5970 = vmatprep.subr.bf16.mxu0 %v4318
        %5971 = vmatpush1.bf16.msra.mxu0 %v4317
        %5972 = vmatprep.subr.bf16.mxu0 %v4320
        %5973 = vmatpush1.bf16.msra.mxu0 %v4319
        %5974 = vmatprep.subr.bf16.mxu0 %v4322
        %5975 = vmatpush1.bf16.msra.mxu0 %v4321
        %5976 = vmatprep.subr.bf16.mxu0 %v4324
        %5977 = vmatpush1.bf16.msra.mxu0 %v4323
        %5978 = vmatprep.subr.bf16.mxu0 %v4326
        %5979 = vmatpush1.bf16.msra.mxu0 %v4325
        %5980 = vmatprep.subr.bf16.mxu0 %v4328
        %5981 = vmatpush1.bf16.msra.mxu0 %v4327
        %5982 = vmatprep.subr.bf16.mxu0 %v4330
        %5983 = vmatpush1.bf16.msra.mxu0 %v4329
        %5984 = vmatprep.subr.bf16.mxu0 %v4332
        %5985 = vmatpush1.bf16.msra.mxu0 %v4331
        %5986 = vmatprep.subr.bf16.mxu0 %v4334
        %5987 = vmatpush1.bf16.msra.mxu0 %v4333
        %5988 = vmatprep.subr.bf16.mxu0 %v4336
        %5989 = vmatpush1.bf16.msra.mxu0 %v4335
        %5990 = vmatprep.subr.bf16.mxu0 %v4338
        %5991 = vmatpush1.bf16.msra.mxu0 %v4337
        %5992 = vmatprep.subr.bf16.mxu0 %v4340
        %5993 = vmatpush1.bf16.msra.mxu0 %v4339
        %5994 = vmatprep.subr.bf16.mxu0 %v4342
        %5995 = vmatpush1.bf16.msra.mxu0 %v4341
        %5996 = vmatprep.subr.bf16.mxu0 %v4344
        %5997 = vmatpush1.bf16.msra.mxu0 %v4343
        %5998 = vmatprep.subr.bf16.mxu0 %v4346
        %5999 = vmatpush1.bf16.msra.mxu0 %v4345
        %6000 = vmatprep.mubr.bf16.mxu0 %v5643
        %6001 = vmatmul.mubr.bf16.gmra.mrb[0].mxu0 %v5642
        %v6002 = vpop.f32.mrb[0].mxu0
        %v6003 = vadd.f32 0.0, %v6002
        %v6004 = vpop.f32.mrb[0].mxu0
        %v6005 = vadd.f32 0.0, %v6004
        %v6006 = vpop.f32.mrb[0].mxu0
        %v6007 = vadd.f32 0.0, %v6006
        %v6008 = vpop.f32.mrb[0].mxu0
        %v6009 = vadd.f32 0.0, %v6008
        %6010 = vmatprep.mubr.bf16.mxu0 %v5647
        %6011 = vmatmul.mubr.bf16.gmra.mrb[0].mxu0 %v5646
        %v6012 = vpop.f32.mrb[0].mxu0
        %v6013 = vadd.f32 0.0, %v6012
        %v6014 = vpop.f32.mrb[0].mxu0
        %v6015 = vadd.f32 0.0, %v6014
        %v6016 = vpop.f32.mrb[0].mxu0
        %v6017 = vadd.f32 0.0, %v6016
        %v6018 = vpop.f32.mrb[0].mxu0
        %v6019 = vadd.f32 0.0, %v6018
        %6020 = vmatprep.mubr.bf16.mxu0 %v5651
        %6021 = vmatmul.mubr.bf16.gmra.mrb[0].mxu0 %v5650
        %v6022 = vpop.f32.mrb[0].mxu0
        %v6023 = vadd.f32 0.0, %v6022
        %v6024 = vpop.f32.mrb[0].mxu0
        %v6025 = vadd.f32 0.0, %v6024
        %v6026 = vpop.f32.mrb[0].mxu0
        %v6027 = vadd.f32 0.0, %v6026
        %v6028 = vpop.f32.mrb[0].mxu0
        %v6029 = vadd.f32 0.0, %v6028
        %6030 = vmatprep.mubr.bf16.mxu0 %v5655
        %6031 = vmatmul.mubr.bf16.gmra.mrb[0].mxu0 %v5654
        %v6032 = vpop.f32.mrb[0].mxu0
        %v6033 = vadd.f32 0.0, %v6032
        %v6034 = vpop.f32.mrb[0].mxu0
        %v6035 = vadd.f32 0.0, %v6034
        %v6036 = vpop.f32.mrb[0].mxu0
        %v6037 = vadd.f32 0.0, %v6036
        %v6038 = vpop.f32.mrb[0].mxu0
        %v6039 = vadd.f32 0.0, %v6038
        %6040 = vmatprep.mubr.bf16.mxu0 %v5659
        %6041 = vmatmul.mubr.bf16.gmra.mrb[0].mxu0 %v5658
        %v6042 = vpop.f32.mrb[0].mxu0
        %v6043 = vadd.f32 0.0, %v6042
        %v6044 = vpop.f32.mrb[0].mxu0
        %v6045 = vadd.f32 0.0, %v6044
        %v6046 = vpop.f32.mrb[0].mxu0
        %v6047 = vadd.f32 0.0, %v6046
        %v6048 = vpop.f32.mrb[0].mxu0
        %v6049 = vadd.f32 0.0, %v6048
        %6050 = vmatprep.mubr.bf16.mxu0 %v5663
        %6051 = vmatmul.mubr.bf16.gmra.mrb[0].mxu0 %v5662
        %v6052 = vpop.f32.mrb[0].mxu0
        %v6053 = vadd.f32 0.0, %v6052
        %v6054 = vpop.f32.mrb[0].mxu0
        %v6055 = vadd.f32 0.0, %v6054
        %v6056 = vpop.f32.mrb[0].mxu0
        %v6057 = vadd.f32 0.0, %v6056
        %v6058 = vpop.f32.mrb[0].mxu0
        %v6059 = vadd.f32 0.0, %v6058
        %6060 = vmatprep.mubr.bf16.mxu0 %v5667
        %6061 = vmatmul.mubr.bf16.gmra.mrb[0].mxu0 %v5666
        %v6062 = vpop.f32.mrb[0].mxu0
        %v6063 = vadd.f32 0.0, %v6062
        %v6064 = vpop.f32.mrb[0].mxu0
        %v6065 = vadd.f32 0.0, %v6064
        %v6066 = vpop.f32.mrb[0].mxu0
        %v6067 = vadd.f32 0.0, %v6066
        %v6068 = vpop.f32.mrb[0].mxu0
        %v6069 = vadd.f32 0.0, %v6068
        %6070 = vmatprep.mubr.bf16.mxu0 %v5671
        %6071 = vmatmul.mubr.bf16.gmra.mrb[0].mxu0 %v5670
        %v6072 = vpop.f32.mrb[0].mxu0
        %v6073 = vadd.f32 0.0, %v6072
        %v6074 = vpop.f32.mrb[0].mxu0
        %v6075 = vadd.f32 0.0, %v6074
        %v6076 = vpop.f32.mrb[0].mxu0
        %v6077 = vadd.f32 0.0, %v6076
        %v6078 = vpop.f32.mrb[0].mxu0
        %v6079 = vadd.f32 0.0, %v6078
        %6080 = vdwg.mxu0
        %6081 = vmatprep.subr.bf16.mxu0 %v4348
        %6082 = vmatpush1.bf16.msra.mxu0 %v4347
        %6083 = vmatprep.subr.bf16.mxu0 %v4350
        %6084 = vmatpush1.bf16.msra.mxu0 %v4349
        %6085 = vmatprep.subr.bf16.mxu0 %v4352
        %6086 = vmatpush1.bf16.msra.mxu0 %v4351
        %6087 = vmatprep.subr.bf16.mxu0 %v4354
        %6088 = vmatpush1.bf16.msra.mxu0 %v4353
        %6089 = vmatprep.subr.bf16.mxu0 %v4356
        %6090 = vmatpush1.bf16.msra.mxu0 %v4355
        %6091 = vmatprep.subr.bf16.mxu0 %v4358
        %6092 = vmatpush1.bf16.msra.mxu0 %v4357
        %6093 = vmatprep.subr.bf16.mxu0 %v4360
        %6094 = vmatpush1.bf16.msra.mxu0 %v4359
        %6095 = vmatprep.subr.bf16.mxu0 %v4362
        %6096 = vmatpush1.bf16.msra.mxu0 %v4361
        %6097 = vmatprep.subr.bf16.mxu0 %v4364
        %6098 = vmatpush1.bf16.msra.mxu0 %v4363
        %6099 = vmatprep.subr.bf16.mxu0 0
        %6100 = vmatpush1.bf16.msra.mxu0 0
        %6101 = vmatprep.subr.bf16.mxu0 0
        %6102 = vmatpush1.bf16.msra.mxu0 0
        %6103 = vmatprep.subr.bf16.mxu0 0
        %6104 = vmatpush1.bf16.msra.mxu0 0
        %6105 = vmatprep.subr.bf16.mxu0 0
        %6106 = vmatpush1.bf16.msra.mxu0 0
        %6107 = vmatprep.subr.bf16.mxu0 0
        %6108 = vmatpush1.bf16.msra.mxu0 0
        %6109 = vmatprep.subr.bf16.mxu0 0
        %6110 = vmatpush1.bf16.msra.mxu0 0
        %6111 = vmatprep.subr.bf16.mxu0 0
        %6112 = vmatpush1.bf16.msra.mxu0 0
        %6113 = vmatprep.mubr.bf16.mxu0 %v5945
        %6114 = vmatmul.mubr.bf16.gmra.mrb[0].mxu0 %v5644
        %v6115 = vpop.f32.mrb[0].mxu0
        %v6116 = vadd.f32 %v6003, %v6115
        %v6117 = vpop.f32.mrb[0].mxu0
        %v6118 = vadd.f32 %v6005, %v6117
        %v6119 = vpop.f32.mrb[0].mxu0
        %v6120 = vadd.f32 %v6007, %v6119
        %v6121 = vpop.f32.mrb[0].mxu0
        %v6122 = vadd.f32 %v6009, %v6121
        %6123 = vmatprep.mubr.bf16.mxu0 %v5948
        %6124 = vmatmul.mubr.bf16.gmra.mrb[0].mxu0 %v5648
        %v6125 = vpop.f32.mrb[0].mxu0
        %v6126 = vadd.f32 %v6013, %v6125
        %v6127 = vpop.f32.mrb[0].mxu0
        %v6128 = vadd.f32 %v6015, %v6127
        %v6129 = vpop.f32.mrb[0].mxu0
        %v6130 = vadd.f32 %v6017, %v6129
        %v6131 = vpop.f32.mrb[0].mxu0
        %v6132 = vadd.f32 %v6019, %v6131
        %6133 = vmatprep.mubr.bf16.mxu0 %v5951
        %6134 = vmatmul.mubr.bf16.gmra.mrb[0].mxu0 %v5652
        %v6135 = vpop.f32.mrb[0].mxu0
        %v6136 = vadd.f32 %v6023, %v6135
        %v6137 = vpop.f32.mrb[0].mxu0
        %v6138 = vadd.f32 %v6025, %v6137
        %v6139 = vpop.f32.mrb[0].mxu0
        %v6140 = vadd.f32 %v6027, %v6139
        %v6141 = vpop.f32.mrb[0].mxu0
        %v6142 = vadd.f32 %v6029, %v6141
        %6143 = vmatprep.mubr.bf16.mxu0 %v5954
        %6144 = vmatmul.mubr.bf16.gmra.mrb[0].mxu0 %v5656
        %v6145 = vpop.f32.mrb[0].mxu0
        %v6146 = vadd.f32 %v6033, %v6145
        %v6147 = vpop.f32.mrb[0].mxu0
        %v6148 = vadd.f32 %v6035, %v6147
        %v6149 = vpop.f32.mrb[0].mxu0
        %v6150 = vadd.f32 %v6037, %v6149
        %v6151 = vpop.f32.mrb[0].mxu0
        %v6152 = vadd.f32 %v6039, %v6151
        %6153 = vmatprep.mubr.bf16.mxu0 %v5957
        %6154 = vmatmul.mubr.bf16.gmra.mrb[0].mxu0 %v5660
        %v6155 = vpop.f32.mrb[0].mxu0
        %v6156 = vadd.f32 %v6043, %v6155
        %v6157 = vpop.f32.mrb[0].mxu0
        %v6158 = vadd.f32 %v6045, %v6157
        %v6159 = vpop.f32.mrb[0].mxu0
        %v6160 = vadd.f32 %v6047, %v6159
        %v6161 = vpop.f32.mrb[0].mxu0
        %v6162 = vadd.f32 %v6049, %v6161
        %6163 = vmatprep.mubr.bf16.mxu0 %v5960
        %6164 = vmatmul.mubr.bf16.gmra.mrb[0].mxu0 %v5664
        %v6165 = vpop.f32.mrb[0].mxu0
        %v6166 = vadd.f32 %v6053, %v6165
        %v6167 = vpop.f32.mrb[0].mxu0
        %v6168 = vadd.f32 %v6055, %v6167
        %v6169 = vpop.f32.mrb[0].mxu0
        %v6170 = vadd.f32 %v6057, %v6169
        %v6171 = vpop.f32.mrb[0].mxu0
        %v6172 = vadd.f32 %v6059, %v6171
        %6173 = vmatprep.mubr.bf16.mxu0 %v5963
        %6174 = vmatmul.mubr.bf16.gmra.mrb[0].mxu0 %v5668
        %v6175 = vpop.f32.mrb[0].mxu0
        %v6176 = vadd.f32 %v6063, %v6175
        %v6177 = vpop.f32.mrb[0].mxu0
        %v6178 = vadd.f32 %v6065, %v6177
        %v6179 = vpop.f32.mrb[0].mxu0
        %v6180 = vadd.f32 %v6067, %v6179
        %v6181 = vpop.f32.mrb[0].mxu0
        %v6182 = vadd.f32 %v6069, %v6181
        %6183 = vmatprep.mubr.bf16.mxu0 %v5966
        %6184 = vmatmul.mubr.bf16.gmra.mrb[0].mxu0 %v5672
        %v6185 = vpop.f32.mrb[0].mxu0
        %v6186 = vadd.f32 %v6073, %v6185
        %v6187 = vpop.f32.mrb[0].mxu0
        %v6188 = vadd.f32 %v6075, %v6187
        %v6189 = vpop.f32.mrb[0].mxu0
        %v6190 = vadd.f32 %v6077, %v6189
        %v6191 = vpop.f32.mrb[0].mxu0
        %v6192 = vadd.f32 %v6079, %v6191
        %6193 = vdwg.mxu0
        %v6194 = vadd.f32 %v4838, %v6116
        %v6195 = vadd.f32 %v4840, %v6118
        %v6196 = vadd.f32 %v4842, %v6120
        %v6197 = vadd.f32 %v4844, %v6122
        %v6198 = vadd.f32 %v4848, %v6126
        %v6199 = vadd.f32 %v4850, %v6128
        %v6200 = vadd.f32 %v4852, %v6130
        %v6201 = vadd.f32 %v4854, %v6132
        %v6202 = vadd.f32 %v4858, %v6136
        %v6203 = vadd.f32 %v4860, %v6138
        %v6204 = vadd.f32 %v4862, %v6140
        %v6205 = vadd.f32 %v4864, %v6142
        %v6206 = vadd.f32 %v4868, %v6146
        %v6207 = vadd.f32 %v4870, %v6148
        %v6208 = vadd.f32 %v4872, %v6150
        %v6209 = vadd.f32 %v4874, %v6152
        %v6210 = vadd.f32 %v4878, %v6156
        %v6211 = vadd.f32 %v4880, %v6158
        %v6212 = vadd.f32 %v4882, %v6160
        %v6213 = vadd.f32 %v4884, %v6162
        %v6214 = vadd.f32 %v4888, %v6166
        %v6215 = vadd.f32 %v4890, %v6168
        %v6216 = vadd.f32 %v4892, %v6170
        %v6217 = vadd.f32 %v4894, %v6172
        %v6218 = vadd.f32 %v4898, %v6176
        %v6219 = vadd.f32 %v4900, %v6178
        %v6220 = vadd.f32 %v4902, %v6180
        %v6221 = vadd.f32 %v4904, %v6182
        %v6222 = vadd.f32 %v4908, %v6186
        %v6223 = vadd.f32 %v4910, %v6188
        %v6224 = vadd.f32 %v4912, %v6190
        %v6225 = vadd.f32 %v4914, %v6192
        %v6227 = vsel %vm4415, %v5915, 0
        %v6230 = vsel %vm4415, %v5919, 0
        %v6233 = vsel %vm4415, %v5923, 0
        %v6236 = vsel %vm4415, %v5927, 0
        %v6239 = vsel %vm4415, %v5931, 0
        %v6242 = vsel %vm4415, %v5935, 0
        %v6245 = vsel %vm4415, %v5939, 0
        %v6248 = vsel %vm4415, %v5943, 0
        %6250 = vmatprep.subr.bf16.mxu0 %v4316
        %6251 = vmatpush1.bf16.msra.mxu0 %v4315
        %6252 = vmatprep.subr.bf16.mxu0 %v4318
        %6253 = vmatpush1.bf16.msra.mxu0 %v4317
        %6254 = vmatprep.subr.bf16.mxu0 %v4320
        %6255 = vmatpush1.bf16.msra.mxu0 %v4319
        %6256 = vmatprep.subr.bf16.mxu0 %v4322
        %6257 = vmatpush1.bf16.msra.mxu0 %v4321
        %6258 = vmatprep.subr.bf16.mxu0 %v4324
        %6259 = vmatpush1.bf16.msra.mxu0 %v4323
        %6260 = vmatprep.subr.bf16.mxu0 %v4326
        %6261 = vmatpush1.bf16.msra.mxu0 %v4325
        %6262 = vmatprep.subr.bf16.mxu0 %v4328
        %6263 = vmatpush1.bf16.msra.mxu0 %v4327
        %6264 = vmatprep.subr.bf16.mxu0 %v4330
        %6265 = vmatpush1.bf16.msra.mxu0 %v4329
        %6266 = vmatprep.subr.bf16.mxu0 %v4332
        %6267 = vmatpush1.bf16.msra.mxu0 %v4331
        %6268 = vmatprep.subr.bf16.mxu0 %v4334
        %6269 = vmatpush1.bf16.msra.mxu0 %v4333
        %6270 = vmatprep.subr.bf16.mxu0 %v4336
        %6271 = vmatpush1.bf16.msra.mxu0 %v4335
        %6272 = vmatprep.subr.bf16.mxu0 %v4338
        %6273 = vmatpush1.bf16.msra.mxu0 %v4337
        %6274 = vmatprep.subr.bf16.mxu0 %v4340
        %6275 = vmatpush1.bf16.msra.mxu0 %v4339
        %6276 = vmatprep.subr.bf16.mxu0 %v4342
        %6277 = vmatpush1.bf16.msra.mxu0 %v4341
        %6278 = vmatprep.subr.bf16.mxu0 %v4344
        %6279 = vmatpush1.bf16.msra.mxu0 %v4343
        %6280 = vmatprep.subr.bf16.mxu0 %v4346
        %6281 = vmatpush1.bf16.msra.mxu0 %v4345
        %6282 = vmatprep.mubr.bf16.mxu0 %v5913
        %6283 = vmatmul.mubr.bf16.gmra.mrb[0].mxu0 %v5912
        %v6284 = vpop.f32.mrb[0].mxu0
        %v6285 = vadd.f32 0.0, %v6284
        %v6286 = vpop.f32.mrb[0].mxu0
        %v6287 = vadd.f32 0.0, %v6286
        %v6288 = vpop.f32.mrb[0].mxu0
        %v6289 = vadd.f32 0.0, %v6288
        %v6290 = vpop.f32.mrb[0].mxu0
        %v6291 = vadd.f32 0.0, %v6290
        %6292 = vmatprep.mubr.bf16.mxu0 %v5917
        %6293 = vmatmul.mubr.bf16.gmra.mrb[0].mxu0 %v5916
        %v6294 = vpop.f32.mrb[0].mxu0
        %v6295 = vadd.f32 0.0, %v6294
        %v6296 = vpop.f32.mrb[0].mxu0
        %v6297 = vadd.f32 0.0, %v6296
        %v6298 = vpop.f32.mrb[0].mxu0
        %v6299 = vadd.f32 0.0, %v6298
        %v6300 = vpop.f32.mrb[0].mxu0
        %v6301 = vadd.f32 0.0, %v6300
        %6302 = vmatprep.mubr.bf16.mxu0 %v5921
        %6303 = vmatmul.mubr.bf16.gmra.mrb[0].mxu0 %v5920
        %v6304 = vpop.f32.mrb[0].mxu0
        %v6305 = vadd.f32 0.0, %v6304
        %v6306 = vpop.f32.mrb[0].mxu0
        %v6307 = vadd.f32 0.0, %v6306
        %v6308 = vpop.f32.mrb[0].mxu0
        %v6309 = vadd.f32 0.0, %v6308
        %v6310 = vpop.f32.mrb[0].mxu0
        %v6311 = vadd.f32 0.0, %v6310
        %6312 = vmatprep.mubr.bf16.mxu0 %v5925
        %6313 = vmatmul.mubr.bf16.gmra.mrb[0].mxu0 %v5924
        %v6314 = vpop.f32.mrb[0].mxu0
        %v6315 = vadd.f32 0.0, %v6314
        %v6316 = vpop.f32.mrb[0].mxu0
        %v6317 = vadd.f32 0.0, %v6316
        %v6318 = vpop.f32.mrb[0].mxu0
        %v6319 = vadd.f32 0.0, %v6318
        %v6320 = vpop.f32.mrb[0].mxu0
        %v6321 = vadd.f32 0.0, %v6320
        %6322 = vmatprep.mubr.bf16.mxu0 %v5929
        %6323 = vmatmul.mubr.bf16.gmra.mrb[0].mxu0 %v5928
        %v6324 = vpop.f32.mrb[0].mxu0
        %v6325 = vadd.f32 0.0, %v6324
        %v6326 = vpop.f32.mrb[0].mxu0
        %v6327 = vadd.f32 0.0, %v6326
        %v6328 = vpop.f32.mrb[0].mxu0
        %v6329 = vadd.f32 0.0, %v6328
        %v6330 = vpop.f32.mrb[0].mxu0
        %v6331 = vadd.f32 0.0, %v6330
        %6332 = vmatprep.mubr.bf16.mxu0 %v5933
        %6333 = vmatmul.mubr.bf16.gmra.mrb[0].mxu0 %v5932
        %v6334 = vpop.f32.mrb[0].mxu0
        %v6335 = vadd.f32 0.0, %v6334
        %v6336 = vpop.f32.mrb[0].mxu0
        %v6337 = vadd.f32 0.0, %v6336
        %v6338 = vpop.f32.mrb[0].mxu0
        %v6339 = vadd.f32 0.0, %v6338
        %v6340 = vpop.f32.mrb[0].mxu0
        %v6341 = vadd.f32 0.0, %v6340
        %6342 = vmatprep.mubr.bf16.mxu0 %v5937
        %6343 = vmatmul.mubr.bf16.gmra.mrb[0].mxu0 %v5936
        %v6344 = vpop.f32.mrb[0].mxu0
        %v6345 = vadd.f32 0.0, %v6344
        %v6346 = vpop.f32.mrb[0].mxu0
        %v6347 = vadd.f32 0.0, %v6346
        %v6348 = vpop.f32.mrb[0].mxu0
        %v6349 = vadd.f32 0.0, %v6348
        %v6350 = vpop.f32.mrb[0].mxu0
        %v6351 = vadd.f32 0.0, %v6350
        %6352 = vmatprep.mubr.bf16.mxu0 %v5941
        %6353 = vmatmul.mubr.bf16.gmra.mrb[0].mxu0 %v5940
        %v6354 = vpop.f32.mrb[0].mxu0
        %v6355 = vadd.f32 0.0, %v6354
        %v6356 = vpop.f32.mrb[0].mxu0
        %v6357 = vadd.f32 0.0, %v6356
        %v6358 = vpop.f32.mrb[0].mxu0
        %v6359 = vadd.f32 0.0, %v6358
        %v6360 = vpop.f32.mrb[0].mxu0
        %v6361 = vadd.f32 0.0, %v6360
        %6362 = vdwg.mxu0
        %6363 = vmatprep.subr.bf16.mxu0 %v4348
        %6364 = vmatpush1.bf16.msra.mxu0 %v4347
        %6365 = vmatprep.subr.bf16.mxu0 %v4350
        %6366 = vmatpush1.bf16.msra.mxu0 %v4349
        %6367 = vmatprep.subr.bf16.mxu0 %v4352
        %6368 = vmatpush1.bf16.msra.mxu0 %v4351
        %6369 = vmatprep.subr.bf16.mxu0 %v4354
        %6370 = vmatpush1.bf16.msra.mxu0 %v4353
        %6371 = vmatprep.subr.bf16.mxu0 %v4356
        %6372 = vmatpush1.bf16.msra.mxu0 %v4355
        %6373 = vmatprep.subr.bf16.mxu0 %v4358
        %6374 = vmatpush1.bf16.msra.mxu0 %v4357
        %6375 = vmatprep.subr.bf16.mxu0 %v4360
        %6376 = vmatpush1.bf16.msra.mxu0 %v4359
        %6377 = vmatprep.subr.bf16.mxu0 %v4362
        %6378 = vmatpush1.bf16.msra.mxu0 %v4361
        %6379 = vmatprep.subr.bf16.mxu0 %v4364
        %6380 = vmatpush1.bf16.msra.mxu0 %v4363
        %6381 = vmatprep.subr.bf16.mxu0 0
        %6382 = vmatpush1.bf16.msra.mxu0 0
        %6383 = vmatprep.subr.bf16.mxu0 0
        %6384 = vmatpush1.bf16.msra.mxu0 0
        %6385 = vmatprep.subr.bf16.mxu0 0
        %6386 = vmatpush1.bf16.msra.mxu0 0
        %6387 = vmatprep.subr.bf16.mxu0 0
        %6388 = vmatpush1.bf16.msra.mxu0 0
        %6389 = vmatprep.subr.bf16.mxu0 0
        %6390 = vmatpush1.bf16.msra.mxu0 0
        %6391 = vmatprep.subr.bf16.mxu0 0
        %6392 = vmatpush1.bf16.msra.mxu0 0
        %6393 = vmatprep.subr.bf16.mxu0 0
        %6394 = vmatpush1.bf16.msra.mxu0 0
        %6395 = vmatprep.mubr.bf16.mxu0 %v6227
        %6396 = vmatmul.mubr.bf16.gmra.mrb[0].mxu0 %v5914
        %v6397 = vpop.f32.mrb[0].mxu0
        %v6398 = vadd.f32 %v6285, %v6397
        %v6399 = vpop.f32.mrb[0].mxu0
        %v6400 = vadd.f32 %v6287, %v6399
        %v6401 = vpop.f32.mrb[0].mxu0
        %v6402 = vadd.f32 %v6289, %v6401
        %v6403 = vpop.f32.mrb[0].mxu0
        %v6404 = vadd.f32 %v6291, %v6403
        %6405 = vmatprep.mubr.bf16.mxu0 %v6230
        %6406 = vmatmul.mubr.bf16.gmra.mrb[0].mxu0 %v5918
        %v6407 = vpop.f32.mrb[0].mxu0
        %v6408 = vadd.f32 %v6295, %v6407
        %v6409 = vpop.f32.mrb[0].mxu0
        %v6410 = vadd.f32 %v6297, %v6409
        %v6411 = vpop.f32.mrb[0].mxu0
        %v6412 = vadd.f32 %v6299, %v6411
        %v6413 = vpop.f32.mrb[0].mxu0
        %v6414 = vadd.f32 %v6301, %v6413
        %6415 = vmatprep.mubr.bf16.mxu0 %v6233
        %6416 = vmatmul.mubr.bf16.gmra.mrb[0].mxu0 %v5922
        %v6417 = vpop.f32.mrb[0].mxu0
        %v6418 = vadd.f32 %v6305, %v6417
        %v6419 = vpop.f32.mrb[0].mxu0
        %v6420 = vadd.f32 %v6307, %v6419
        %v6421 = vpop.f32.mrb[0].mxu0
        %v6422 = vadd.f32 %v6309, %v6421
        %v6423 = vpop.f32.mrb[0].mxu0
        %v6424 = vadd.f32 %v6311, %v6423
        %6425 = vmatprep.mubr.bf16.mxu0 %v6236
        %6426 = vmatmul.mubr.bf16.gmra.mrb[0].mxu0 %v5926
        %v6427 = vpop.f32.mrb[0].mxu0
        %v6428 = vadd.f32 %v6315, %v6427
        %v6429 = vpop.f32.mrb[0].mxu0
        %v6430 = vadd.f32 %v6317, %v6429
        %v6431 = vpop.f32.mrb[0].mxu0
        %v6432 = vadd.f32 %v6319, %v6431
        %v6433 = vpop.f32.mrb[0].mxu0
        %v6434 = vadd.f32 %v6321, %v6433
        %6435 = vmatprep.mubr.bf16.mxu0 %v6239
        %6436 = vmatmul.mubr.bf16.gmra.mrb[0].mxu0 %v5930
        %v6437 = vpop.f32.mrb[0].mxu0
        %v6438 = vadd.f32 %v6325, %v6437
        %v6439 = vpop.f32.mrb[0].mxu0
        %v6440 = vadd.f32 %v6327, %v6439
        %v6441 = vpop.f32.mrb[0].mxu0
        %v6442 = vadd.f32 %v6329, %v6441
        %v6443 = vpop.f32.mrb[0].mxu0
        %v6444 = vadd.f32 %v6331, %v6443
        %6445 = vmatprep.mubr.bf16.mxu0 %v6242
        %6446 = vmatmul.mubr.bf16.gmra.mrb[0].mxu0 %v5934
        %v6447 = vpop.f32.mrb[0].mxu0
        %v6448 = vadd.f32 %v6335, %v6447
        %v6449 = vpop.f32.mrb[0].mxu0
        %v6450 = vadd.f32 %v6337, %v6449
        %v6451 = vpop.f32.mrb[0].mxu0
        %v6452 = vadd.f32 %v6339, %v6451
        %v6453 = vpop.f32.mrb[0].mxu0
        %v6454 = vadd.f32 %v6341, %v6453
        %6455 = vmatprep.mubr.bf16.mxu0 %v6245
        %6456 = vmatmul.mubr.bf16.gmra.mrb[0].mxu0 %v5938
        %v6457 = vpop.f32.mrb[0].mxu0
        %v6458 = vadd.f32 %v6345, %v6457
        %v6459 = vpop.f32.mrb[0].mxu0
        %v6460 = vadd.f32 %v6347, %v6459
        %v6461 = vpop.f32.mrb[0].mxu0
        %v6462 = vadd.f32 %v6349, %v6461
        %v6463 = vpop.f32.mrb[0].mxu0
        %v6464 = vadd.f32 %v6351, %v6463
        %6465 = vmatprep.mubr.bf16.mxu0 %v6248
        %6466 = vmatmul.mubr.bf16.gmra.mrb[0].mxu0 %v5942
        %v6467 = vpop.f32.mrb[0].mxu0
        %v6468 = vadd.f32 %v6355, %v6467
        %v6469 = vpop.f32.mrb[0].mxu0
        %v6470 = vadd.f32 %v6357, %v6469
        %v6471 = vpop.f32.mrb[0].mxu0
        %v6472 = vadd.f32 %v6359, %v6471
        %v6473 = vpop.f32.mrb[0].mxu0
        %v6474 = vadd.f32 %v6361, %v6473
        %6475 = vdwg.mxu0
        %v6476 = vadd.f32 %v5338, %v6398
        %v6477 = vadd.f32 %v5340, %v6400
        %v6478 = vadd.f32 %v5342, %v6402
        %v6479 = vadd.f32 %v5344, %v6404
        %v6480 = vadd.f32 %v5348, %v6408
        %v6481 = vadd.f32 %v5350, %v6410
        %v6482 = vadd.f32 %v5352, %v6412
        %v6483 = vadd.f32 %v5354, %v6414
        %v6484 = vadd.f32 %v5358, %v6418
        %v6485 = vadd.f32 %v5360, %v6420
        %v6486 = vadd.f32 %v5362, %v6422
        %v6487 = vadd.f32 %v5364, %v6424
        %v6488 = vadd.f32 %v5368, %v6428
        %v6489 = vadd.f32 %v5370, %v6430
        %v6490 = vadd.f32 %v5372, %v6432
        %v6491 = vadd.f32 %v5374, %v6434
        %v6492 = vadd.f32 %v5378, %v6438
        %v6493 = vadd.f32 %v5380, %v6440
        %v6494 = vadd.f32 %v5382, %v6442
        %v6495 = vadd.f32 %v5384, %v6444
        %v6496 = vadd.f32 %v5388, %v6448
        %v6497 = vadd.f32 %v5390, %v6450
        %v6498 = vadd.f32 %v5392, %v6452
        %v6499 = vadd.f32 %v5394, %v6454
        %v6500 = vadd.f32 %v5398, %v6458
        %v6501 = vadd.f32 %v5400, %v6460
        %v6502 = vadd.f32 %v5402, %v6462
        %v6503 = vadd.f32 %v5404, %v6464
        %v6504 = vadd.f32 %v5408, %v6468
        %v6505 = vadd.f32 %v5410, %v6470
        %v6506 = vadd.f32 %v5412, %v6472
        %v6507 = vadd.f32 %v5414, %v6474
        %6508 = vst [vmem:[%s190] sm:$0xff] %v6194
        %6509 = vst [vmem:[%s190 + $0x8] sm:$0xff] %v6195
        %6510 = vst [vmem:[%s190 + $0x10] sm:$0xff] %v6196
        %6511 = vst [vmem:[%s190 + $0x18] sm:$0xff] %v6197
        %6512 = vst [vmem:[%s190 + $0x20] sm:$0xff] %v6198
        %6513 = vst [vmem:[%s190 + $0x28] sm:$0xff] %v6199
        %6514 = vst [vmem:[%s190 + $0x30] sm:$0xff] %v6200
        %6515 = vst [vmem:[%s190 + $0x38] sm:$0xff] %v6201
        %6516 = vst [vmem:[%s190 + $0x40] sm:$0xff] %v6202
        %6517 = vst [vmem:[%s190 + $0x48] sm:$0xff] %v6203
        %6518 = vst [vmem:[%s190 + $0x50] sm:$0xff] %v6204
        %6519 = vst [vmem:[%s190 + $0x58] sm:$0xff] %v6205
        %6520 = vst [vmem:[%s190 + $0x60] sm:$0xff] %v6206
        %6521 = vst [vmem:[%s190 + $0x68] sm:$0xff] %v6207
        %6522 = vst [vmem:[%s190 + $0x70] sm:$0xff] %v6208
        %6523 = vst [vmem:[%s190 + $0x78] sm:$0xff] %v6209
        %6524 = vst [vmem:[%s190 + $0x80] sm:$0xff] %v6210
        %6525 = vst [vmem:[%s190 + $0x88] sm:$0xff] %v6211
        %6526 = vst [vmem:[%s190 + $0x90] sm:$0xff] %v6212
        %6527 = vst [vmem:[%s190 + $0x98] sm:$0xff] %v6213
        %6528 = vst [vmem:[%s190 + $0xa0] sm:$0xff] %v6214
        %6529 = vst [vmem:[%s190 + $0xa8] sm:$0xff] %v6215
        %6530 = vst [vmem:[%s190 + $0xb0] sm:$0xff] %v6216
        %6531 = vst [vmem:[%s190 + $0xb8] sm:$0xff] %v6217
        %6532 = vst [vmem:[%s190 + $0xc0] sm:$0xff] %v6218
        %6533 = vst [vmem:[%s190 + $0xc8] sm:$0xff] %v6219
        %6534 = vst [vmem:[%s190 + $0xd0] sm:$0xff] %v6220
        %6535 = vst [vmem:[%s190 + $0xd8] sm:$0xff] %v6221
        %6536 = vst [vmem:[%s190 + $0xe0] sm:$0xff] %v6222
        %6537 = vst [vmem:[%s190 + $0xe8] sm:$0xff] %v6223
        %6538 = vst [vmem:[%s190 + $0xf0] sm:$0xff] %v6224
        %6539 = vst [vmem:[%s190 + $0xf8] sm:$0xff] %v6225
        %6540 = vst [vmem:[%s190 + $0x100] sm:$0xff] %v6476
        %6541 = vst [vmem:[%s190 + $0x108] sm:$0xff] %v6477
        %6542 = vst [vmem:[%s190 + $0x110] sm:$0xff] %v6478
        %6543 = vst [vmem:[%s190 + $0x118] sm:$0xff] %v6479
        %6544 = vst [vmem:[%s190 + $0x120] sm:$0xff] %v6480
        %6545 = vst [vmem:[%s190 + $0x128] sm:$0xff] %v6481
        %6546 = vst [vmem:[%s190 + $0x130] sm:$0xff] %v6482
        %6547 = vst [vmem:[%s190 + $0x138] sm:$0xff] %v6483
        %6548 = vst [vmem:[%s190 + $0x140] sm:$0xff] %v6484
        %6549 = vst [vmem:[%s190 + $0x148] sm:$0xff] %v6485
        %6550 = vst [vmem:[%s190 + $0x150] sm:$0xff] %v6486
        %6551 = vst [vmem:[%s190 + $0x158] sm:$0xff] %v6487
        %6552 = vst [vmem:[%s190 + $0x160] sm:$0xff] %v6488
        %6553 = vst [vmem:[%s190 + $0x168] sm:$0xff] %v6489
        %6554 = vst [vmem:[%s190 + $0x170] sm:$0xff] %v6490
        %6555 = vst [vmem:[%s190 + $0x178] sm:$0xff] %v6491
        %6556 = vst [vmem:[%s190 + $0x180] sm:$0xff] %v6492
        %6557 = vst [vmem:[%s190 + $0x188] sm:$0xff] %v6493
        %6558 = vst [vmem:[%s190 + $0x190] sm:$0xff] %v6494
        %6559 = vst [vmem:[%s190 + $0x198] sm:$0xff] %v6495
        %6560 = vst [vmem:[%s190 + $0x1a0] sm:$0xff] %v6496
        %6561 = vst [vmem:[%s190 + $0x1a8] sm:$0xff] %v6497
        %6562 = vst [vmem:[%s190 + $0x1b0] sm:$0xff] %v6498
        %6563 = vst [vmem:[%s190 + $0x1b8] sm:$0xff] %v6499
        %6564 = vst [vmem:[%s190 + $0x1c0] sm:$0xff] %v6500
        %6565 = vst [vmem:[%s190 + $0x1c8] sm:$0xff] %v6501
        %6566 = vst [vmem:[%s190 + $0x1d0] sm:$0xff] %v6502
        %6567 = vst [vmem:[%s190 + $0x1d8] sm:$0xff] %v6503
        %6568 = vst [vmem:[%s190 + $0x1e0] sm:$0xff] %v6504
        %6569 = vst [vmem:[%s190 + $0x1e8] sm:$0xff] %v6505
        %6570 = vst [vmem:[%s190 + $0x1f0] sm:$0xff] %v6506
        %6571 = vst [vmem:[%s190 + $0x1f8] sm:$0xff] %v6507
        %s6572 = sand.u32 %s115, 1
        %s6573 = scalar_lea.sflag [#allocation3], %s6572
        %s6574 = sand.u32 %s115, 1
        %s6575 = smul.addr %s6574, 512
        %s6576 = scalar_lea.vmem [#allocation2], %s6575
        // Predicated region
        $region37: #{upsample_nearest.1} parent=35 // pred_check
          %p6577 = pneg %p125
        $region38: #{upsample_nearest.1} parent=35 // pred_check_branch
          %6579 = sbr.rel (%p6577) target = $region40
        $region39: #{upsample_nearest.1} parent=35 // pred_region
          %s6581 = ssub.s32 8192, 8192
          %6582 = vsyncadd %s6573, %s6581
          %s6583 = smul.addr %s18, 64
          %s6584 = smul.addr %s6583, 128
          %s6585 = scalar_lea.hbm %s4, %s6584
          %s6586 = sshll.u32 %s6576, 4
          %s6587 = int_to_ptr.vmem [resolvable:$true] %s6586
          %6592 = dma.vmem_to_hbm [thread:$0]  %s6587, 8192, %s6585, %s6573, 256, 256, 16
        $region40: #{upsample_nearest.1} parent=35 // pred_fallthru
          _
      $region36: #{upsample_nearest.1} parent=5 // pred_fallthru
        _
      %p6593 = scmp.le.s32.totalorder 2, %s13
      // Predicated region
      $region41: #{upsample_nearest.1} parent=5 // pred_check
        %p6594 = pneg %p6593
      $region42: #{upsample_nearest.1} parent=5 // pred_check_branch
        %6596 = sbr.rel (%p6594) target = $region44
      $region43: #{upsample_nearest.1} parent=5 // pred_region
        %s6597 = ssub.s32 %s13, 2
        // Predicated region
        $region45: #{upsample_nearest.1} parent=43 // pred_check
          %p6598 = pneg %p131
        $region46: #{upsample_nearest.1} parent=43 // pred_check_branch
          %6600 = sbr.rel (%p6598) target = $region48
        $region47: #{upsample_nearest.1} parent=43 // pred_region
          %s6601 = sand.u32 %s116, 1
          %s6602 = scalar_lea.sflag [#allocation3], %s6601
          %s6603 = sand.u32 %s116, 1
          %s6604 = smul.addr %s6603, 512
          %s6605 = scalar_lea.vmem [#allocation2], %s6604
          %6606 = dma.done %s6602, 8192
        $region48: #{upsample_nearest.1} parent=43 // pred_fallthru
          _
      $region44: #{upsample_nearest.1} parent=5 // pred_fallthru
        _
    $region6: #{upsample_nearest.1} parent=1 // loop_footer
      %s17 = sadd.s32 1, %s13
    $region7: #{upsample_nearest.1} parent=1 // loop_footer_branch
      %12 = sbr.rel target = $region3
    $region8: #{upsample_nearest.1} parent=1 // loop_exit
      _
    %6607 = vsyncpa [#allocation3], 1
    %s6608 = scalar_lea.sflag [#allocation3], 1
    %6609 = vsyncpa %s6608, 1

</llo_original>
